<compile_context>
chip_gen: v7x
topology: tpu7x:2x2x1
jax: 0.10.0
libtpu: 0.0.40
codegen_flags: <defaults>
</compile_context>

<pallas_src>
import jax
import jax.numpy as jnp
from jax import lax
from jax.experimental import pallas as pl
from jax.experimental.pallas import tpu as pltpu


def _round_up(x, m):
    return ((x + m - 1) // m) * m


def _cdiv(a, b):
    return -(-a // b)


def _silhouette_kernel(power_ref, nvalid_ref, bins_ref, births_ref, deaths_ref,
                       out_ref, wsum_ref):
    # grid = (channel c, batch-tile b, bin-tile j, N-chunk k); k is the reduction axis.
    c = pl.program_id(0)
    k = pl.program_id(3)
    tn = births_ref.shape[2]

    @pl.when(k == 0)
    def _():
        out_ref[...] = jnp.zeros_like(out_ref)
        wsum_ref[...] = jnp.zeros_like(wsum_ref)

    n_valid = nvalid_ref[c]                       # true #points of this channel (SMEM)

    # Skip N-chunks entirely past this channel's diagram (channels share n_max-sized
    # padding but usually have very unequal point counts).
    @pl.when(k * tn < n_valid)
    def _():
        power = power_ref[0]                      # scalar from SMEM
        b2 = births_ref[0]                        # (tb, tn)
        d2 = deaths_ref[0]                        # (tb, tn)
        pers = d2 - b2                            # persistence
        w = jnp.power(pers, power)                # weights = (d - b)^power
        # Mask padded diagram points exactly (correct for any learnable power).
        # O(tb*tn) work — negligible next to the O(tb*tn*tnb) fiber compute below.
        col = lax.broadcasted_iota(jnp.int32, pers.shape, 1) + k * tn
        w = jnp.where(col < n_valid, w, 0.0)

        wsum_ref[...] += jnp.sum(w, axis=1, keepdims=True)        # (tb, 1)

        mid = (d2 + b2) * 0.5
        h = pers * 0.5
        # Point axis LEADING on the 3D fiber intermediate: the axis=0 reduce is plain
        # vreg adds and the (tb, tnb) result is already in the output (sublane, lane)
        # layout.  The transposes only touch the small (tb, tn) arrays.
        w_t = w.T                                 # (tn, tb)
        mid_t = mid.T
        h_t = h.T
        bins = bins_ref[...]                      # (1, tnb), lane-dense
        fib = jnp.maximum(
            h_t[:, :, None] - jnp.abs(bins[None, :, :] - mid_t[:, :, None]), 0.0)
        out_ref[0] += jnp.sum(w_t[:, :, None] * fib, axis=0)      # (tb, tnb)

    @pl.when(k == pl.num_programs(3) - 1)
    def _():
        ws = wsum_ref[...]
        ws = jnp.where(ws == 0.0, jnp.inf, ws)    # empty diagrams -> silhouette 0
        out_ref[0] = out_ref[0] * (1.0 / ws)      # exact divide, once per output tile


def _vmem_budget():
    """(vmem_limit_bytes, per-chunk fiber-slab budget) scaled from the chip's VMEM."""
    try:
        cap = int(pltpu.get_tpu_info().vmem_capacity_bytes)
    except Exception:
        cap = 64 * 1024 * 1024                    # conservative (v7x-sized) default
    vmem_limit = min((cap * 3) // 4, 96 * 1024 * 1024)   # 96 MiB on v5e/v6e, 48 on v7x
    fiber_budget = max(vmem_limit // 16, 512 * 1024)     # ~6 MiB / ~3 MiB fiber slabs
    return vmem_limit, fiber_budget


def silhouette_pallas(dgms, power, bins):
    """dgms: list of (B, N_d, 2) arrays (one per homology dim); power: scalar/(1,);
    bins: (n_bins,).  Returns (B, D, n_bins) float32."""
    D = len(dgms)
    B = dgms[0].shape[0]
    n_valid = [int(dg.shape[1]) for dg in dgms]
    N = max(max(n_valid), 1)
    nb = bins.shape[-1]

    vmem_limit, fiber_budget = _vmem_budget()

    # ---- batch tiling: balanced tiles, multiple of 8, small enough for the budget ----
    b8 = _round_up(B, 8)
    tb_max = min(128, max(8, (fiber_budget // (128 * 128 * 4)) // 8 * 8))
    n_btiles = _cdiv(b8, tb_max)
    tb = _round_up(_cdiv(b8, n_btiles), 8)
    # v7x megacore: make sure the "parallel" grid has >= 2 iterations when possible.
    if D * n_btiles < 2 and tb >= 16:
        n_btiles = 2
        tb = _round_up(_cdiv(b8, 2), 8)
    b_pad = n_btiles * tb

    # ---- bin tiling: lane-dense 128-multiples; split only if one slab can't fit ----
    nbp_min = _round_up(nb, 128)
    tnb_cap = max(128, (fiber_budget // (tb * 128 * 4)) // 128 * 128)
    n_jtiles = _cdiv(nbp_min, min(nbp_min, tnb_cap))
    tnb = _round_up(_cdiv(nbp_min, n_jtiles), 128)
    nbp = n_jtiles * tnb

    # ---- point-axis chunking: biggest 128-multiple chunk whose fiber slab fits ----
    tn_cap = max(128, (fiber_budget // (tb * tnb * 4)) // 128 * 128)
    n128 = _round_up(N, 128)
    k_steps = _cdiv(n128, min(n128, tn_cap))
    tn = _round_up(_cdiv(n128, k_steps), 128)
    n_pad = k_steps * tn

    # ---- pad each diagram once, directly to the final kernel layout ----
    births = jnp.stack([
        jnp.pad(dg[:, :, 0].astype(jnp.float32),
                ((0, b_pad - B), (0, n_pad - dg.shape[1]))) for dg in dgms])
    deaths = jnp.stack([
        jnp.pad(dg[:, :, 1].astype(jnp.float32),
                ((0, b_pad - B), (0, n_pad - dg.shape[1]))) for dg in dgms])
    bins_p = jnp.pad(jnp.asarray(bins, jnp.float32).reshape(1, nb),
                     ((0, 0), (0, nbp - nb)))
    power_a = jnp.asarray(power, jnp.float32).reshape(1)
    nvalid_a = jnp.asarray(n_valid, jnp.int32).reshape(D)

    out = pl.pallas_call(
        _silhouette_kernel,
        out_shape=jax.ShapeDtypeStruct((D, b_pad, nbp), jnp.float32),
        grid=(D, n_btiles, n_jtiles, k_steps),
        in_specs=[
            pl.BlockSpec(memory_space=pltpu.MemorySpace.SMEM),        # power (scalar)
            pl.BlockSpec(memory_space=pltpu.MemorySpace.SMEM),        # per-channel n_valid
            pl.BlockSpec((1, tnb), lambda c, b, j, k: (0, j)),        # bins slab
            pl.BlockSpec((1, tb, tn), lambda c, b, j, k: (c, b, k)),  # births chunk
            pl.BlockSpec((1, tb, tn), lambda c, b, j, k: (c, b, k)),  # deaths chunk
        ],
        out_specs=pl.BlockSpec((1, tb, tnb), lambda c, b, j, k: (c, b, j)),
        scratch_shapes=[
            pltpu.VMEM((tb, 1), jnp.float32),     # per-row weight-sum accumulator
        ],
        compiler_params=pltpu.CompilerParams(
            dimension_semantics=("parallel", "parallel", "parallel", "arbitrary"),
            vmem_limit_bytes=vmem_limit,
        ),
    )(power_a, nvalid_a, bins_p, births, deaths)

    # (D, B_pad, NB_pad) -> (B, D, n_bins): tiny layout op; all kernel-side stores are
    # already (8,128)-dense.
    return jnp.transpose(out, (1, 0, 2))[:B, :, :nb]


class SilhouetteLayer:
    """JAX/Pallas equivalent of the PyTorch SilhouetteLayer (forward only)."""

    def __init__(self, init_power=1.0, n_bins=100, lo=0.0, hi=1.0):
        # Deterministic parameter init (matches nn.Parameter(T.Tensor([init_power]))).
        self.power = jnp.asarray([init_power], jnp.float32)
        self.bins = jnp.linspace(lo, hi, num=n_bins, dtype=jnp.float32)

    def __call__(self, x_dgms):
        # x_dgms: dict {dim: (B, N_dim, 2)} — iterate in insertion order like the
        # PyTorch forward.  Diagrams with differing N_dim are padded once to the final
        # kernel layout; padded points are masked inside the kernel (exact for any
        # value of the learnable power).
        dgms = [jnp.asarray(v, jnp.float32) for v in x_dgms.values()]
        return silhouette_pallas(dgms, self.power, self.bins)


def silhouette_ref(x_dgms, power, bins):
    """Pure-JAX reference mirroring the PyTorch forward, for verification."""
    channels = []
    for _, dgms in x_dgms.items():
        births, deaths = dgms[:, :, 0:1], dgms[:, :, 1:2]
        w = jnp.power(deaths - births, power)
        wsum = jnp.sum(w, axis=1)
        wsum = jnp.where(wsum == 0.0, jnp.inf, wsum)
        mid = (deaths + births) / 2
        h = (deaths - births) / 2
        fibers = jnp.maximum(-jnp.abs(bins.reshape(1, 1, -1) - mid) + h, 0.0)
        fws = jnp.sum(w * fibers, axis=1) / wsum
        channels.append(fws[:, None, :])
    return jnp.concatenate(channels, axis=1)


if __name__ == "__main__":
    B, n_bins = 2, 100
    key = jax.random.PRNGKey(0)
    k0, k1, k2, k3 = jax.random.split(key, 4)

    def make_dgms(kb, kp, n_pts):
        births = jax.random.uniform(kb, (B, n_pts, 1), jnp.float32, 0.0, 0.5)
        pers = jax.random.uniform(kp, (B, n_pts, 1), jnp.float32, 0.0, 0.5)
        return jnp.concatenate([births, births + pers], axis=-1)  # (B, n_pts, 2)

    # Two homology dimensions with different point counts (exercises padding, masking
    # and the per-channel n_valid handling).
    x_dgms = {0: make_dgms(k0, k1, 8), 1: make_dgms(k2, k3, 5)}

    layer = SilhouetteLayer(init_power=1.0, n_bins=n_bins, lo=0.0, hi=1.0)
    out = jax.block_until_ready(layer(x_dgms))

    ref = silhouette_ref(x_dgms, layer.power[0], layer.bins)
    assert out.shape == (B, len(x_dgms), n_bins), out.shape
    assert jnp.allclose(out, ref, atol=1e-5, rtol=1e-5), float(jnp.max(jnp.abs(out - ref)))

    print("KERNEL_OK")
</pallas_src>

<mosaic_0001>
module attributes {stable_mosaic.version = 11 : i64} {
  func.func @_silhouette_kernel(%arg0: i32, %arg1: i32, %arg2: i32, %arg3: i32, %arg4: memref<1xf32, #tpu.memory_space<smem>>, %arg5: memref<2xi32, #tpu.memory_space<smem>>, %arg6: memref<1x128xf32, #tpu.memory_space<vmem>>, %arg7: memref<1x8x128xf32, #tpu.memory_space<vmem>>, %arg8: memref<1x8x128xf32, #tpu.memory_space<vmem>>, %arg9: memref<1x8x128xf32, #tpu.memory_space<vmem>>, %arg10: memref<8x1xf32, #tpu.memory_space<vmem>>) attributes {dimension_semantics = [#tpu.dimension_semantics<parallel>, #tpu.dimension_semantics<parallel>, #tpu.dimension_semantics<parallel>, #tpu.dimension_semantics<arbitrary>], iteration_bounds = array<i64: 2, 1, 1, 1>, scalar_prefetch = 0 : i64, scratch_operands = 1 : i64, tpu.core_type = #tpu.core_type<tc>, window_params = [{transform_indices = @transform_0, window_bounds = array<i64: 1>}, {transform_indices = @transform_1, window_bounds = array<i64: 2>}, {transform_indices = @transform_2, window_bounds = array<i64: 1, 128>}, {transform_indices = @transform_3, window_bounds = array<i64: 1, 8, 128>}, {transform_indices = @transform_4, window_bounds = array<i64: 1, 8, 128>}, {transform_indices = @transform_5, window_bounds = array<i64: 1, 8, 128>}]} {
    %c0_i32 = arith.constant 0 : i32
    %0 = arith.cmpi eq, %arg3, %c0_i32 : i32
    %1 = arith.extui %0 : i1 to i32
    %c0_i32_0 = arith.constant 0 : i32
    %2 = arith.cmpi ne, %1, %c0_i32_0 : i32
    scf.if %2 {
      %cst = arith.constant 0.000000e+00 : f32
      %12 = vector.broadcast %cst : f32 to vector<1x8x128xf32>
      %c0 = arith.constant 0 : index
      %c0_4 = arith.constant 0 : index
      %c0_5 = arith.constant 0 : index
      %13 = vector.load %arg9[%c0, %c0_4, %c0_5] : memref<1x8x128xf32, #tpu.memory_space<vmem>>, vector<1x8x128xf32>
      tpu.vector_store %arg9[%c0, %c0_4, %c0_5], %12 {strides = array<i32>} : memref<1x8x128xf32, #tpu.memory_space<vmem>>, vector<1x8x128xf32>,
      %cst_6 = arith.constant 0.000000e+00 : f32
      %14 = vector.broadcast %cst_6 : f32 to vector<8x1xf32>
      %c0_7 = arith.constant 0 : index
      %c0_8 = arith.constant 0 : index
      %15 = vector.load %arg10[%c0_7, %c0_8] : memref<8x1xf32, #tpu.memory_space<vmem>>, vector<8x1xf32>
      tpu.vector_store %arg10[%c0_7, %c0_8], %14 {strides = array<i32>} : memref<8x1xf32, #tpu.memory_space<vmem>>, vector<8x1xf32>,
    } else {
    }
    %3 = arith.index_cast %arg0 : i32 to index
    %4 = memref.load %arg5[%3] : memref<2xi32, #tpu.memory_space<smem>>
    %c128_i32 = arith.constant 128 : i32
    %5 = arith.muli %arg3, %c128_i32 : i32
    %6 = arith.cmpi slt, %5, %4 : i32
    %7 = arith.extui %6 : i1 to i32
    %c0_i32_1 = arith.constant 0 : i32
    %8 = arith.cmpi ne, %7, %c0_i32_1 : i32
    scf.if %8 {
      %c0 = arith.constant 0 : index
      %12 = memref.load %arg4[%c0] : memref<1xf32, #tpu.memory_space<smem>>
      %c0_4 = arith.constant 0 : index
      %c0_5 = arith.constant 0 : index
      %c0_6 = arith.constant 0 : index
      %13 = vector.load %arg7[%c0_4, %c0_5, %c0_6] : memref<1x8x128xf32, #tpu.memory_space<vmem>>, vector<1x8x128xf32>
      %14 = vector.shape_cast %13 : vector<1x8x128xf32> to vector<8x128xf32>
      %c0_7 = arith.constant 0 : index
      %c0_8 = arith.constant 0 : index
      %c0_9 = arith.constant 0 : index
      %15 = vector.load %arg8[%c0_7, %c0_8, %c0_9] : memref<1x8x128xf32, #tpu.memory_space<vmem>>, vector<1x8x128xf32>
      %16 = vector.shape_cast %15 : vector<1x8x128xf32> to vector<8x128xf32>
      %17 = arith.subf %16, %14 : vector<8x128xf32>
      %18 = vector.broadcast %12 : f32 to vector<8x128xf32>
      %19 = math.powf %17, %18 : vector<8x128xf32>
      %20 = tpu.iota {dimensions = array<i32: 1>} : vector<8x128xi32>
      %c128_i32_10 = arith.constant 128 : i32
      %21 = arith.muli %arg3, %c128_i32_10 : i32
      %22 = vector.broadcast %21 : i32 to vector<8x128xi32>
      %23 = arith.addi %20, %22 : vector<8x128xi32>
      %24 = vector.broadcast %4 : i32 to vector<8x128xi32>
      %25 = arith.cmpi slt, %23, %24 : vector<8x128xi32>
      %cst = arith.constant 0.000000e+00 : f32
      %26 = vector.broadcast %cst : f32 to vector<8x128xf32>
      %27 = arith.select %25, %19, %26 : vector<8x128xi1>, vector<8x128xf32>
      %c0_11 = arith.constant 0 : index
      %c0_12 = arith.constant 0 : index
      %28 = vector.load %arg10[%c0_11, %c0_12] : memref<8x1xf32, #tpu.memory_space<vmem>>, vector<8x1xf32>
      %cst_13 = arith.constant dense<0.000000e+00> : vector<8xf32>
      %29 = vector.multi_reduction <add>, %27, %cst_13 [1] : vector<8x128xf32> to vector<8xf32>
      %30 = vector.shape_cast %29 : vector<8xf32> to vector<8x1xf32>
      %31 = arith.addf %28, %30 : vector<8x1xf32>
      %c0_14 = arith.constant 0 : index
      %c0_15 = arith.constant 0 : index
      %32 = vector.load %arg10[%c0_14, %c0_15] : memref<8x1xf32, #tpu.memory_space<vmem>>, vector<8x1xf32>
      tpu.vector_store %arg10[%c0_14, %c0_15], %31 {strides = array<i32>} : memref<8x1xf32, #tpu.memory_space<vmem>>, vector<8x1xf32>,
      %33 = arith.addf %16, %14 : vector<8x128xf32>
      %cst_16 = arith.constant 5.000000e-01 : f32
      %34 = vector.broadcast %cst_16 : f32 to vector<8x128xf32>
      %35 = arith.mulf %33, %34 : vector<8x128xf32>
      %cst_17 = arith.constant 5.000000e-01 : f32
      %36 = vector.broadcast %cst_17 : f32 to vector<8x128xf32>
      %37 = arith.mulf %17, %36 : vector<8x128xf32>
      %38 = tpu.transpose %27, [1, 0] : vector<8x128xf32> -> vector<128x8xf32>
      %39 = tpu.transpose %35, [1, 0] : vector<8x128xf32> -> vector<128x8xf32>
      %40 = tpu.transpose %37, [1, 0] : vector<8x128xf32> -> vector<128x8xf32>
      %c0_18 = arith.constant 0 : index
      %c0_19 = arith.constant 0 : index
      %41 = vector.load %arg6[%c0_18, %c0_19] : memref<1x128xf32, #tpu.memory_space<vmem>>, vector<1x128xf32>
      %42 = vector.shape_cast %40 : vector<128x8xf32> to vector<128x8x1xf32>
      %43 = vector.shape_cast %41 : vector<1x128xf32> to vector<1x1x128xf32>
      %44 = vector.shape_cast %39 : vector<128x8xf32> to vector<128x8x1xf32>
      %45 = vector.broadcast %43 : vector<1x1x128xf32> to vector<128x8x128xf32>
      %46 = vector.broadcast %44 : vector<128x8x1xf32> to vector<128x8x128xf32>
      %47 = arith.subf %45, %46 : vector<128x8x128xf32>
      %48 = math.absf %47 : vector<128x8x128xf32>
      %49 = vector.broadcast %42 : vector<128x8x1xf32> to vector<128x8x128xf32>
      %50 = arith.subf %49, %48 : vector<128x8x128xf32>
      %cst_20 = arith.constant 0.000000e+00 : f32
      %51 = vector.broadcast %cst_20 : f32 to vector<128x8x128xf32>
      %52 = arith.maximumf %50, %51 : vector<128x8x128xf32>
      %c0_21 = arith.constant 0 : index
      %c0_22 = arith.constant 0 : index
      %c0_23 = arith.constant 0 : index
      %53 = vector.load %arg9[%c0_21, %c0_22, %c0_23] : memref<1x8x128xf32, #tpu.memory_space<vmem>>, vector<1x8x128xf32>
      %54 = vector.shape_cast %53 : vector<1x8x128xf32> to vector<8x128xf32>
      %55 = vector.shape_cast %38 : vector<128x8xf32> to vector<128x8x1xf32>
      %56 = vector.broadcast %55 : vector<128x8x1xf32> to vector<128x8x128xf32>
      %57 = arith.mulf %56, %52 : vector<128x8x128xf32>
      %cst_24 = arith.constant dense<0.000000e+00> : vector<8x128xf32>
      %58 = vector.multi_reduction <add>, %57, %cst_24 [0] : vector<128x8x128xf32> to vector<8x128xf32>
      %59 = arith.addf %54, %58 : vector<8x128xf32>
      %c0_25 = arith.constant 0 : index
      %c0_26 = arith.constant 0 : index
      %c0_27 = arith.constant 0 : index
      %60 = vector.load %arg9[%c0_25, %c0_26, %c0_27] : memref<1x8x128xf32, #tpu.memory_space<vmem>>, vector<1x8x128xf32>
      %61 = vector.shape_cast %60 : vector<1x8x128xf32> to vector<8x128xf32>
      %62 = vector.shape_cast %59 : vector<8x128xf32> to vector<1x8x128xf32>
      tpu.vector_store %arg9[%c0_25, %c0_26, %c0_27], %62 {strides = array<i32>} : memref<1x8x128xf32, #tpu.memory_space<vmem>>, vector<1x8x128xf32>,
    } else {
    }
    %c0_i32_2 = arith.constant 0 : i32
    %9 = arith.cmpi eq, %arg3, %c0_i32_2 : i32
    %10 = arith.extui %9 : i1 to i32
    %c0_i32_3 = arith.constant 0 : i32
    %11 = arith.cmpi ne, %10, %c0_i32_3 : i32
    scf.if %11 {
      %c0 = arith.constant 0 : index
      %c0_4 = arith.constant 0 : index
      %12 = vector.load %arg10[%c0, %c0_4] : memref<8x1xf32, #tpu.memory_space<vmem>>, vector<8x1xf32>
      %cst = arith.constant 0.000000e+00 : f32
      %13 = vector.broadcast %cst : f32 to vector<8x1xf32>
      %14 = arith.cmpf oeq, %12, %13 : vector<8x1xf32>
      %cst_5 = arith.constant 0x7F800000 : f32
      %15 = vector.broadcast %cst_5 : f32 to vector<8x1xf32>
      %16 = arith.select %14, %15, %12 : vector<8x1xi1>, vector<8x1xf32>
      %c0_6 = arith.constant 0 : index
      %c0_7 = arith.constant 0 : index
      %c0_8 = arith.constant 0 : index
      %17 = vector.load %arg9[%c0_6, %c0_7, %c0_8] : memref<1x8x128xf32, #tpu.memory_space<vmem>>, vector<1x8x128xf32>
      %18 = vector.shape_cast %17 : vector<1x8x128xf32> to vector<8x128xf32>
      %cst_9 = arith.constant 1.000000e+00 : f32
      %19 = vector.broadcast %cst_9 : f32 to vector<8x1xf32>
      %20 = arith.divf %19, %16 : vector<8x1xf32>
      %21 = vector.broadcast %20 : vector<8x1xf32> to vector<8x128xf32>
      %22 = arith.mulf %18, %21 : vector<8x128xf32>
      %c0_10 = arith.constant 0 : index
      %c0_11 = arith.constant 0 : index
      %c0_12 = arith.constant 0 : index
      %23 = vector.load %arg9[%c0_10, %c0_11, %c0_12] : memref<1x8x128xf32, #tpu.memory_space<vmem>>, vector<1x8x128xf32>
      %24 = vector.shape_cast %23 : vector<1x8x128xf32> to vector<8x128xf32>
      %25 = vector.shape_cast %22 : vector<8x128xf32> to vector<1x8x128xf32>
      tpu.vector_store %arg9[%c0_10, %c0_11, %c0_12], %25 {strides = array<i32>} : memref<1x8x128xf32, #tpu.memory_space<vmem>>, vector<1x8x128xf32>,
    } else {
    }
    return
  }
  func.func @transform_0(%arg0: i32, %arg1: i32, %arg2: i32, %arg3: i32) -> i32 {
    %c0_i32 = arith.constant 0 : i32
    %c0_i32_0 = arith.constant 0 : i32
    return %c0_i32 : i32
  }
  func.func @transform_1(%arg0: i32, %arg1: i32, %arg2: i32, %arg3: i32) -> i32 {
    %c0_i32 = arith.constant 0 : i32
    %c0_i32_0 = arith.constant 0 : i32
    return %c0_i32 : i32
  }
  func.func @transform_2(%arg0: i32, %arg1: i32, %arg2: i32, %arg3: i32) -> (i32, i32) {
    %c0_i32 = arith.constant 0 : i32
    %c0_i32_0 = arith.constant 0 : i32
    return %c0_i32, %arg2 : i32, i32
  }
  func.func @transform_3(%arg0: i32, %arg1: i32, %arg2: i32, %arg3: i32) -> (i32, i32, i32) {
    %c0_i32 = arith.constant 0 : i32
    return %arg0, %arg1, %arg3 : i32, i32, i32
  }
  func.func @transform_4(%arg0: i32, %arg1: i32, %arg2: i32, %arg3: i32) -> (i32, i32, i32) {
    %c0_i32 = arith.constant 0 : i32
    return %arg0, %arg1, %arg3 : i32, i32, i32
  }
  func.func @transform_5(%arg0: i32, %arg1: i32, %arg2: i32, %arg3: i32) -> (i32, i32, i32) {
    %c0_i32 = arith.constant 0 : i32
    return %arg0, %arg1, %arg2 : i32, i32, i32
  }
}

</mosaic_0001>

<llo_original>
// kernel: tpu_custom_call.1
$region0: #{tpu_custom_call.1}
  #allocation0 [shape = 'u32[]', space=smem, size = 0x4, offset = 0x4, fixed_abs, tag = 'smem constant byte address 0x4 - core index']
  #allocation1 [shape = 'u32[144,128]{1,0:T(1,128)}', space=vmem, size = 0x12000, scoped, tag = 'internal scratch']
  #allocation2 [shape = 'f32[8,1]{1,0:T(8,128)}', space=vmem, size = 0x1000, scoped, tag = 'scratch operand']
  #allocation3 [shape = 'f32[1]{0:T(128)S(6)}', space=smem, size = 0x200, scoped, tag = 'scoped memory for tpu_custom_call.1']
  %s0 = inlined_call_operand.<no memory space> [shape: f32[1], index: 0, kind: input, shape index: {}]
  %s1 = inlined_call_operand.vmem [shape: s32[2], index: 1, kind: input, shape index: {}]
  %s2 = inlined_call_operand.vmem [shape: f32[1,128], index: 2, kind: input, shape index: {}]
  %s3 = inlined_call_operand.hbm [shape: f32[2,8,128], index: 3, kind: input, shape index: {}]
  %s4 = inlined_call_operand.hbm [shape: f32[2,8,128], index: 4, kind: input, shape index: {}]
  %s5 = inlined_call_operand.hbm [shape: f32[2,8,128], index: 5, kind: output, shape index: {}]
  %s6 = sld [smem:[#allocation0]]
  $region77: #{tpu_custom_call.1} parent=0
    _
  %s8 = ssub.s32 1, %s6
  %s9 = scalar_select 0, %s8, %s6
  %10 = sst [smem:[#allocation3]] %s0
  $region1: #{tpu_custom_call.1} parent=0
    #allocation4 [shape = 'u8[512]{0}', space=smem, size = 0x200, scoped, tag = 'input window, operand 1, single buffered']
    #allocation5 [shape = 's32[2]{0}', space=sflag, size = 0x8, scoped, tag = 'scoped memory for tpu_custom_call.1']
    #allocation6 [shape = 's32[2]{0}', space=sflag, size = 0x8, scoped, tag = 'scoped memory for tpu_custom_call.1']
    #allocation7 [shape = 's32[2]{0}', space=sflag, size = 0x8, scoped, tag = 'scoped memory for tpu_custom_call.1']
    #allocation8 [shape = 'u8[8192]{0}', space=vmem, size = 0x2000, scoped, tag = 'input window, operand 3']
    #allocation9 [shape = 'u8[8192]{0}', space=vmem, size = 0x2000, scoped, tag = 'input window, operand 4']
    #allocation10 [shape = 's32[2]{0}', space=sflag, size = 0x8, scoped, tag = 'scoped memory for tpu_custom_call.1']
    #allocation11 [shape = 'u8[8192]{0}', space=vmem, size = 0x2000, scoped, tag = 'output window, operand 0']
    %11 = vsyncpa [#allocation7], 0
    %12 = vsyncpa [#allocation5], 0
    %s13 = scalar_lea.sflag [#allocation5], 1
    %14 = vsyncpa %s13, 0
    %15 = vsyncpa [#allocation10], 0
    %s16 = scalar_lea.sflag [#allocation10], 1
    %17 = vsyncpa %s16, 0
    %18 = vsyncpa [#allocation6], 0
    %s19 = scalar_lea.sflag [#allocation6], 1
    %20 = vsyncpa %s19, 0
    loop: start=0, step=1, limit=4
    $region2: #{tpu_custom_call.1} parent=1 // loop_pre_header
      _
    $region3: #{tpu_custom_call.1} parent=1 // loop_header
      %s22 = sphi 0, %s26
      %p23 = scmp.ge.s32.totalorder %s22, 4
      %s29 = sphi 0, %s55
      %s30 = sphi 0, %s51
      %s31 = sphi 0, %s47
      %s32 = sphi 0, %s43
      %s33 = sphi 0, %s29
      %s34 = sphi 0, %s30
      %s35 = sphi 0, %s31
      %s36 = sphi 0, %s32
      %s37 = sphi 0, %s33
      %s38 = sphi 0, %s34
      %s39 = sphi 0, %s35
      %s40 = sphi 0, %s36
      %s56 = sphi 0, %s56
      %s58 = sphi 0, %s56
      %s59 = sphi 0, %s58
      %s73 = sphi 0, %s59
      %s77 = sphi 0, %s77
      %s79 = sphi 0, %s77
      %s80 = sphi 0, %s79
      %s94 = sphi 0, %s80
      %s100 = sphi 0, %s102
      %s103 = sphi 0, %s100
      %s104 = sphi 0, %s103
      %s120 = sphi 0, %s104
      %s130 = sphi 0, %s132
      %s133 = sphi 0, %s130
      %s134 = sphi 0, %s133
      %s150 = sphi 0, %s134
      %s160 = sphi 0, %s162
      %s163 = sphi 0, %s160
      %s164 = sphi 0, %s163
      %s180 = sphi 0, %s164
      %s190 = sphi 0, %s192
      %s193 = sphi 0, %s190
      %s194 = sphi 0, %s193
      %s210 = sphi 0, %s194
    $region4: #{tpu_custom_call.1} parent=1 // loop_header_branch
      %25 = sbr.rel (%p23) target = $region8
    $region5: #{tpu_custom_call.1} parent=1 // loop_body
      %s27 = ssub.s32 %s22, 1
      %s28 = ssub.s32 %s22, 2
      %s41 = sadd.s32 1, %s32
      %p42 = scmp.ge.s32.totalorder %s41, 1
      %s43 = scalar_select %p42, 0, %s41
      %s44 = sadd.s32 1, %s31
      %s45 = scalar_select %p42, %s44, %s31
      %p46 = scmp.ge.s32.totalorder %s45, 1
      %s47 = scalar_select %p46, 0, %s45
      %s48 = sadd.s32 1, %s30
      %s49 = scalar_select %p46, %s48, %s30
      %p50 = scmp.ge.s32.totalorder %s49, 1
      %s51 = scalar_select %p50, 0, %s49
      %s52 = sadd.s32 1, %s29
      %s53 = scalar_select %p50, %s52, %s29
      %p54 = scmp.ge.s32.totalorder %s53, 2
      %s55 = scalar_select %p54, 0, %s53
      %s57 = sadd.s32 %s56, 1
      %p60 = scmp.eq.s32.totalorder %s22, 1
      %p61 = scmp.ne.s32.totalorder %s56, %s58
      %p62 = scmp.eq.s32.totalorder %s22, 0
      %p63 = por %p61, %p62
      %p64 = scmp.ne.s32.totalorder %s56, %s58
      %p65 = scmp.eq.s32.totalorder %s27, 1
      %p66 = por %p64, %p65
      %p67 = scmp.ne.s32.totalorder %s58, %s59
      %p68 = scmp.eq.s32.totalorder %s27, 0
      %p69 = por %p67, %p68
      %p70 = scmp.ne.s32.totalorder %s58, %s59
      %p71 = scmp.eq.s32.totalorder %s28, 1
      %p72 = por %p70, %p71
      %p74 = scmp.ne.s32.totalorder %s59, %s73
      %p75 = scmp.eq.s32.totalorder %s28, 0
      %p76 = por %p74, %p75
      %s78 = sadd.s32 %s77, 1
      %p81 = scmp.eq.s32.totalorder %s22, 1
      %p82 = scmp.ne.s32.totalorder %s77, %s79
      %p83 = scmp.eq.s32.totalorder %s22, 0
      %p84 = por %p82, %p83
      %p85 = scmp.ne.s32.totalorder %s77, %s79
      %p86 = scmp.eq.s32.totalorder %s27, 1
      %p87 = por %p85, %p86
      %p88 = scmp.ne.s32.totalorder %s79, %s80
      %p89 = scmp.eq.s32.totalorder %s27, 0
      %p90 = por %p88, %p89
      %p91 = scmp.ne.s32.totalorder %s79, %s80
      %p92 = scmp.eq.s32.totalorder %s28, 1
      %p93 = por %p91, %p92
      %p95 = scmp.ne.s32.totalorder %s80, %s94
      %p96 = scmp.eq.s32.totalorder %s28, 0
      %p97 = por %p95, %p96
      %s98 = ssub.s32 %s31, %s47
      %p99 = scmp.eq.s32.totalorder %s98, 0
      %s101 = sadd.s32 %s100, 1
      %s102 = scalar_select %p99, %s100, %s101
      %p105 = pneg %p99
      %p106 = scmp.eq.s32.totalorder %s22, 1
      %p107 = por %p105, %p106
      %p108 = scmp.ne.s32.totalorder %s100, %s103
      %p109 = scmp.eq.s32.totalorder %s22, 0
      %p110 = por %p108, %p109
      %p111 = scmp.ne.s32.totalorder %s100, %s103
      %p112 = scmp.eq.s32.totalorder %s27, 1
      %p113 = por %p111, %p112
      %p114 = scmp.ne.s32.totalorder %s103, %s104
      %p115 = scmp.eq.s32.totalorder %s27, 0
      %p116 = por %p114, %p115
      %p117 = scmp.ne.s32.totalorder %s103, %s104
      %p118 = scmp.eq.s32.totalorder %s28, 1
      %p119 = por %p117, %p118
      %p121 = scmp.ne.s32.totalorder %s104, %s120
      %p122 = scmp.eq.s32.totalorder %s28, 0
      %p123 = por %p121, %p122
      %s124 = ssub.s32 %s29, %s55
      %s125 = ssub.s32 %s30, %s51
      %s126 = sor.u32 %s124, %s125
      %s127 = ssub.s32 %s32, %s43
      %s128 = sor.u32 %s126, %s127
      %p129 = scmp.eq.s32.totalorder %s128, 0
      %s131 = sadd.s32 %s130, 1
      %s132 = scalar_select %p129, %s130, %s131
      %p135 = pneg %p129
      %p136 = scmp.eq.s32.totalorder %s22, 1
      %p137 = por %p135, %p136
      %p138 = scmp.ne.s32.totalorder %s130, %s133
      %p139 = scmp.eq.s32.totalorder %s22, 0
      %p140 = por %p138, %p139
      %p141 = scmp.ne.s32.totalorder %s130, %s133
      %p142 = scmp.eq.s32.totalorder %s27, 1
      %p143 = por %p141, %p142
      %p144 = scmp.ne.s32.totalorder %s133, %s134
      %p145 = scmp.eq.s32.totalorder %s27, 0
      %p146 = por %p144, %p145
      %p147 = scmp.ne.s32.totalorder %s133, %s134
      %p148 = scmp.eq.s32.totalorder %s28, 1
      %p149 = por %p147, %p148
      %p151 = scmp.ne.s32.totalorder %s134, %s150
      %p152 = scmp.eq.s32.totalorder %s28, 0
      %p153 = por %p151, %p152
      %s154 = ssub.s32 %s29, %s55
      %s155 = ssub.s32 %s30, %s51
      %s156 = sor.u32 %s154, %s155
      %s157 = ssub.s32 %s32, %s43
      %s158 = sor.u32 %s156, %s157
      %p159 = scmp.eq.s32.totalorder %s158, 0
      %s161 = sadd.s32 %s160, 1
      %s162 = scalar_select %p159, %s160, %s161
      %p165 = pneg %p159
      %p166 = scmp.eq.s32.totalorder %s22, 1
      %p167 = por %p165, %p166
      %p168 = scmp.ne.s32.totalorder %s160, %s163
      %p169 = scmp.eq.s32.totalorder %s22, 0
      %p170 = por %p168, %p169
      %p171 = scmp.ne.s32.totalorder %s160, %s163
      %p172 = scmp.eq.s32.totalorder %s27, 1
      %p173 = por %p171, %p172
      %p174 = scmp.ne.s32.totalorder %s163, %s164
      %p175 = scmp.eq.s32.totalorder %s27, 0
      %p176 = por %p174, %p175
      %p177 = scmp.ne.s32.totalorder %s163, %s164
      %p178 = scmp.eq.s32.totalorder %s28, 1
      %p179 = por %p177, %p178
      %p181 = scmp.ne.s32.totalorder %s164, %s180
      %p182 = scmp.eq.s32.totalorder %s28, 0
      %p183 = por %p181, %p182
      %s184 = ssub.s32 %s29, %s55
      %s185 = ssub.s32 %s30, %s51
      %s186 = sor.u32 %s184, %s185
      %s187 = ssub.s32 %s31, %s47
      %s188 = sor.u32 %s186, %s187
      %p189 = scmp.eq.s32.totalorder %s188, 0
      %s191 = sadd.s32 %s190, 1
      %s192 = scalar_select %p189, %s190, %s191
      %p195 = pneg %p189
      %p196 = scmp.eq.s32.totalorder %s22, 1
      %p197 = por %p195, %p196
      %p198 = scmp.ne.s32.totalorder %s190, %s193
      %p199 = scmp.eq.s32.totalorder %s22, 0
      %p200 = por %p198, %p199
      %p201 = scmp.ne.s32.totalorder %s190, %s193
      %p202 = scmp.eq.s32.totalorder %s27, 1
      %p203 = por %p201, %p202
      %p204 = scmp.ne.s32.totalorder %s193, %s194
      %p205 = scmp.eq.s32.totalorder %s27, 0
      %p206 = por %p204, %p205
      %p207 = scmp.ne.s32.totalorder %s193, %s194
      %p208 = scmp.eq.s32.totalorder %s28, 1
      %p209 = por %p207, %p208
      %p211 = scmp.ne.s32.totalorder %s194, %s210
      %p212 = scmp.eq.s32.totalorder %s28, 0
      %p213 = por %p211, %p212
      %p214 = scmp.le.s32.totalorder 1, %s22
      %p215 = scmp.lt.s32.totalorder %s22, 3
      %p216 = pnand %p214, %p215
      %p217 = pneg %p216
      // Predicated region
      $region9: #{tpu_custom_call.1} parent=5 // pred_check
        _
      $region10: #{tpu_custom_call.1} parent=5 // pred_check_branch
        %219 = sbr.rel (%p216) target = $region12
      $region11: #{tpu_custom_call.1} parent=5 // pred_region
        %s220 = ssub.s32 %s22, 1
        // Predicated region
        $region13: #{tpu_custom_call.1} parent=11 // pred_check
          %p221 = pneg %p69
        $region14: #{tpu_custom_call.1} parent=11 // pred_check_branch
          %223 = sbr.rel (%p221) target = $region16
        $region15: #{tpu_custom_call.1} parent=11 // pred_region
          _
        $region16: #{tpu_custom_call.1} parent=11 // pred_fallthru
          _
        // Predicated region
        $region17: #{tpu_custom_call.1} parent=11 // pred_check
          %p224 = pneg %p90
        $region18: #{tpu_custom_call.1} parent=11 // pred_check_branch
          %226 = sbr.rel (%p224) target = $region20
        $region19: #{tpu_custom_call.1} parent=11 // pred_region
          %s228 = ssub.s32 16, 16
          %229 = vsyncadd [#allocation7], %s228
          %s231 = sshll.u32 %s1, 4
          %s232 = int_to_ptr.vmem [resolvable:$true] %s231
          %234 = dma.vmem_to_smem %s232, 16, [#allocation4], [#allocation7]
        $region20: #{tpu_custom_call.1} parent=11 // pred_fallthru
          _
        // Predicated region
        $region21: #{tpu_custom_call.1} parent=11 // pred_check
          %p235 = pneg %p116
        $region22: #{tpu_custom_call.1} parent=11 // pred_check_branch
          %237 = sbr.rel (%p235) target = $region24
        $region23: #{tpu_custom_call.1} parent=11 // pred_region
          %p238 = scmp.lt.s32.totalorder %s35, 0
          %s239 = scalar_select %p238, %s35, 0
          %s240 = scalar_lea.vmem %s2, %s239
        $region24: #{tpu_custom_call.1} parent=11 // pred_fallthru
          _
      $region12: #{tpu_custom_call.1} parent=5 // pred_fallthru
        _
      %p241 = scmp.lt.s32.totalorder %s22, 2
      // Predicated region
      $region25: #{tpu_custom_call.1} parent=5 // pred_check
        %p242 = pneg %p241
      $region26: #{tpu_custom_call.1} parent=5 // pred_check_branch
        %244 = sbr.rel (%p242) target = $region28
      $region27: #{tpu_custom_call.1} parent=5 // pred_region
        // Predicated region
        $region29: #{tpu_custom_call.1} parent=27 // pred_check
          %p245 = pneg %p140
        $region30: #{tpu_custom_call.1} parent=27 // pred_check_branch
          %247 = sbr.rel (%p245) target = $region32
        $region31: #{tpu_custom_call.1} parent=27 // pred_region
          %s248 = sand.u32 %s130, 1
          %s249 = scalar_lea.sflag [#allocation5], %s248
          %s250 = sand.u32 %s130, 1
          %s251 = smul.addr %s250, 8
          %s252 = scalar_lea.vmem [#allocation8], %s251
          %s254 = ssub.s32 128, 128
          %255 = vsyncadd %s249, %s254
          %s256 = sadd.s32 %s32, %s30
          %s257 = sadd.s32 %s256, %s29
          %s258 = smul.addr %s257, 128
          %s259 = scalar_lea.hbm %s3, %s258
          %s261 = sshll.u32 %s252, 4
          %s262 = int_to_ptr.vmem [resolvable:$true] %s261
          %264 = dma.hbm_to_vmem [thread:$0]  %s259, 128, %s262, %s249
        $region32: #{tpu_custom_call.1} parent=27 // pred_fallthru
          _
        // Predicated region
        $region33: #{tpu_custom_call.1} parent=27 // pred_check
          %p265 = pneg %p170
        $region34: #{tpu_custom_call.1} parent=27 // pred_check_branch
          %267 = sbr.rel (%p265) target = $region36
        $region35: #{tpu_custom_call.1} parent=27 // pred_region
          %s268 = sand.u32 %s160, 1
          %s269 = scalar_lea.sflag [#allocation10], %s268
          %s270 = sand.u32 %s160, 1
          %s271 = smul.addr %s270, 8
          %s272 = scalar_lea.vmem [#allocation9], %s271
          %s274 = ssub.s32 128, 128
          %275 = vsyncadd %s269, %s274
          %s276 = sadd.s32 %s32, %s30
          %s277 = sadd.s32 %s276, %s29
          %s278 = smul.addr %s277, 128
          %s279 = scalar_lea.hbm %s4, %s278
          %s281 = sshll.u32 %s272, 4
          %s282 = int_to_ptr.vmem [resolvable:$true] %s281
          %284 = dma.hbm_to_vmem [thread:$0]  %s279, 128, %s282, %s269
        $region36: #{tpu_custom_call.1} parent=27 // pred_fallthru
          _
      $region28: #{tpu_custom_call.1} parent=5 // pred_fallthru
        _
      %p285 = scmp.le.s32.totalorder 1, %s22
      %p286 = scmp.lt.s32.totalorder %s22, 3
      %p287 = pnand %p285, %p286
      %p288 = pneg %p287
      // Predicated region
      $region37: #{tpu_custom_call.1} parent=5 // pred_check
        _
      $region38: #{tpu_custom_call.1} parent=5 // pred_check_branch
        %290 = sbr.rel (%p287) target = $region40
      $region39: #{tpu_custom_call.1} parent=5 // pred_region
        %s291 = ssub.s32 %s22, 1
        // Predicated region
        $region41: #{tpu_custom_call.1} parent=39 // pred_check
          %p292 = pneg %p90
        $region42: #{tpu_custom_call.1} parent=39 // pred_check_branch
          %294 = sbr.rel (%p292) target = $region44
        $region43: #{tpu_custom_call.1} parent=39 // pred_region
          %295 = dma.done [#allocation7], 16
        $region44: #{tpu_custom_call.1} parent=39 // pred_fallthru
          _
        %s296 = sand.u32 %s133, 1
        %s297 = scalar_lea.sflag [#allocation5], %s296
        %s298 = sand.u32 %s133, 1
        %s299 = smul.addr %s298, 8
        %s300 = scalar_lea.vmem [#allocation8], %s299
        // Predicated region
        $region45: #{tpu_custom_call.1} parent=39 // pred_check
          %p301 = pneg %p146
        $region46: #{tpu_custom_call.1} parent=39 // pred_check_branch
          %303 = sbr.rel (%p301) target = $region48
        $region47: #{tpu_custom_call.1} parent=39 // pred_region
          %304 = dma.done %s297, 128
        $region48: #{tpu_custom_call.1} parent=39 // pred_fallthru
          _
        %s305 = sand.u32 %s163, 1
        %s306 = scalar_lea.sflag [#allocation10], %s305
        %s307 = sand.u32 %s163, 1
        %s308 = smul.addr %s307, 8
        %s309 = scalar_lea.vmem [#allocation9], %s308
        // Predicated region
        $region49: #{tpu_custom_call.1} parent=39 // pred_check
          %p310 = pneg %p176
        $region50: #{tpu_custom_call.1} parent=39 // pred_check_branch
          %312 = sbr.rel (%p310) target = $region52
        $region51: #{tpu_custom_call.1} parent=39 // pred_region
          %313 = dma.done %s306, 128
        $region52: #{tpu_custom_call.1} parent=39 // pred_fallthru
          _
        %314 = sfence
        %p315 = pneg %p69
        %p316 = pneg %p66
        %p317 = pneg %p90
        %p318 = pneg %p87
        %p319 = scmp.lt.s32.totalorder %s35, 0
        %s320 = scalar_select %p319, %s35, 0
        %s321 = scalar_lea.vmem %s2, %s320
        %p322 = pneg %p116
        %p323 = pneg %p113
        %s324 = sand.u32 %s133, 1
        %s325 = scalar_lea.sflag [#allocation5], %s324
        %s326 = sand.u32 %s133, 1
        %s327 = smul.addr %s326, 8
        %s328 = scalar_lea.vmem [#allocation8], %s327
        %p329 = pneg %p146
        %p330 = pneg %p143
        %s331 = sand.u32 %s163, 1
        %s332 = scalar_lea.sflag [#allocation10], %s331
        %s333 = sand.u32 %s163, 1
        %s334 = smul.addr %s333, 8
        %s335 = scalar_lea.vmem [#allocation9], %s334
        %p336 = pneg %p176
        %p337 = pneg %p173
        %p338 = pneg %p206
        %p339 = pneg %p203
        %s340 = sand.u32 %s193, 1
        %s341 = scalar_lea.sflag [#allocation6], %s340
        %s342 = sand.u32 %s193, 1
        %s343 = smul.addr %s342, 8
        %s344 = scalar_lea.vmem [#allocation11], %s343
        %p345 = scmp.lt.s32.totalorder %s35, 0
        %s346 = scalar_select %p345, %s35, 0
        %s347 = scalar_lea.vmem %s2, %s346
        %p348 = scmp.eq.s32.totalorder %s36, 0
        // Predicated region
        $region53: #{tpu_custom_call.1} parent=39 // pred_check
          %p349 = pneg %p348
        $region54: #{tpu_custom_call.1} parent=39 // pred_check_branch
          %351 = sbr.rel (%p349) target = $region56
        $region55: #{tpu_custom_call.1} parent=39 // pred_region
          %352 = vst [vmem:[%s344] sm:$0xff] 0.0
          %vm353 = vcmask 7168
          %354 = vst.msk [vmem:[#allocation2] sm:$0xff] %vm353, 0.0
        $region56: #{tpu_custom_call.1} parent=39 // pred_fallthru
          _
        %s355 = sld [smem:[#allocation4 + %s33]]
        %s356 = smul.u32 %s36, 128
        %p357 = scmp.lt.s32.totalorder %s356, %s355
        // Predicated region
        $region57: #{tpu_custom_call.1} parent=39 // pred_check
          %p358 = pneg %p357
        $region58: #{tpu_custom_call.1} parent=39 // pred_check_branch
          %360 = sbr.rel (%p358) target = $region60
        $region59: #{tpu_custom_call.1} parent=39 // pred_region
          %s361 = sld [smem:[#allocation3]]
          %v362 = vld [vmem:[%s300] sm:$0xff]
          %v363 = vld [vmem:[%s309] sm:$0xff]
          %v364 = vsub.f32 %v363, %v362
          %v365 = vstv %s361
          %v366 = vpow.f32 %v364, %v365
          %v367 = vlaneseq
          %v368 = vand.u32 %v367, 127
          %v369 = vstv %s356
          %v370 = vadd.s32 %v368, %v369
          %v371 = vstv %s355
          %vm372 = vcmp.lt.s32.totalorder %v370, %v371
          %v373 = vsel %vm372, %v366, 0.0
          %v374 = vld [vmem:[#allocation2] sm:$0xff]
          %375 = vadd.xlane.f32.xlu0 %v373
          %v376 = vpop.xlane.xlu0 %375
          %v377 = vadd.f32 %v374, %v376
          %vm378 = vcmask 7168
          %379 = vst.msk [vmem:[#allocation2] sm:$0xff] %vm378, %v377
          %v380 = vadd.f32 %v363, %v362
          %v381 = vmul.f32 %v380, 0.5
          %v382 = vmul.f32 %v364, 0.5
          %383 = vxpose.xlu0.b32.start [1/16] %v373, 128
          %384 = vxpose.xlu0.b32.cont [2/16] 0.0, 128
          %385 = vxpose.xlu0.b32.cont [3/16] 0.0, 128
          %386 = vxpose.xlu0.b32.cont [4/16] 0.0, 128
          %387 = vxpose.xlu0.b32.cont [5/16] 0.0, 128
          %388 = vxpose.xlu0.b32.cont [6/16] 0.0, 128
          %389 = vxpose.xlu0.b32.cont [7/16] 0.0, 128
          %390 = vxpose.xlu0.b32.cont [8/16] 0.0, 128
          %391 = vxpose.xlu0.b32.cont [9/16] 0.0, 128
          %392 = vxpose.xlu0.b32.cont [10/16] 0.0, 128
          %393 = vxpose.xlu0.b32.cont [11/16] 0.0, 128
          %394 = vxpose.xlu0.b32.cont [12/16] 0.0, 128
          %395 = vxpose.xlu0.b32.cont [13/16] 0.0, 128
          %396 = vxpose.xlu0.b32.cont [14/16] 0.0, 128
          %397 = vxpose.xlu0.b32.cont [15/16] 0.0, 128
          %398 = vxpose.xlu0.b32.end [16/16] 0.0, 128
          %v399 = vpop.trf.xlu0
          %v400 = vpop.trf.xlu0
          %v401 = vpop.trf.xlu0
          %v402 = vpop.trf.xlu0
          %v403 = vpop.trf.xlu0
          %v404 = vpop.trf.xlu0
          %v405 = vpop.trf.xlu0
          %v406 = vpop.trf.xlu0
          %v407 = vpop.trf.xlu0
          %v408 = vpop.trf.xlu0
          %v409 = vpop.trf.xlu0
          %v410 = vpop.trf.xlu0
          %v411 = vpop.trf.xlu0
          %v412 = vpop.trf.xlu0
          %v413 = vpop.trf.xlu0
          %v414 = vpop.trf.xlu0
          %415 = vxpose.xlu0.b32.start [1/16] %v381, 128
          %416 = vxpose.xlu0.b32.cont [2/16] 0.0, 128
          %417 = vxpose.xlu0.b32.cont [3/16] 0.0, 128
          %418 = vxpose.xlu0.b32.cont [4/16] 0.0, 128
          %419 = vxpose.xlu0.b32.cont [5/16] 0.0, 128
          %420 = vxpose.xlu0.b32.cont [6/16] 0.0, 128
          %421 = vxpose.xlu0.b32.cont [7/16] 0.0, 128
          %422 = vxpose.xlu0.b32.cont [8/16] 0.0, 128
          %423 = vxpose.xlu0.b32.cont [9/16] 0.0, 128
          %424 = vxpose.xlu0.b32.cont [10/16] 0.0, 128
          %425 = vxpose.xlu0.b32.cont [11/16] 0.0, 128
          %426 = vxpose.xlu0.b32.cont [12/16] 0.0, 128
          %427 = vxpose.xlu0.b32.cont [13/16] 0.0, 128
          %428 = vxpose.xlu0.b32.cont [14/16] 0.0, 128
          %429 = vxpose.xlu0.b32.cont [15/16] 0.0, 128
          %430 = vxpose.xlu0.b32.end [16/16] 0.0, 128
          %v431 = vpop.trf.xlu0
          %v432 = vpop.trf.xlu0
          %v433 = vpop.trf.xlu0
          %v434 = vpop.trf.xlu0
          %v435 = vpop.trf.xlu0
          %v436 = vpop.trf.xlu0
          %v437 = vpop.trf.xlu0
          %v438 = vpop.trf.xlu0
          %v439 = vpop.trf.xlu0
          %v440 = vpop.trf.xlu0
          %v441 = vpop.trf.xlu0
          %v442 = vpop.trf.xlu0
          %v443 = vpop.trf.xlu0
          %v444 = vpop.trf.xlu0
          %v445 = vpop.trf.xlu0
          %v446 = vpop.trf.xlu0
          %447 = vxpose.xlu0.b32.start [1/16] %v382, 128
          %448 = vxpose.xlu0.b32.cont [2/16] 0.0, 128
          %449 = vxpose.xlu0.b32.cont [3/16] 0.0, 128
          %450 = vxpose.xlu0.b32.cont [4/16] 0.0, 128
          %451 = vxpose.xlu0.b32.cont [5/16] 0.0, 128
          %452 = vxpose.xlu0.b32.cont [6/16] 0.0, 128
          %453 = vxpose.xlu0.b32.cont [7/16] 0.0, 128
          %454 = vxpose.xlu0.b32.cont [8/16] 0.0, 128
          %455 = vxpose.xlu0.b32.cont [9/16] 0.0, 128
          %456 = vxpose.xlu0.b32.cont [10/16] 0.0, 128
          %457 = vxpose.xlu0.b32.cont [11/16] 0.0, 128
          %458 = vxpose.xlu0.b32.cont [12/16] 0.0, 128
          %459 = vxpose.xlu0.b32.cont [13/16] 0.0, 128
          %460 = vxpose.xlu0.b32.cont [14/16] 0.0, 128
          %461 = vxpose.xlu0.b32.cont [15/16] 0.0, 128
          %462 = vxpose.xlu0.b32.end [16/16] 0.0, 128
          %v463 = vpop.trf.xlu0
          %v464 = vpop.trf.xlu0
          %v465 = vpop.trf.xlu0
          %v466 = vpop.trf.xlu0
          %v467 = vpop.trf.xlu0
          %v468 = vpop.trf.xlu0
          %v469 = vpop.trf.xlu0
          %v470 = vpop.trf.xlu0
          %v471 = vpop.trf.xlu0
          %v472 = vpop.trf.xlu0
          %v473 = vpop.trf.xlu0
          %v474 = vpop.trf.xlu0
          %v475 = vpop.trf.xlu0
          %v476 = vpop.trf.xlu0
          %v477 = vpop.trf.xlu0
          %v478 = vpop.trf.xlu0
          %v479 = vld [vmem:[%s347] sm:$0x1]
          %v480 = vlaneseq
          %v481 = vshrl.u32 %v480, 7
          %v482 = vsub.s32 0, %v481
          %v483 = vrot.slane %v463, %v482
          %485 = vbcast.lane.b32.xlu0 %v483, 256
          %v486 = vpop.permute.xlu0 %485
          %v487 = vlaneseq
          %v488 = vshrl.u32 %v487, 7
          %v489 = vsub.s32 1, %v488
          %v490 = vrot.slane %v463, %v489
          %492 = vbcast.lane.b32.xlu0 %v490, 256
          %v493 = vpop.permute.xlu0 %492
          %v494 = vlaneseq
          %v495 = vshrl.u32 %v494, 7
          %v496 = vsub.s32 2, %v495
          %v497 = vrot.slane %v463, %v496
          %499 = vbcast.lane.b32.xlu0 %v497, 256
          %v500 = vpop.permute.xlu0 %499
          %v501 = vlaneseq
          %v502 = vshrl.u32 %v501, 7
          %v503 = vsub.s32 3, %v502
          %v504 = vrot.slane %v463, %v503
          %506 = vbcast.lane.b32.xlu0 %v504, 256
          %v507 = vpop.permute.xlu0 %506
          %v508 = vlaneseq
          %v509 = vshrl.u32 %v508, 7
          %v510 = vsub.s32 4, %v509
          %v511 = vrot.slane %v463, %v510
          %513 = vbcast.lane.b32.xlu0 %v511, 256
          %v514 = vpop.permute.xlu0 %513
          %v515 = vlaneseq
          %v516 = vshrl.u32 %v515, 7
          %v517 = vsub.s32 5, %v516
          %v518 = vrot.slane %v463, %v517
          %520 = vbcast.lane.b32.xlu0 %v518, 256
          %v521 = vpop.permute.xlu0 %520
          %v522 = vlaneseq
          %v523 = vshrl.u32 %v522, 7
          %v524 = vsub.s32 6, %v523
          %v525 = vrot.slane %v463, %v524
          %527 = vbcast.lane.b32.xlu0 %v525, 256
          %v528 = vpop.permute.xlu0 %527
          %v529 = vlaneseq
          %v530 = vshrl.u32 %v529, 7
          %v531 = vsub.s32 7, %v530
          %v532 = vrot.slane %v463, %v531
          %534 = vbcast.lane.b32.xlu0 %v532, 256
          %v535 = vpop.permute.xlu0 %534
          %v536 = vlaneseq
          %v537 = vshrl.u32 %v536, 7
          %v538 = vsub.s32 0, %v537
          %v539 = vrot.slane %v464, %v538
          %541 = vbcast.lane.b32.xlu0 %v539, 256
          %v542 = vpop.permute.xlu0 %541
          %v543 = vlaneseq
          %v544 = vshrl.u32 %v543, 7
          %v545 = vsub.s32 1, %v544
          %v546 = vrot.slane %v464, %v545
          %548 = vbcast.lane.b32.xlu0 %v546, 256
          %v549 = vpop.permute.xlu0 %548
          %v550 = vlaneseq
          %v551 = vshrl.u32 %v550, 7
          %v552 = vsub.s32 2, %v551
          %v553 = vrot.slane %v464, %v552
          %555 = vbcast.lane.b32.xlu0 %v553, 256
          %v556 = vpop.permute.xlu0 %555
          %v557 = vlaneseq
          %v558 = vshrl.u32 %v557, 7
          %v559 = vsub.s32 3, %v558
          %v560 = vrot.slane %v464, %v559
          %562 = vbcast.lane.b32.xlu0 %v560, 256
          %v563 = vpop.permute.xlu0 %562
          %v564 = vlaneseq
          %v565 = vshrl.u32 %v564, 7
          %v566 = vsub.s32 4, %v565
          %v567 = vrot.slane %v464, %v566
          %569 = vbcast.lane.b32.xlu0 %v567, 256
          %v570 = vpop.permute.xlu0 %569
          %v571 = vlaneseq
          %v572 = vshrl.u32 %v571, 7
          %v573 = vsub.s32 5, %v572
          %v574 = vrot.slane %v464, %v573
          %576 = vbcast.lane.b32.xlu0 %v574, 256
          %v577 = vpop.permute.xlu0 %576
          %v578 = vlaneseq
          %v579 = vshrl.u32 %v578, 7
          %v580 = vsub.s32 6, %v579
          %v581 = vrot.slane %v464, %v580
          %583 = vbcast.lane.b32.xlu0 %v581, 256
          %v584 = vpop.permute.xlu0 %583
          %v585 = vlaneseq
          %v586 = vshrl.u32 %v585, 7
          %v587 = vsub.s32 7, %v586
          %v588 = vrot.slane %v464, %v587
          %590 = vbcast.lane.b32.xlu0 %v588, 256
          %v591 = vpop.permute.xlu0 %590
          %v592 = vlaneseq
          %v593 = vshrl.u32 %v592, 7
          %v594 = vsub.s32 0, %v593
          %v595 = vrot.slane %v465, %v594
          %597 = vbcast.lane.b32.xlu0 %v595, 256
          %v598 = vpop.permute.xlu0 %597
          %v599 = vlaneseq
          %v600 = vshrl.u32 %v599, 7
          %v601 = vsub.s32 1, %v600
          %v602 = vrot.slane %v465, %v601
          %604 = vbcast.lane.b32.xlu0 %v602, 256
          %v605 = vpop.permute.xlu0 %604
          %v606 = vlaneseq
          %v607 = vshrl.u32 %v606, 7
          %v608 = vsub.s32 2, %v607
          %v609 = vrot.slane %v465, %v608
          %611 = vbcast.lane.b32.xlu0 %v609, 256
          %v612 = vpop.permute.xlu0 %611
          %v613 = vlaneseq
          %v614 = vshrl.u32 %v613, 7
          %v615 = vsub.s32 3, %v614
          %v616 = vrot.slane %v465, %v615
          %618 = vbcast.lane.b32.xlu0 %v616, 256
          %v619 = vpop.permute.xlu0 %618
          %v620 = vlaneseq
          %v621 = vshrl.u32 %v620, 7
          %v622 = vsub.s32 4, %v621
          %v623 = vrot.slane %v465, %v622
          %625 = vbcast.lane.b32.xlu0 %v623, 256
          %v626 = vpop.permute.xlu0 %625
          %v627 = vlaneseq
          %v628 = vshrl.u32 %v627, 7
          %v629 = vsub.s32 5, %v628
          %v630 = vrot.slane %v465, %v629
          %632 = vbcast.lane.b32.xlu0 %v630, 256
          %v633 = vpop.permute.xlu0 %632
          %v634 = vlaneseq
          %v635 = vshrl.u32 %v634, 7
          %v636 = vsub.s32 6, %v635
          %v637 = vrot.slane %v465, %v636
          %639 = vbcast.lane.b32.xlu0 %v637, 256
          %v640 = vpop.permute.xlu0 %639
          %v641 = vlaneseq
          %v642 = vshrl.u32 %v641, 7
          %v643 = vsub.s32 7, %v642
          %v644 = vrot.slane %v465, %v643
          %646 = vbcast.lane.b32.xlu0 %v644, 256
          %v647 = vpop.permute.xlu0 %646
          %v648 = vlaneseq
          %v649 = vshrl.u32 %v648, 7
          %v650 = vsub.s32 0, %v649
          %v651 = vrot.slane %v466, %v650
          %653 = vbcast.lane.b32.xlu0 %v651, 256
          %v654 = vpop.permute.xlu0 %653
          %v655 = vlaneseq
          %v656 = vshrl.u32 %v655, 7
          %v657 = vsub.s32 1, %v656
          %v658 = vrot.slane %v466, %v657
          %660 = vbcast.lane.b32.xlu0 %v658, 256
          %v661 = vpop.permute.xlu0 %660
          %v662 = vlaneseq
          %v663 = vshrl.u32 %v662, 7
          %v664 = vsub.s32 2, %v663
          %v665 = vrot.slane %v466, %v664
          %667 = vbcast.lane.b32.xlu0 %v665, 256
          %v668 = vpop.permute.xlu0 %667
          %v669 = vlaneseq
          %v670 = vshrl.u32 %v669, 7
          %v671 = vsub.s32 3, %v670
          %v672 = vrot.slane %v466, %v671
          %674 = vbcast.lane.b32.xlu0 %v672, 256
          %v675 = vpop.permute.xlu0 %674
          %v676 = vlaneseq
          %v677 = vshrl.u32 %v676, 7
          %v678 = vsub.s32 4, %v677
          %v679 = vrot.slane %v466, %v678
          %681 = vbcast.lane.b32.xlu0 %v679, 256
          %v682 = vpop.permute.xlu0 %681
          %v683 = vlaneseq
          %v684 = vshrl.u32 %v683, 7
          %v685 = vsub.s32 5, %v684
          %v686 = vrot.slane %v466, %v685
          %688 = vbcast.lane.b32.xlu0 %v686, 256
          %v689 = vpop.permute.xlu0 %688
          %v690 = vlaneseq
          %v691 = vshrl.u32 %v690, 7
          %v692 = vsub.s32 6, %v691
          %v693 = vrot.slane %v466, %v692
          %695 = vbcast.lane.b32.xlu0 %v693, 256
          %v696 = vpop.permute.xlu0 %695
          %v697 = vlaneseq
          %v698 = vshrl.u32 %v697, 7
          %v699 = vsub.s32 7, %v698
          %v700 = vrot.slane %v466, %v699
          %702 = vbcast.lane.b32.xlu0 %v700, 256
          %v703 = vpop.permute.xlu0 %702
          %v704 = vlaneseq
          %v705 = vshrl.u32 %v704, 7
          %v706 = vsub.s32 0, %v705
          %v707 = vrot.slane %v467, %v706
          %709 = vbcast.lane.b32.xlu0 %v707, 256
          %v710 = vpop.permute.xlu0 %709
          %v711 = vlaneseq
          %v712 = vshrl.u32 %v711, 7
          %v713 = vsub.s32 1, %v712
          %v714 = vrot.slane %v467, %v713
          %716 = vbcast.lane.b32.xlu0 %v714, 256
          %v717 = vpop.permute.xlu0 %716
          %v718 = vlaneseq
          %v719 = vshrl.u32 %v718, 7
          %v720 = vsub.s32 2, %v719
          %v721 = vrot.slane %v467, %v720
          %723 = vbcast.lane.b32.xlu0 %v721, 256
          %v724 = vpop.permute.xlu0 %723
          %v725 = vlaneseq
          %v726 = vshrl.u32 %v725, 7
          %v727 = vsub.s32 3, %v726
          %v728 = vrot.slane %v467, %v727
          %730 = vbcast.lane.b32.xlu0 %v728, 256
          %v731 = vpop.permute.xlu0 %730
          %v732 = vlaneseq
          %v733 = vshrl.u32 %v732, 7
          %v734 = vsub.s32 4, %v733
          %v735 = vrot.slane %v467, %v734
          %737 = vbcast.lane.b32.xlu0 %v735, 256
          %v738 = vpop.permute.xlu0 %737
          %v739 = vlaneseq
          %v740 = vshrl.u32 %v739, 7
          %v741 = vsub.s32 5, %v740
          %v742 = vrot.slane %v467, %v741
          %744 = vbcast.lane.b32.xlu0 %v742, 256
          %v745 = vpop.permute.xlu0 %744
          %v746 = vlaneseq
          %v747 = vshrl.u32 %v746, 7
          %v748 = vsub.s32 6, %v747
          %v749 = vrot.slane %v467, %v748
          %751 = vbcast.lane.b32.xlu0 %v749, 256
          %v752 = vpop.permute.xlu0 %751
          %v753 = vlaneseq
          %v754 = vshrl.u32 %v753, 7
          %v755 = vsub.s32 7, %v754
          %v756 = vrot.slane %v467, %v755
          %758 = vbcast.lane.b32.xlu0 %v756, 256
          %v759 = vpop.permute.xlu0 %758
          %v760 = vlaneseq
          %v761 = vshrl.u32 %v760, 7
          %v762 = vsub.s32 0, %v761
          %v763 = vrot.slane %v468, %v762
          %765 = vbcast.lane.b32.xlu0 %v763, 256
          %v766 = vpop.permute.xlu0 %765
          %v767 = vlaneseq
          %v768 = vshrl.u32 %v767, 7
          %v769 = vsub.s32 1, %v768
          %v770 = vrot.slane %v468, %v769
          %772 = vbcast.lane.b32.xlu0 %v770, 256
          %v773 = vpop.permute.xlu0 %772
          %v774 = vlaneseq
          %v775 = vshrl.u32 %v774, 7
          %v776 = vsub.s32 2, %v775
          %v777 = vrot.slane %v468, %v776
          %779 = vbcast.lane.b32.xlu0 %v777, 256
          %v780 = vpop.permute.xlu0 %779
          %v781 = vlaneseq
          %v782 = vshrl.u32 %v781, 7
          %v783 = vsub.s32 3, %v782
          %v784 = vrot.slane %v468, %v783
          %786 = vbcast.lane.b32.xlu0 %v784, 256
          %v787 = vpop.permute.xlu0 %786
          %v788 = vlaneseq
          %v789 = vshrl.u32 %v788, 7
          %v790 = vsub.s32 4, %v789
          %v791 = vrot.slane %v468, %v790
          %793 = vbcast.lane.b32.xlu0 %v791, 256
          %v794 = vpop.permute.xlu0 %793
          %v795 = vlaneseq
          %v796 = vshrl.u32 %v795, 7
          %v797 = vsub.s32 5, %v796
          %v798 = vrot.slane %v468, %v797
          %800 = vbcast.lane.b32.xlu0 %v798, 256
          %v801 = vpop.permute.xlu0 %800
          %v802 = vlaneseq
          %v803 = vshrl.u32 %v802, 7
          %v804 = vsub.s32 6, %v803
          %v805 = vrot.slane %v468, %v804
          %807 = vbcast.lane.b32.xlu0 %v805, 256
          %v808 = vpop.permute.xlu0 %807
          %v809 = vlaneseq
          %v810 = vshrl.u32 %v809, 7
          %v811 = vsub.s32 7, %v810
          %v812 = vrot.slane %v468, %v811
          %814 = vbcast.lane.b32.xlu0 %v812, 256
          %v815 = vpop.permute.xlu0 %814
          %v816 = vlaneseq
          %v817 = vshrl.u32 %v816, 7
          %v818 = vsub.s32 0, %v817
          %v819 = vrot.slane %v469, %v818
          %821 = vbcast.lane.b32.xlu0 %v819, 256
          %v822 = vpop.permute.xlu0 %821
          %v823 = vlaneseq
          %v824 = vshrl.u32 %v823, 7
          %v825 = vsub.s32 1, %v824
          %v826 = vrot.slane %v469, %v825
          %828 = vbcast.lane.b32.xlu0 %v826, 256
          %v829 = vpop.permute.xlu0 %828
          %v830 = vlaneseq
          %v831 = vshrl.u32 %v830, 7
          %v832 = vsub.s32 2, %v831
          %v833 = vrot.slane %v469, %v832
          %835 = vbcast.lane.b32.xlu0 %v833, 256
          %v836 = vpop.permute.xlu0 %835
          %v837 = vlaneseq
          %v838 = vshrl.u32 %v837, 7
          %v839 = vsub.s32 3, %v838
          %v840 = vrot.slane %v469, %v839
          %842 = vbcast.lane.b32.xlu0 %v840, 256
          %v843 = vpop.permute.xlu0 %842
          %v844 = vlaneseq
          %v845 = vshrl.u32 %v844, 7
          %v846 = vsub.s32 4, %v845
          %v847 = vrot.slane %v469, %v846
          %849 = vbcast.lane.b32.xlu0 %v847, 256
          %v850 = vpop.permute.xlu0 %849
          %v851 = vlaneseq
          %v852 = vshrl.u32 %v851, 7
          %v853 = vsub.s32 5, %v852
          %v854 = vrot.slane %v469, %v853
          %856 = vbcast.lane.b32.xlu0 %v854, 256
          %v857 = vpop.permute.xlu0 %856
          %v858 = vlaneseq
          %v859 = vshrl.u32 %v858, 7
          %v860 = vsub.s32 6, %v859
          %v861 = vrot.slane %v469, %v860
          %863 = vbcast.lane.b32.xlu0 %v861, 256
          %v864 = vpop.permute.xlu0 %863
          %v865 = vlaneseq
          %v866 = vshrl.u32 %v865, 7
          %v867 = vsub.s32 7, %v866
          %v868 = vrot.slane %v469, %v867
          %870 = vbcast.lane.b32.xlu0 %v868, 256
          %v871 = vpop.permute.xlu0 %870
          %v872 = vlaneseq
          %v873 = vshrl.u32 %v872, 7
          %v874 = vsub.s32 0, %v873
          %v875 = vrot.slane %v470, %v874
          %877 = vbcast.lane.b32.xlu0 %v875, 256
          %v878 = vpop.permute.xlu0 %877
          %v879 = vlaneseq
          %v880 = vshrl.u32 %v879, 7
          %v881 = vsub.s32 1, %v880
          %v882 = vrot.slane %v470, %v881
          %884 = vbcast.lane.b32.xlu0 %v882, 256
          %v885 = vpop.permute.xlu0 %884
          %v886 = vlaneseq
          %v887 = vshrl.u32 %v886, 7
          %v888 = vsub.s32 2, %v887
          %v889 = vrot.slane %v470, %v888
          %891 = vbcast.lane.b32.xlu0 %v889, 256
          %v892 = vpop.permute.xlu0 %891
          %v893 = vlaneseq
          %v894 = vshrl.u32 %v893, 7
          %v895 = vsub.s32 3, %v894
          %v896 = vrot.slane %v470, %v895
          %898 = vbcast.lane.b32.xlu0 %v896, 256
          %v899 = vpop.permute.xlu0 %898
          %v900 = vlaneseq
          %v901 = vshrl.u32 %v900, 7
          %v902 = vsub.s32 4, %v901
          %v903 = vrot.slane %v470, %v902
          %905 = vbcast.lane.b32.xlu0 %v903, 256
          %v906 = vpop.permute.xlu0 %905
          %v907 = vlaneseq
          %v908 = vshrl.u32 %v907, 7
          %v909 = vsub.s32 5, %v908
          %v910 = vrot.slane %v470, %v909
          %912 = vbcast.lane.b32.xlu0 %v910, 256
          %v913 = vpop.permute.xlu0 %912
          %v914 = vlaneseq
          %v915 = vshrl.u32 %v914, 7
          %v916 = vsub.s32 6, %v915
          %v917 = vrot.slane %v470, %v916
          %919 = vbcast.lane.b32.xlu0 %v917, 256
          %v920 = vpop.permute.xlu0 %919
          %v921 = vlaneseq
          %v922 = vshrl.u32 %v921, 7
          %v923 = vsub.s32 7, %v922
          %v924 = vrot.slane %v470, %v923
          %926 = vbcast.lane.b32.xlu0 %v924, 256
          %v927 = vpop.permute.xlu0 %926
          %v928 = vlaneseq
          %v929 = vshrl.u32 %v928, 7
          %v930 = vsub.s32 0, %v929
          %v931 = vrot.slane %v471, %v930
          %933 = vbcast.lane.b32.xlu0 %v931, 256
          %v934 = vpop.permute.xlu0 %933
          %v935 = vlaneseq
          %v936 = vshrl.u32 %v935, 7
          %v937 = vsub.s32 1, %v936
          %v938 = vrot.slane %v471, %v937
          %940 = vbcast.lane.b32.xlu0 %v938, 256
          %v941 = vpop.permute.xlu0 %940
          %v942 = vlaneseq
          %v943 = vshrl.u32 %v942, 7
          %v944 = vsub.s32 2, %v943
          %v945 = vrot.slane %v471, %v944
          %947 = vbcast.lane.b32.xlu0 %v945, 256
          %v948 = vpop.permute.xlu0 %947
          %v949 = vlaneseq
          %v950 = vshrl.u32 %v949, 7
          %v951 = vsub.s32 3, %v950
          %v952 = vrot.slane %v471, %v951
          %954 = vbcast.lane.b32.xlu0 %v952, 256
          %v955 = vpop.permute.xlu0 %954
          %v956 = vlaneseq
          %v957 = vshrl.u32 %v956, 7
          %v958 = vsub.s32 4, %v957
          %v959 = vrot.slane %v471, %v958
          %961 = vbcast.lane.b32.xlu0 %v959, 256
          %v962 = vpop.permute.xlu0 %961
          %v963 = vlaneseq
          %v964 = vshrl.u32 %v963, 7
          %v965 = vsub.s32 5, %v964
          %v966 = vrot.slane %v471, %v965
          %968 = vbcast.lane.b32.xlu0 %v966, 256
          %v969 = vpop.permute.xlu0 %968
          %v970 = vlaneseq
          %v971 = vshrl.u32 %v970, 7
          %v972 = vsub.s32 6, %v971
          %v973 = vrot.slane %v471, %v972
          %975 = vbcast.lane.b32.xlu0 %v973, 256
          %v976 = vpop.permute.xlu0 %975
          %v977 = vlaneseq
          %v978 = vshrl.u32 %v977, 7
          %v979 = vsub.s32 7, %v978
          %v980 = vrot.slane %v471, %v979
          %982 = vbcast.lane.b32.xlu0 %v980, 256
          %v983 = vpop.permute.xlu0 %982
          %v984 = vlaneseq
          %v985 = vshrl.u32 %v984, 7
          %v986 = vsub.s32 0, %v985
          %v987 = vrot.slane %v472, %v986
          %989 = vbcast.lane.b32.xlu0 %v987, 256
          %v990 = vpop.permute.xlu0 %989
          %v991 = vlaneseq
          %v992 = vshrl.u32 %v991, 7
          %v993 = vsub.s32 1, %v992
          %v994 = vrot.slane %v472, %v993
          %996 = vbcast.lane.b32.xlu0 %v994, 256
          %v997 = vpop.permute.xlu0 %996
          %v998 = vlaneseq
          %v999 = vshrl.u32 %v998, 7
          %v1000 = vsub.s32 2, %v999
          %v1001 = vrot.slane %v472, %v1000
          %1003 = vbcast.lane.b32.xlu0 %v1001, 256
          %v1004 = vpop.permute.xlu0 %1003
          %v1005 = vlaneseq
          %v1006 = vshrl.u32 %v1005, 7
          %v1007 = vsub.s32 3, %v1006
          %v1008 = vrot.slane %v472, %v1007
          %1010 = vbcast.lane.b32.xlu0 %v1008, 256
          %v1011 = vpop.permute.xlu0 %1010
          %v1012 = vlaneseq
          %v1013 = vshrl.u32 %v1012, 7
          %v1014 = vsub.s32 4, %v1013
          %v1015 = vrot.slane %v472, %v1014
          %1017 = vbcast.lane.b32.xlu0 %v1015, 256
          %v1018 = vpop.permute.xlu0 %1017
          %v1019 = vlaneseq
          %v1020 = vshrl.u32 %v1019, 7
          %v1021 = vsub.s32 5, %v1020
          %v1022 = vrot.slane %v472, %v1021
          %1024 = vbcast.lane.b32.xlu0 %v1022, 256
          %v1025 = vpop.permute.xlu0 %1024
          %v1026 = vlaneseq
          %v1027 = vshrl.u32 %v1026, 7
          %v1028 = vsub.s32 6, %v1027
          %v1029 = vrot.slane %v472, %v1028
          %1031 = vbcast.lane.b32.xlu0 %v1029, 256
          %v1032 = vpop.permute.xlu0 %1031
          %v1033 = vlaneseq
          %v1034 = vshrl.u32 %v1033, 7
          %v1035 = vsub.s32 7, %v1034
          %v1036 = vrot.slane %v472, %v1035
          %1038 = vbcast.lane.b32.xlu0 %v1036, 256
          %v1039 = vpop.permute.xlu0 %1038
          %v1040 = vlaneseq
          %v1041 = vshrl.u32 %v1040, 7
          %v1042 = vsub.s32 0, %v1041
          %v1043 = vrot.slane %v473, %v1042
          %1045 = vbcast.lane.b32.xlu0 %v1043, 256
          %v1046 = vpop.permute.xlu0 %1045
          %v1047 = vlaneseq
          %v1048 = vshrl.u32 %v1047, 7
          %v1049 = vsub.s32 1, %v1048
          %v1050 = vrot.slane %v473, %v1049
          %1052 = vbcast.lane.b32.xlu0 %v1050, 256
          %v1053 = vpop.permute.xlu0 %1052
          %v1054 = vlaneseq
          %v1055 = vshrl.u32 %v1054, 7
          %v1056 = vsub.s32 2, %v1055
          %v1057 = vrot.slane %v473, %v1056
          %1059 = vbcast.lane.b32.xlu0 %v1057, 256
          %v1060 = vpop.permute.xlu0 %1059
          %v1061 = vlaneseq
          %v1062 = vshrl.u32 %v1061, 7
          %v1063 = vsub.s32 3, %v1062
          %v1064 = vrot.slane %v473, %v1063
          %1066 = vbcast.lane.b32.xlu0 %v1064, 256
          %v1067 = vpop.permute.xlu0 %1066
          %v1068 = vlaneseq
          %v1069 = vshrl.u32 %v1068, 7
          %v1070 = vsub.s32 4, %v1069
          %v1071 = vrot.slane %v473, %v1070
          %1073 = vbcast.lane.b32.xlu0 %v1071, 256
          %v1074 = vpop.permute.xlu0 %1073
          %v1075 = vlaneseq
          %v1076 = vshrl.u32 %v1075, 7
          %v1077 = vsub.s32 5, %v1076
          %v1078 = vrot.slane %v473, %v1077
          %1080 = vbcast.lane.b32.xlu0 %v1078, 256
          %v1081 = vpop.permute.xlu0 %1080
          %v1082 = vlaneseq
          %v1083 = vshrl.u32 %v1082, 7
          %v1084 = vsub.s32 6, %v1083
          %v1085 = vrot.slane %v473, %v1084
          %1087 = vbcast.lane.b32.xlu0 %v1085, 256
          %v1088 = vpop.permute.xlu0 %1087
          %v1089 = vlaneseq
          %v1090 = vshrl.u32 %v1089, 7
          %v1091 = vsub.s32 7, %v1090
          %v1092 = vrot.slane %v473, %v1091
          %1094 = vbcast.lane.b32.xlu0 %v1092, 256
          %v1095 = vpop.permute.xlu0 %1094
          %v1096 = vlaneseq
          %v1097 = vshrl.u32 %v1096, 7
          %v1098 = vsub.s32 0, %v1097
          %v1099 = vrot.slane %v474, %v1098
          %1101 = vbcast.lane.b32.xlu0 %v1099, 256
          %v1102 = vpop.permute.xlu0 %1101
          %v1103 = vlaneseq
          %v1104 = vshrl.u32 %v1103, 7
          %v1105 = vsub.s32 1, %v1104
          %v1106 = vrot.slane %v474, %v1105
          %1108 = vbcast.lane.b32.xlu0 %v1106, 256
          %v1109 = vpop.permute.xlu0 %1108
          %v1110 = vlaneseq
          %v1111 = vshrl.u32 %v1110, 7
          %v1112 = vsub.s32 2, %v1111
          %v1113 = vrot.slane %v474, %v1112
          %1115 = vbcast.lane.b32.xlu0 %v1113, 256
          %v1116 = vpop.permute.xlu0 %1115
          %v1117 = vlaneseq
          %v1118 = vshrl.u32 %v1117, 7
          %v1119 = vsub.s32 3, %v1118
          %v1120 = vrot.slane %v474, %v1119
          %1122 = vbcast.lane.b32.xlu0 %v1120, 256
          %v1123 = vpop.permute.xlu0 %1122
          %v1124 = vlaneseq
          %v1125 = vshrl.u32 %v1124, 7
          %v1126 = vsub.s32 4, %v1125
          %v1127 = vrot.slane %v474, %v1126
          %1129 = vbcast.lane.b32.xlu0 %v1127, 256
          %v1130 = vpop.permute.xlu0 %1129
          %v1131 = vlaneseq
          %v1132 = vshrl.u32 %v1131, 7
          %v1133 = vsub.s32 5, %v1132
          %v1134 = vrot.slane %v474, %v1133
          %1136 = vbcast.lane.b32.xlu0 %v1134, 256
          %v1137 = vpop.permute.xlu0 %1136
          %v1138 = vlaneseq
          %v1139 = vshrl.u32 %v1138, 7
          %v1140 = vsub.s32 6, %v1139
          %v1141 = vrot.slane %v474, %v1140
          %1143 = vbcast.lane.b32.xlu0 %v1141, 256
          %v1144 = vpop.permute.xlu0 %1143
          %v1145 = vlaneseq
          %v1146 = vshrl.u32 %v1145, 7
          %v1147 = vsub.s32 7, %v1146
          %v1148 = vrot.slane %v474, %v1147
          %1150 = vbcast.lane.b32.xlu0 %v1148, 256
          %v1151 = vpop.permute.xlu0 %1150
          %v1152 = vlaneseq
          %v1153 = vshrl.u32 %v1152, 7
          %v1154 = vsub.s32 0, %v1153
          %v1155 = vrot.slane %v475, %v1154
          %1157 = vbcast.lane.b32.xlu0 %v1155, 256
          %v1158 = vpop.permute.xlu0 %1157
          %v1159 = vlaneseq
          %v1160 = vshrl.u32 %v1159, 7
          %v1161 = vsub.s32 1, %v1160
          %v1162 = vrot.slane %v475, %v1161
          %1164 = vbcast.lane.b32.xlu0 %v1162, 256
          %v1165 = vpop.permute.xlu0 %1164
          %v1166 = vlaneseq
          %v1167 = vshrl.u32 %v1166, 7
          %v1168 = vsub.s32 2, %v1167
          %v1169 = vrot.slane %v475, %v1168
          %1171 = vbcast.lane.b32.xlu0 %v1169, 256
          %v1172 = vpop.permute.xlu0 %1171
          %v1173 = vlaneseq
          %v1174 = vshrl.u32 %v1173, 7
          %v1175 = vsub.s32 3, %v1174
          %v1176 = vrot.slane %v475, %v1175
          %1178 = vbcast.lane.b32.xlu0 %v1176, 256
          %v1179 = vpop.permute.xlu0 %1178
          %v1180 = vlaneseq
          %v1181 = vshrl.u32 %v1180, 7
          %v1182 = vsub.s32 4, %v1181
          %v1183 = vrot.slane %v475, %v1182
          %1185 = vbcast.lane.b32.xlu0 %v1183, 256
          %v1186 = vpop.permute.xlu0 %1185
          %v1187 = vlaneseq
          %v1188 = vshrl.u32 %v1187, 7
          %v1189 = vsub.s32 5, %v1188
          %v1190 = vrot.slane %v475, %v1189
          %1192 = vbcast.lane.b32.xlu0 %v1190, 256
          %v1193 = vpop.permute.xlu0 %1192
          %v1194 = vlaneseq
          %v1195 = vshrl.u32 %v1194, 7
          %v1196 = vsub.s32 6, %v1195
          %v1197 = vrot.slane %v475, %v1196
          %1199 = vbcast.lane.b32.xlu0 %v1197, 256
          %v1200 = vpop.permute.xlu0 %1199
          %v1201 = vlaneseq
          %v1202 = vshrl.u32 %v1201, 7
          %v1203 = vsub.s32 7, %v1202
          %v1204 = vrot.slane %v475, %v1203
          %1206 = vbcast.lane.b32.xlu0 %v1204, 256
          %v1207 = vpop.permute.xlu0 %1206
          %v1208 = vlaneseq
          %v1209 = vshrl.u32 %v1208, 7
          %v1210 = vsub.s32 0, %v1209
          %v1211 = vrot.slane %v476, %v1210
          %1213 = vbcast.lane.b32.xlu0 %v1211, 256
          %v1214 = vpop.permute.xlu0 %1213
          %v1215 = vlaneseq
          %v1216 = vshrl.u32 %v1215, 7
          %v1217 = vsub.s32 1, %v1216
          %v1218 = vrot.slane %v476, %v1217
          %1220 = vbcast.lane.b32.xlu0 %v1218, 256
          %v1221 = vpop.permute.xlu0 %1220
          %v1222 = vlaneseq
          %v1223 = vshrl.u32 %v1222, 7
          %v1224 = vsub.s32 2, %v1223
          %v1225 = vrot.slane %v476, %v1224
          %1227 = vbcast.lane.b32.xlu0 %v1225, 256
          %v1228 = vpop.permute.xlu0 %1227
          %v1229 = vlaneseq
          %v1230 = vshrl.u32 %v1229, 7
          %v1231 = vsub.s32 3, %v1230
          %v1232 = vrot.slane %v476, %v1231
          %1234 = vbcast.lane.b32.xlu0 %v1232, 256
          %v1235 = vpop.permute.xlu0 %1234
          %v1236 = vlaneseq
          %v1237 = vshrl.u32 %v1236, 7
          %v1238 = vsub.s32 4, %v1237
          %v1239 = vrot.slane %v476, %v1238
          %1241 = vbcast.lane.b32.xlu0 %v1239, 256
          %v1242 = vpop.permute.xlu0 %1241
          %v1243 = vlaneseq
          %v1244 = vshrl.u32 %v1243, 7
          %v1245 = vsub.s32 5, %v1244
          %v1246 = vrot.slane %v476, %v1245
          %1248 = vbcast.lane.b32.xlu0 %v1246, 256
          %v1249 = vpop.permute.xlu0 %1248
          %v1250 = vlaneseq
          %v1251 = vshrl.u32 %v1250, 7
          %v1252 = vsub.s32 6, %v1251
          %v1253 = vrot.slane %v476, %v1252
          %1255 = vbcast.lane.b32.xlu0 %v1253, 256
          %v1256 = vpop.permute.xlu0 %1255
          %v1257 = vlaneseq
          %v1258 = vshrl.u32 %v1257, 7
          %v1259 = vsub.s32 7, %v1258
          %v1260 = vrot.slane %v476, %v1259
          %1262 = vbcast.lane.b32.xlu0 %v1260, 256
          %v1263 = vpop.permute.xlu0 %1262
          %v1264 = vlaneseq
          %v1265 = vshrl.u32 %v1264, 7
          %v1266 = vsub.s32 0, %v1265
          %v1267 = vrot.slane %v477, %v1266
          %1269 = vbcast.lane.b32.xlu0 %v1267, 256
          %v1270 = vpop.permute.xlu0 %1269
          %v1271 = vlaneseq
          %v1272 = vshrl.u32 %v1271, 7
          %v1273 = vsub.s32 1, %v1272
          %v1274 = vrot.slane %v477, %v1273
          %1276 = vbcast.lane.b32.xlu0 %v1274, 256
          %v1277 = vpop.permute.xlu0 %1276
          %v1278 = vlaneseq
          %v1279 = vshrl.u32 %v1278, 7
          %v1280 = vsub.s32 2, %v1279
          %v1281 = vrot.slane %v477, %v1280
          %1283 = vbcast.lane.b32.xlu0 %v1281, 256
          %v1284 = vpop.permute.xlu0 %1283
          %v1285 = vlaneseq
          %v1286 = vshrl.u32 %v1285, 7
          %v1287 = vsub.s32 3, %v1286
          %v1288 = vrot.slane %v477, %v1287
          %1290 = vbcast.lane.b32.xlu0 %v1288, 256
          %v1291 = vpop.permute.xlu0 %1290
          %v1292 = vlaneseq
          %v1293 = vshrl.u32 %v1292, 7
          %v1294 = vsub.s32 4, %v1293
          %v1295 = vrot.slane %v477, %v1294
          %1297 = vbcast.lane.b32.xlu0 %v1295, 256
          %v1298 = vpop.permute.xlu0 %1297
          %v1299 = vlaneseq
          %v1300 = vshrl.u32 %v1299, 7
          %v1301 = vsub.s32 5, %v1300
          %v1302 = vrot.slane %v477, %v1301
          %1304 = vbcast.lane.b32.xlu0 %v1302, 256
          %v1305 = vpop.permute.xlu0 %1304
          %v1306 = vlaneseq
          %v1307 = vshrl.u32 %v1306, 7
          %v1308 = vsub.s32 6, %v1307
          %v1309 = vrot.slane %v477, %v1308
          %1311 = vbcast.lane.b32.xlu0 %v1309, 256
          %v1312 = vpop.permute.xlu0 %1311
          %v1313 = vlaneseq
          %v1314 = vshrl.u32 %v1313, 7
          %v1315 = vsub.s32 7, %v1314
          %v1316 = vrot.slane %v477, %v1315
          %1318 = vbcast.lane.b32.xlu0 %v1316, 256
          %v1319 = vpop.permute.xlu0 %1318
          %v1320 = vlaneseq
          %v1321 = vshrl.u32 %v1320, 7
          %v1322 = vsub.s32 0, %v1321
          %v1323 = vrot.slane %v478, %v1322
          %1325 = vbcast.lane.b32.xlu0 %v1323, 256
          %v1326 = vpop.permute.xlu0 %1325
          %v1327 = vlaneseq
          %v1328 = vshrl.u32 %v1327, 7
          %v1329 = vsub.s32 1, %v1328
          %v1330 = vrot.slane %v478, %v1329
          %1332 = vbcast.lane.b32.xlu0 %v1330, 256
          %v1333 = vpop.permute.xlu0 %1332
          %v1334 = vlaneseq
          %v1335 = vshrl.u32 %v1334, 7
          %v1336 = vsub.s32 2, %v1335
          %v1337 = vrot.slane %v478, %v1336
          %1339 = vbcast.lane.b32.xlu0 %v1337, 256
          %v1340 = vpop.permute.xlu0 %1339
          %v1341 = vlaneseq
          %v1342 = vshrl.u32 %v1341, 7
          %v1343 = vsub.s32 3, %v1342
          %v1344 = vrot.slane %v478, %v1343
          %1346 = vbcast.lane.b32.xlu0 %v1344, 256
          %v1347 = vpop.permute.xlu0 %1346
          %v1348 = vlaneseq
          %v1349 = vshrl.u32 %v1348, 7
          %v1350 = vsub.s32 4, %v1349
          %v1351 = vrot.slane %v478, %v1350
          %1353 = vbcast.lane.b32.xlu0 %v1351, 256
          %v1354 = vpop.permute.xlu0 %1353
          %v1355 = vlaneseq
          %v1356 = vshrl.u32 %v1355, 7
          %v1357 = vsub.s32 5, %v1356
          %v1358 = vrot.slane %v478, %v1357
          %1360 = vbcast.lane.b32.xlu0 %v1358, 256
          %v1361 = vpop.permute.xlu0 %1360
          %v1362 = vlaneseq
          %v1363 = vshrl.u32 %v1362, 7
          %v1364 = vsub.s32 6, %v1363
          %v1365 = vrot.slane %v478, %v1364
          %1367 = vbcast.lane.b32.xlu0 %v1365, 256
          %v1368 = vpop.permute.xlu0 %1367
          %v1369 = vlaneseq
          %v1370 = vshrl.u32 %v1369, 7
          %v1371 = vsub.s32 7, %v1370
          %v1372 = vrot.slane %v478, %v1371
          %1374 = vbcast.lane.b32.xlu0 %v1372, 256
          %v1375 = vpop.permute.xlu0 %1374
          %v1376 = vlaneseq
          %v1377 = vshrl.u32 %v1376, 7
          %v1378 = vsub.s32 0, %v1377
          %v1379 = vrot.slane %v431, %v1378
          %1381 = vbcast.lane.b32.xlu0 %v1379, 256
          %v1382 = vpop.permute.xlu0 %1381
          %v1383 = vlaneseq
          %v1384 = vshrl.u32 %v1383, 7
          %v1385 = vsub.s32 1, %v1384
          %v1386 = vrot.slane %v431, %v1385
          %1388 = vbcast.lane.b32.xlu0 %v1386, 256
          %v1389 = vpop.permute.xlu0 %1388
          %v1390 = vlaneseq
          %v1391 = vshrl.u32 %v1390, 7
          %v1392 = vsub.s32 2, %v1391
          %v1393 = vrot.slane %v431, %v1392
          %1395 = vbcast.lane.b32.xlu0 %v1393, 256
          %v1396 = vpop.permute.xlu0 %1395
          %v1397 = vlaneseq
          %v1398 = vshrl.u32 %v1397, 7
          %v1399 = vsub.s32 3, %v1398
          %v1400 = vrot.slane %v431, %v1399
          %1402 = vbcast.lane.b32.xlu0 %v1400, 256
          %v1403 = vpop.permute.xlu0 %1402
          %v1404 = vlaneseq
          %v1405 = vshrl.u32 %v1404, 7
          %v1406 = vsub.s32 4, %v1405
          %v1407 = vrot.slane %v431, %v1406
          %1409 = vbcast.lane.b32.xlu0 %v1407, 256
          %v1410 = vpop.permute.xlu0 %1409
          %v1411 = vlaneseq
          %v1412 = vshrl.u32 %v1411, 7
          %v1413 = vsub.s32 5, %v1412
          %v1414 = vrot.slane %v431, %v1413
          %1416 = vbcast.lane.b32.xlu0 %v1414, 256
          %v1417 = vpop.permute.xlu0 %1416
          %v1418 = vlaneseq
          %v1419 = vshrl.u32 %v1418, 7
          %v1420 = vsub.s32 6, %v1419
          %v1421 = vrot.slane %v431, %v1420
          %1423 = vbcast.lane.b32.xlu0 %v1421, 256
          %v1424 = vpop.permute.xlu0 %1423
          %v1425 = vlaneseq
          %v1426 = vshrl.u32 %v1425, 7
          %v1427 = vsub.s32 7, %v1426
          %v1428 = vrot.slane %v431, %v1427
          %1430 = vbcast.lane.b32.xlu0 %v1428, 256
          %v1431 = vpop.permute.xlu0 %1430
          %v1432 = vlaneseq
          %v1433 = vshrl.u32 %v1432, 7
          %v1434 = vsub.s32 0, %v1433
          %v1435 = vrot.slane %v432, %v1434
          %1437 = vbcast.lane.b32.xlu0 %v1435, 256
          %v1438 = vpop.permute.xlu0 %1437
          %v1439 = vlaneseq
          %v1440 = vshrl.u32 %v1439, 7
          %v1441 = vsub.s32 1, %v1440
          %v1442 = vrot.slane %v432, %v1441
          %1444 = vbcast.lane.b32.xlu0 %v1442, 256
          %v1445 = vpop.permute.xlu0 %1444
          %v1446 = vlaneseq
          %v1447 = vshrl.u32 %v1446, 7
          %v1448 = vsub.s32 2, %v1447
          %v1449 = vrot.slane %v432, %v1448
          %1451 = vbcast.lane.b32.xlu0 %v1449, 256
          %v1452 = vpop.permute.xlu0 %1451
          %v1453 = vlaneseq
          %v1454 = vshrl.u32 %v1453, 7
          %v1455 = vsub.s32 3, %v1454
          %v1456 = vrot.slane %v432, %v1455
          %1458 = vbcast.lane.b32.xlu0 %v1456, 256
          %v1459 = vpop.permute.xlu0 %1458
          %v1460 = vlaneseq
          %v1461 = vshrl.u32 %v1460, 7
          %v1462 = vsub.s32 4, %v1461
          %v1463 = vrot.slane %v432, %v1462
          %1465 = vbcast.lane.b32.xlu0 %v1463, 256
          %v1466 = vpop.permute.xlu0 %1465
          %v1467 = vlaneseq
          %v1468 = vshrl.u32 %v1467, 7
          %v1469 = vsub.s32 5, %v1468
          %v1470 = vrot.slane %v432, %v1469
          %1472 = vbcast.lane.b32.xlu0 %v1470, 256
          %v1473 = vpop.permute.xlu0 %1472
          %v1474 = vlaneseq
          %v1475 = vshrl.u32 %v1474, 7
          %v1476 = vsub.s32 6, %v1475
          %v1477 = vrot.slane %v432, %v1476
          %1479 = vbcast.lane.b32.xlu0 %v1477, 256
          %v1480 = vpop.permute.xlu0 %1479
          %v1481 = vlaneseq
          %v1482 = vshrl.u32 %v1481, 7
          %v1483 = vsub.s32 7, %v1482
          %v1484 = vrot.slane %v432, %v1483
          %1486 = vbcast.lane.b32.xlu0 %v1484, 256
          %v1487 = vpop.permute.xlu0 %1486
          %v1488 = vlaneseq
          %v1489 = vshrl.u32 %v1488, 7
          %v1490 = vsub.s32 0, %v1489
          %v1491 = vrot.slane %v433, %v1490
          %1493 = vbcast.lane.b32.xlu0 %v1491, 256
          %v1494 = vpop.permute.xlu0 %1493
          %v1495 = vlaneseq
          %v1496 = vshrl.u32 %v1495, 7
          %v1497 = vsub.s32 1, %v1496
          %v1498 = vrot.slane %v433, %v1497
          %1500 = vbcast.lane.b32.xlu0 %v1498, 256
          %v1501 = vpop.permute.xlu0 %1500
          %v1502 = vlaneseq
          %v1503 = vshrl.u32 %v1502, 7
          %v1504 = vsub.s32 2, %v1503
          %v1505 = vrot.slane %v433, %v1504
          %1507 = vbcast.lane.b32.xlu0 %v1505, 256
          %v1508 = vpop.permute.xlu0 %1507
          %v1509 = vlaneseq
          %v1510 = vshrl.u32 %v1509, 7
          %v1511 = vsub.s32 3, %v1510
          %v1512 = vrot.slane %v433, %v1511
          %1514 = vbcast.lane.b32.xlu0 %v1512, 256
          %v1515 = vpop.permute.xlu0 %1514
          %v1516 = vlaneseq
          %v1517 = vshrl.u32 %v1516, 7
          %v1518 = vsub.s32 4, %v1517
          %v1519 = vrot.slane %v433, %v1518
          %1521 = vbcast.lane.b32.xlu0 %v1519, 256
          %v1522 = vpop.permute.xlu0 %1521
          %v1523 = vlaneseq
          %v1524 = vshrl.u32 %v1523, 7
          %v1525 = vsub.s32 5, %v1524
          %v1526 = vrot.slane %v433, %v1525
          %1528 = vbcast.lane.b32.xlu0 %v1526, 256
          %v1529 = vpop.permute.xlu0 %1528
          %v1530 = vlaneseq
          %v1531 = vshrl.u32 %v1530, 7
          %v1532 = vsub.s32 6, %v1531
          %v1533 = vrot.slane %v433, %v1532
          %1535 = vbcast.lane.b32.xlu0 %v1533, 256
          %v1536 = vpop.permute.xlu0 %1535
          %v1537 = vlaneseq
          %v1538 = vshrl.u32 %v1537, 7
          %v1539 = vsub.s32 7, %v1538
          %v1540 = vrot.slane %v433, %v1539
          %1542 = vbcast.lane.b32.xlu0 %v1540, 256
          %v1543 = vpop.permute.xlu0 %1542
          %v1544 = vlaneseq
          %v1545 = vshrl.u32 %v1544, 7
          %v1546 = vsub.s32 0, %v1545
          %v1547 = vrot.slane %v434, %v1546
          %1549 = vbcast.lane.b32.xlu0 %v1547, 256
          %v1550 = vpop.permute.xlu0 %1549
          %v1551 = vlaneseq
          %v1552 = vshrl.u32 %v1551, 7
          %v1553 = vsub.s32 1, %v1552
          %v1554 = vrot.slane %v434, %v1553
          %1556 = vbcast.lane.b32.xlu0 %v1554, 256
          %v1557 = vpop.permute.xlu0 %1556
          %v1558 = vlaneseq
          %v1559 = vshrl.u32 %v1558, 7
          %v1560 = vsub.s32 2, %v1559
          %v1561 = vrot.slane %v434, %v1560
          %1563 = vbcast.lane.b32.xlu0 %v1561, 256
          %v1564 = vpop.permute.xlu0 %1563
          %v1565 = vlaneseq
          %v1566 = vshrl.u32 %v1565, 7
          %v1567 = vsub.s32 3, %v1566
          %v1568 = vrot.slane %v434, %v1567
          %1570 = vbcast.lane.b32.xlu0 %v1568, 256
          %v1571 = vpop.permute.xlu0 %1570
          %v1572 = vlaneseq
          %v1573 = vshrl.u32 %v1572, 7
          %v1574 = vsub.s32 4, %v1573
          %v1575 = vrot.slane %v434, %v1574
          %1577 = vbcast.lane.b32.xlu0 %v1575, 256
          %v1578 = vpop.permute.xlu0 %1577
          %v1579 = vlaneseq
          %v1580 = vshrl.u32 %v1579, 7
          %v1581 = vsub.s32 5, %v1580
          %v1582 = vrot.slane %v434, %v1581
          %1584 = vbcast.lane.b32.xlu0 %v1582, 256
          %v1585 = vpop.permute.xlu0 %1584
          %v1586 = vlaneseq
          %v1587 = vshrl.u32 %v1586, 7
          %v1588 = vsub.s32 6, %v1587
          %v1589 = vrot.slane %v434, %v1588
          %1591 = vbcast.lane.b32.xlu0 %v1589, 256
          %v1592 = vpop.permute.xlu0 %1591
          %v1593 = vlaneseq
          %v1594 = vshrl.u32 %v1593, 7
          %v1595 = vsub.s32 7, %v1594
          %v1596 = vrot.slane %v434, %v1595
          %1598 = vbcast.lane.b32.xlu0 %v1596, 256
          %v1599 = vpop.permute.xlu0 %1598
          %v1600 = vlaneseq
          %v1601 = vshrl.u32 %v1600, 7
          %v1602 = vsub.s32 0, %v1601
          %v1603 = vrot.slane %v435, %v1602
          %1605 = vbcast.lane.b32.xlu0 %v1603, 256
          %v1606 = vpop.permute.xlu0 %1605
          %v1607 = vlaneseq
          %v1608 = vshrl.u32 %v1607, 7
          %v1609 = vsub.s32 1, %v1608
          %v1610 = vrot.slane %v435, %v1609
          %1612 = vbcast.lane.b32.xlu0 %v1610, 256
          %v1613 = vpop.permute.xlu0 %1612
          %v1614 = vlaneseq
          %v1615 = vshrl.u32 %v1614, 7
          %v1616 = vsub.s32 2, %v1615
          %v1617 = vrot.slane %v435, %v1616
          %1619 = vbcast.lane.b32.xlu0 %v1617, 256
          %v1620 = vpop.permute.xlu0 %1619
          %v1621 = vlaneseq
          %v1622 = vshrl.u32 %v1621, 7
          %v1623 = vsub.s32 3, %v1622
          %v1624 = vrot.slane %v435, %v1623
          %1626 = vbcast.lane.b32.xlu0 %v1624, 256
          %v1627 = vpop.permute.xlu0 %1626
          %v1628 = vlaneseq
          %v1629 = vshrl.u32 %v1628, 7
          %v1630 = vsub.s32 4, %v1629
          %v1631 = vrot.slane %v435, %v1630
          %1633 = vbcast.lane.b32.xlu0 %v1631, 256
          %v1634 = vpop.permute.xlu0 %1633
          %v1635 = vlaneseq
          %v1636 = vshrl.u32 %v1635, 7
          %v1637 = vsub.s32 5, %v1636
          %v1638 = vrot.slane %v435, %v1637
          %1640 = vbcast.lane.b32.xlu0 %v1638, 256
          %v1641 = vpop.permute.xlu0 %1640
          %v1642 = vlaneseq
          %v1643 = vshrl.u32 %v1642, 7
          %v1644 = vsub.s32 6, %v1643
          %v1645 = vrot.slane %v435, %v1644
          %1647 = vbcast.lane.b32.xlu0 %v1645, 256
          %v1648 = vpop.permute.xlu0 %1647
          %v1649 = vlaneseq
          %v1650 = vshrl.u32 %v1649, 7
          %v1651 = vsub.s32 7, %v1650
          %v1652 = vrot.slane %v435, %v1651
          %1654 = vbcast.lane.b32.xlu0 %v1652, 256
          %v1655 = vpop.permute.xlu0 %1654
          %v1656 = vlaneseq
          %v1657 = vshrl.u32 %v1656, 7
          %v1658 = vsub.s32 0, %v1657
          %v1659 = vrot.slane %v436, %v1658
          %1661 = vbcast.lane.b32.xlu0 %v1659, 256
          %v1662 = vpop.permute.xlu0 %1661
          %v1663 = vlaneseq
          %v1664 = vshrl.u32 %v1663, 7
          %v1665 = vsub.s32 1, %v1664
          %v1666 = vrot.slane %v436, %v1665
          %1668 = vbcast.lane.b32.xlu0 %v1666, 256
          %v1669 = vpop.permute.xlu0 %1668
          %v1670 = vlaneseq
          %v1671 = vshrl.u32 %v1670, 7
          %v1672 = vsub.s32 2, %v1671
          %v1673 = vrot.slane %v436, %v1672
          %1675 = vbcast.lane.b32.xlu0 %v1673, 256
          %v1676 = vpop.permute.xlu0 %1675
          %v1677 = vlaneseq
          %v1678 = vshrl.u32 %v1677, 7
          %v1679 = vsub.s32 3, %v1678
          %v1680 = vrot.slane %v436, %v1679
          %1682 = vbcast.lane.b32.xlu0 %v1680, 256
          %v1683 = vpop.permute.xlu0 %1682
          %v1684 = vlaneseq
          %v1685 = vshrl.u32 %v1684, 7
          %v1686 = vsub.s32 4, %v1685
          %v1687 = vrot.slane %v436, %v1686
          %1689 = vbcast.lane.b32.xlu0 %v1687, 256
          %v1690 = vpop.permute.xlu0 %1689
          %v1691 = vlaneseq
          %v1692 = vshrl.u32 %v1691, 7
          %v1693 = vsub.s32 5, %v1692
          %v1694 = vrot.slane %v436, %v1693
          %1696 = vbcast.lane.b32.xlu0 %v1694, 256
          %v1697 = vpop.permute.xlu0 %1696
          %v1698 = vlaneseq
          %v1699 = vshrl.u32 %v1698, 7
          %v1700 = vsub.s32 6, %v1699
          %v1701 = vrot.slane %v436, %v1700
          %1703 = vbcast.lane.b32.xlu0 %v1701, 256
          %v1704 = vpop.permute.xlu0 %1703
          %v1705 = vlaneseq
          %v1706 = vshrl.u32 %v1705, 7
          %v1707 = vsub.s32 7, %v1706
          %v1708 = vrot.slane %v436, %v1707
          %1710 = vbcast.lane.b32.xlu0 %v1708, 256
          %v1711 = vpop.permute.xlu0 %1710
          %v1712 = vlaneseq
          %v1713 = vshrl.u32 %v1712, 7
          %v1714 = vsub.s32 0, %v1713
          %v1715 = vrot.slane %v437, %v1714
          %1717 = vbcast.lane.b32.xlu0 %v1715, 256
          %v1718 = vpop.permute.xlu0 %1717
          %v1719 = vlaneseq
          %v1720 = vshrl.u32 %v1719, 7
          %v1721 = vsub.s32 1, %v1720
          %v1722 = vrot.slane %v437, %v1721
          %1724 = vbcast.lane.b32.xlu0 %v1722, 256
          %v1725 = vpop.permute.xlu0 %1724
          %v1726 = vlaneseq
          %v1727 = vshrl.u32 %v1726, 7
          %v1728 = vsub.s32 2, %v1727
          %v1729 = vrot.slane %v437, %v1728
          %1731 = vbcast.lane.b32.xlu0 %v1729, 256
          %v1732 = vpop.permute.xlu0 %1731
          %v1733 = vlaneseq
          %v1734 = vshrl.u32 %v1733, 7
          %v1735 = vsub.s32 3, %v1734
          %v1736 = vrot.slane %v437, %v1735
          %1738 = vbcast.lane.b32.xlu0 %v1736, 256
          %v1739 = vpop.permute.xlu0 %1738
          %v1740 = vlaneseq
          %v1741 = vshrl.u32 %v1740, 7
          %v1742 = vsub.s32 4, %v1741
          %v1743 = vrot.slane %v437, %v1742
          %1745 = vbcast.lane.b32.xlu0 %v1743, 256
          %v1746 = vpop.permute.xlu0 %1745
          %v1747 = vlaneseq
          %v1748 = vshrl.u32 %v1747, 7
          %v1749 = vsub.s32 5, %v1748
          %v1750 = vrot.slane %v437, %v1749
          %1752 = vbcast.lane.b32.xlu0 %v1750, 256
          %v1753 = vpop.permute.xlu0 %1752
          %v1754 = vlaneseq
          %v1755 = vshrl.u32 %v1754, 7
          %v1756 = vsub.s32 6, %v1755
          %v1757 = vrot.slane %v437, %v1756
          %1759 = vbcast.lane.b32.xlu0 %v1757, 256
          %v1760 = vpop.permute.xlu0 %1759
          %v1761 = vlaneseq
          %v1762 = vshrl.u32 %v1761, 7
          %v1763 = vsub.s32 7, %v1762
          %v1764 = vrot.slane %v437, %v1763
          %1766 = vbcast.lane.b32.xlu0 %v1764, 256
          %v1767 = vpop.permute.xlu0 %1766
          %v1768 = vlaneseq
          %v1769 = vshrl.u32 %v1768, 7
          %v1770 = vsub.s32 0, %v1769
          %v1771 = vrot.slane %v438, %v1770
          %1773 = vbcast.lane.b32.xlu0 %v1771, 256
          %v1774 = vpop.permute.xlu0 %1773
          %v1775 = vlaneseq
          %v1776 = vshrl.u32 %v1775, 7
          %v1777 = vsub.s32 1, %v1776
          %v1778 = vrot.slane %v438, %v1777
          %1780 = vbcast.lane.b32.xlu0 %v1778, 256
          %v1781 = vpop.permute.xlu0 %1780
          %v1782 = vlaneseq
          %v1783 = vshrl.u32 %v1782, 7
          %v1784 = vsub.s32 2, %v1783
          %v1785 = vrot.slane %v438, %v1784
          %1787 = vbcast.lane.b32.xlu0 %v1785, 256
          %v1788 = vpop.permute.xlu0 %1787
          %v1789 = vlaneseq
          %v1790 = vshrl.u32 %v1789, 7
          %v1791 = vsub.s32 3, %v1790
          %v1792 = vrot.slane %v438, %v1791
          %1794 = vbcast.lane.b32.xlu0 %v1792, 256
          %v1795 = vpop.permute.xlu0 %1794
          %v1796 = vlaneseq
          %v1797 = vshrl.u32 %v1796, 7
          %v1798 = vsub.s32 4, %v1797
          %v1799 = vrot.slane %v438, %v1798
          %1801 = vbcast.lane.b32.xlu0 %v1799, 256
          %v1802 = vpop.permute.xlu0 %1801
          %v1803 = vlaneseq
          %v1804 = vshrl.u32 %v1803, 7
          %v1805 = vsub.s32 5, %v1804
          %v1806 = vrot.slane %v438, %v1805
          %1808 = vbcast.lane.b32.xlu0 %v1806, 256
          %v1809 = vpop.permute.xlu0 %1808
          %v1810 = vlaneseq
          %v1811 = vshrl.u32 %v1810, 7
          %v1812 = vsub.s32 6, %v1811
          %v1813 = vrot.slane %v438, %v1812
          %1815 = vbcast.lane.b32.xlu0 %v1813, 256
          %v1816 = vpop.permute.xlu0 %1815
          %v1817 = vlaneseq
          %v1818 = vshrl.u32 %v1817, 7
          %v1819 = vsub.s32 7, %v1818
          %v1820 = vrot.slane %v438, %v1819
          %1822 = vbcast.lane.b32.xlu0 %v1820, 256
          %v1823 = vpop.permute.xlu0 %1822
          %v1824 = vlaneseq
          %v1825 = vshrl.u32 %v1824, 7
          %v1826 = vsub.s32 0, %v1825
          %v1827 = vrot.slane %v439, %v1826
          %1829 = vbcast.lane.b32.xlu0 %v1827, 256
          %v1830 = vpop.permute.xlu0 %1829
          %v1831 = vlaneseq
          %v1832 = vshrl.u32 %v1831, 7
          %v1833 = vsub.s32 1, %v1832
          %v1834 = vrot.slane %v439, %v1833
          %1836 = vbcast.lane.b32.xlu0 %v1834, 256
          %v1837 = vpop.permute.xlu0 %1836
          %v1838 = vlaneseq
          %v1839 = vshrl.u32 %v1838, 7
          %v1840 = vsub.s32 2, %v1839
          %v1841 = vrot.slane %v439, %v1840
          %1843 = vbcast.lane.b32.xlu0 %v1841, 256
          %v1844 = vpop.permute.xlu0 %1843
          %v1845 = vlaneseq
          %v1846 = vshrl.u32 %v1845, 7
          %v1847 = vsub.s32 3, %v1846
          %v1848 = vrot.slane %v439, %v1847
          %1850 = vbcast.lane.b32.xlu0 %v1848, 256
          %v1851 = vpop.permute.xlu0 %1850
          %v1852 = vlaneseq
          %v1853 = vshrl.u32 %v1852, 7
          %v1854 = vsub.s32 4, %v1853
          %v1855 = vrot.slane %v439, %v1854
          %1857 = vbcast.lane.b32.xlu0 %v1855, 256
          %v1858 = vpop.permute.xlu0 %1857
          %v1859 = vlaneseq
          %v1860 = vshrl.u32 %v1859, 7
          %v1861 = vsub.s32 5, %v1860
          %v1862 = vrot.slane %v439, %v1861
          %1864 = vbcast.lane.b32.xlu0 %v1862, 256
          %v1865 = vpop.permute.xlu0 %1864
          %v1866 = vlaneseq
          %v1867 = vshrl.u32 %v1866, 7
          %v1868 = vsub.s32 6, %v1867
          %v1869 = vrot.slane %v439, %v1868
          %1871 = vbcast.lane.b32.xlu0 %v1869, 256
          %v1872 = vpop.permute.xlu0 %1871
          %v1873 = vlaneseq
          %v1874 = vshrl.u32 %v1873, 7
          %v1875 = vsub.s32 7, %v1874
          %v1876 = vrot.slane %v439, %v1875
          %1878 = vbcast.lane.b32.xlu0 %v1876, 256
          %v1879 = vpop.permute.xlu0 %1878
          %v1880 = vlaneseq
          %v1881 = vshrl.u32 %v1880, 7
          %v1882 = vsub.s32 0, %v1881
          %v1883 = vrot.slane %v440, %v1882
          %1885 = vbcast.lane.b32.xlu0 %v1883, 256
          %v1886 = vpop.permute.xlu0 %1885
          %v1887 = vlaneseq
          %v1888 = vshrl.u32 %v1887, 7
          %v1889 = vsub.s32 1, %v1888
          %v1890 = vrot.slane %v440, %v1889
          %1892 = vbcast.lane.b32.xlu0 %v1890, 256
          %v1893 = vpop.permute.xlu0 %1892
          %v1894 = vlaneseq
          %v1895 = vshrl.u32 %v1894, 7
          %v1896 = vsub.s32 2, %v1895
          %v1897 = vrot.slane %v440, %v1896
          %1899 = vbcast.lane.b32.xlu0 %v1897, 256
          %v1900 = vpop.permute.xlu0 %1899
          %v1901 = vlaneseq
          %v1902 = vshrl.u32 %v1901, 7
          %v1903 = vsub.s32 3, %v1902
          %v1904 = vrot.slane %v440, %v1903
          %1906 = vbcast.lane.b32.xlu0 %v1904, 256
          %v1907 = vpop.permute.xlu0 %1906
          %v1908 = vlaneseq
          %v1909 = vshrl.u32 %v1908, 7
          %v1910 = vsub.s32 4, %v1909
          %v1911 = vrot.slane %v440, %v1910
          %1913 = vbcast.lane.b32.xlu0 %v1911, 256
          %v1914 = vpop.permute.xlu0 %1913
          %v1915 = vlaneseq
          %v1916 = vshrl.u32 %v1915, 7
          %v1917 = vsub.s32 5, %v1916
          %v1918 = vrot.slane %v440, %v1917
          %1920 = vbcast.lane.b32.xlu0 %v1918, 256
          %v1921 = vpop.permute.xlu0 %1920
          %v1922 = vlaneseq
          %v1923 = vshrl.u32 %v1922, 7
          %v1924 = vsub.s32 6, %v1923
          %v1925 = vrot.slane %v440, %v1924
          %1927 = vbcast.lane.b32.xlu0 %v1925, 256
          %v1928 = vpop.permute.xlu0 %1927
          %v1929 = vlaneseq
          %v1930 = vshrl.u32 %v1929, 7
          %v1931 = vsub.s32 7, %v1930
          %v1932 = vrot.slane %v440, %v1931
          %1934 = vbcast.lane.b32.xlu0 %v1932, 256
          %v1935 = vpop.permute.xlu0 %1934
          %v1936 = vlaneseq
          %v1937 = vshrl.u32 %v1936, 7
          %v1938 = vsub.s32 0, %v1937
          %v1939 = vrot.slane %v441, %v1938
          %1941 = vbcast.lane.b32.xlu0 %v1939, 256
          %v1942 = vpop.permute.xlu0 %1941
          %v1943 = vlaneseq
          %v1944 = vshrl.u32 %v1943, 7
          %v1945 = vsub.s32 1, %v1944
          %v1946 = vrot.slane %v441, %v1945
          %1948 = vbcast.lane.b32.xlu0 %v1946, 256
          %v1949 = vpop.permute.xlu0 %1948
          %v1950 = vlaneseq
          %v1951 = vshrl.u32 %v1950, 7
          %v1952 = vsub.s32 2, %v1951
          %v1953 = vrot.slane %v441, %v1952
          %1955 = vbcast.lane.b32.xlu0 %v1953, 256
          %v1956 = vpop.permute.xlu0 %1955
          %v1957 = vlaneseq
          %v1958 = vshrl.u32 %v1957, 7
          %v1959 = vsub.s32 3, %v1958
          %v1960 = vrot.slane %v441, %v1959
          %1962 = vbcast.lane.b32.xlu0 %v1960, 256
          %v1963 = vpop.permute.xlu0 %1962
          %v1964 = vlaneseq
          %v1965 = vshrl.u32 %v1964, 7
          %v1966 = vsub.s32 4, %v1965
          %v1967 = vrot.slane %v441, %v1966
          %1969 = vbcast.lane.b32.xlu0 %v1967, 256
          %v1970 = vpop.permute.xlu0 %1969
          %v1971 = vlaneseq
          %v1972 = vshrl.u32 %v1971, 7
          %v1973 = vsub.s32 5, %v1972
          %v1974 = vrot.slane %v441, %v1973
          %1976 = vbcast.lane.b32.xlu0 %v1974, 256
          %v1977 = vpop.permute.xlu0 %1976
          %v1978 = vlaneseq
          %v1979 = vshrl.u32 %v1978, 7
          %v1980 = vsub.s32 6, %v1979
          %v1981 = vrot.slane %v441, %v1980
          %1983 = vbcast.lane.b32.xlu0 %v1981, 256
          %v1984 = vpop.permute.xlu0 %1983
          %v1985 = vlaneseq
          %v1986 = vshrl.u32 %v1985, 7
          %v1987 = vsub.s32 7, %v1986
          %v1988 = vrot.slane %v441, %v1987
          %1990 = vbcast.lane.b32.xlu0 %v1988, 256
          %v1991 = vpop.permute.xlu0 %1990
          %v1992 = vlaneseq
          %v1993 = vshrl.u32 %v1992, 7
          %v1994 = vsub.s32 0, %v1993
          %v1995 = vrot.slane %v442, %v1994
          %1997 = vbcast.lane.b32.xlu0 %v1995, 256
          %v1998 = vpop.permute.xlu0 %1997
          %v1999 = vlaneseq
          %v2000 = vshrl.u32 %v1999, 7
          %v2001 = vsub.s32 1, %v2000
          %v2002 = vrot.slane %v442, %v2001
          %2004 = vbcast.lane.b32.xlu0 %v2002, 256
          %v2005 = vpop.permute.xlu0 %2004
          %v2006 = vlaneseq
          %v2007 = vshrl.u32 %v2006, 7
          %v2008 = vsub.s32 2, %v2007
          %v2009 = vrot.slane %v442, %v2008
          %2011 = vbcast.lane.b32.xlu0 %v2009, 256
          %v2012 = vpop.permute.xlu0 %2011
          %v2013 = vlaneseq
          %v2014 = vshrl.u32 %v2013, 7
          %v2015 = vsub.s32 3, %v2014
          %v2016 = vrot.slane %v442, %v2015
          %2018 = vbcast.lane.b32.xlu0 %v2016, 256
          %v2019 = vpop.permute.xlu0 %2018
          %v2020 = vlaneseq
          %v2021 = vshrl.u32 %v2020, 7
          %v2022 = vsub.s32 4, %v2021
          %v2023 = vrot.slane %v442, %v2022
          %2025 = vbcast.lane.b32.xlu0 %v2023, 256
          %v2026 = vpop.permute.xlu0 %2025
          %v2027 = vlaneseq
          %v2028 = vshrl.u32 %v2027, 7
          %v2029 = vsub.s32 5, %v2028
          %v2030 = vrot.slane %v442, %v2029
          %2032 = vbcast.lane.b32.xlu0 %v2030, 256
          %v2033 = vpop.permute.xlu0 %2032
          %v2034 = vlaneseq
          %v2035 = vshrl.u32 %v2034, 7
          %v2036 = vsub.s32 6, %v2035
          %v2037 = vrot.slane %v442, %v2036
          %2039 = vbcast.lane.b32.xlu0 %v2037, 256
          %v2040 = vpop.permute.xlu0 %2039
          %v2041 = vlaneseq
          %v2042 = vshrl.u32 %v2041, 7
          %v2043 = vsub.s32 7, %v2042
          %v2044 = vrot.slane %v442, %v2043
          %2046 = vbcast.lane.b32.xlu0 %v2044, 256
          %v2047 = vpop.permute.xlu0 %2046
          %v2048 = vlaneseq
          %v2049 = vshrl.u32 %v2048, 7
          %v2050 = vsub.s32 0, %v2049
          %v2051 = vrot.slane %v443, %v2050
          %2053 = vbcast.lane.b32.xlu0 %v2051, 256
          %v2054 = vpop.permute.xlu0 %2053
          %v2055 = vlaneseq
          %v2056 = vshrl.u32 %v2055, 7
          %v2057 = vsub.s32 1, %v2056
          %v2058 = vrot.slane %v443, %v2057
          %2060 = vbcast.lane.b32.xlu0 %v2058, 256
          %v2061 = vpop.permute.xlu0 %2060
          %v2062 = vlaneseq
          %v2063 = vshrl.u32 %v2062, 7
          %v2064 = vsub.s32 2, %v2063
          %v2065 = vrot.slane %v443, %v2064
          %2067 = vbcast.lane.b32.xlu0 %v2065, 256
          %v2068 = vpop.permute.xlu0 %2067
          %v2069 = vlaneseq
          %v2070 = vshrl.u32 %v2069, 7
          %v2071 = vsub.s32 3, %v2070
          %v2072 = vrot.slane %v443, %v2071
          %2074 = vbcast.lane.b32.xlu0 %v2072, 256
          %v2075 = vpop.permute.xlu0 %2074
          %v2076 = vlaneseq
          %v2077 = vshrl.u32 %v2076, 7
          %v2078 = vsub.s32 4, %v2077
          %v2079 = vrot.slane %v443, %v2078
          %2081 = vbcast.lane.b32.xlu0 %v2079, 256
          %v2082 = vpop.permute.xlu0 %2081
          %v2083 = vlaneseq
          %v2084 = vshrl.u32 %v2083, 7
          %v2085 = vsub.s32 5, %v2084
          %v2086 = vrot.slane %v443, %v2085
          %2088 = vbcast.lane.b32.xlu0 %v2086, 256
          %v2089 = vpop.permute.xlu0 %2088
          %v2090 = vlaneseq
          %v2091 = vshrl.u32 %v2090, 7
          %v2092 = vsub.s32 6, %v2091
          %v2093 = vrot.slane %v443, %v2092
          %2095 = vbcast.lane.b32.xlu0 %v2093, 256
          %v2096 = vpop.permute.xlu0 %2095
          %v2097 = vlaneseq
          %v2098 = vshrl.u32 %v2097, 7
          %v2099 = vsub.s32 7, %v2098
          %v2100 = vrot.slane %v443, %v2099
          %2102 = vbcast.lane.b32.xlu0 %v2100, 256
          %v2103 = vpop.permute.xlu0 %2102
          %v2104 = vlaneseq
          %v2105 = vshrl.u32 %v2104, 7
          %v2106 = vsub.s32 0, %v2105
          %v2107 = vrot.slane %v444, %v2106
          %2109 = vbcast.lane.b32.xlu0 %v2107, 256
          %v2110 = vpop.permute.xlu0 %2109
          %v2111 = vlaneseq
          %v2112 = vshrl.u32 %v2111, 7
          %v2113 = vsub.s32 1, %v2112
          %v2114 = vrot.slane %v444, %v2113
          %2116 = vbcast.lane.b32.xlu0 %v2114, 256
          %v2117 = vpop.permute.xlu0 %2116
          %v2118 = vlaneseq
          %v2119 = vshrl.u32 %v2118, 7
          %v2120 = vsub.s32 2, %v2119
          %v2121 = vrot.slane %v444, %v2120
          %2123 = vbcast.lane.b32.xlu0 %v2121, 256
          %v2124 = vpop.permute.xlu0 %2123
          %v2125 = vlaneseq
          %v2126 = vshrl.u32 %v2125, 7
          %v2127 = vsub.s32 3, %v2126
          %v2128 = vrot.slane %v444, %v2127
          %2130 = vbcast.lane.b32.xlu0 %v2128, 256
          %v2131 = vpop.permute.xlu0 %2130
          %v2132 = vlaneseq
          %v2133 = vshrl.u32 %v2132, 7
          %v2134 = vsub.s32 4, %v2133
          %v2135 = vrot.slane %v444, %v2134
          %2137 = vbcast.lane.b32.xlu0 %v2135, 256
          %v2138 = vpop.permute.xlu0 %2137
          %v2139 = vlaneseq
          %v2140 = vshrl.u32 %v2139, 7
          %v2141 = vsub.s32 5, %v2140
          %v2142 = vrot.slane %v444, %v2141
          %2144 = vbcast.lane.b32.xlu0 %v2142, 256
          %v2145 = vpop.permute.xlu0 %2144
          %v2146 = vlaneseq
          %v2147 = vshrl.u32 %v2146, 7
          %v2148 = vsub.s32 6, %v2147
          %v2149 = vrot.slane %v444, %v2148
          %2151 = vbcast.lane.b32.xlu0 %v2149, 256
          %v2152 = vpop.permute.xlu0 %2151
          %v2153 = vlaneseq
          %v2154 = vshrl.u32 %v2153, 7
          %v2155 = vsub.s32 7, %v2154
          %v2156 = vrot.slane %v444, %v2155
          %2158 = vbcast.lane.b32.xlu0 %v2156, 256
          %v2159 = vpop.permute.xlu0 %2158
          %v2160 = vlaneseq
          %v2161 = vshrl.u32 %v2160, 7
          %v2162 = vsub.s32 0, %v2161
          %v2163 = vrot.slane %v445, %v2162
          %2165 = vbcast.lane.b32.xlu0 %v2163, 256
          %v2166 = vpop.permute.xlu0 %2165
          %v2167 = vlaneseq
          %v2168 = vshrl.u32 %v2167, 7
          %v2169 = vsub.s32 1, %v2168
          %v2170 = vrot.slane %v445, %v2169
          %2172 = vbcast.lane.b32.xlu0 %v2170, 256
          %v2173 = vpop.permute.xlu0 %2172
          %v2174 = vlaneseq
          %v2175 = vshrl.u32 %v2174, 7
          %v2176 = vsub.s32 2, %v2175
          %v2177 = vrot.slane %v445, %v2176
          %2179 = vbcast.lane.b32.xlu0 %v2177, 256
          %v2180 = vpop.permute.xlu0 %2179
          %v2181 = vlaneseq
          %v2182 = vshrl.u32 %v2181, 7
          %v2183 = vsub.s32 3, %v2182
          %v2184 = vrot.slane %v445, %v2183
          %2186 = vbcast.lane.b32.xlu0 %v2184, 256
          %v2187 = vpop.permute.xlu0 %2186
          %v2188 = vlaneseq
          %v2189 = vshrl.u32 %v2188, 7
          %v2190 = vsub.s32 4, %v2189
          %v2191 = vrot.slane %v445, %v2190
          %2193 = vbcast.lane.b32.xlu0 %v2191, 256
          %v2194 = vpop.permute.xlu0 %2193
          %v2195 = vlaneseq
          %v2196 = vshrl.u32 %v2195, 7
          %v2197 = vsub.s32 5, %v2196
          %v2198 = vrot.slane %v445, %v2197
          %2200 = vbcast.lane.b32.xlu0 %v2198, 256
          %v2201 = vpop.permute.xlu0 %2200
          %v2202 = vlaneseq
          %v2203 = vshrl.u32 %v2202, 7
          %v2204 = vsub.s32 6, %v2203
          %v2205 = vrot.slane %v445, %v2204
          %2207 = vbcast.lane.b32.xlu0 %v2205, 256
          %v2208 = vpop.permute.xlu0 %2207
          %v2209 = vlaneseq
          %v2210 = vshrl.u32 %v2209, 7
          %v2211 = vsub.s32 7, %v2210
          %v2212 = vrot.slane %v445, %v2211
          %2214 = vbcast.lane.b32.xlu0 %v2212, 256
          %v2215 = vpop.permute.xlu0 %2214
          %v2216 = vlaneseq
          %v2217 = vshrl.u32 %v2216, 7
          %v2218 = vsub.s32 0, %v2217
          %v2219 = vrot.slane %v446, %v2218
          %2221 = vbcast.lane.b32.xlu0 %v2219, 256
          %v2222 = vpop.permute.xlu0 %2221
          %v2223 = vlaneseq
          %v2224 = vshrl.u32 %v2223, 7
          %v2225 = vsub.s32 1, %v2224
          %v2226 = vrot.slane %v446, %v2225
          %2228 = vbcast.lane.b32.xlu0 %v2226, 256
          %v2229 = vpop.permute.xlu0 %2228
          %v2230 = vlaneseq
          %v2231 = vshrl.u32 %v2230, 7
          %v2232 = vsub.s32 2, %v2231
          %v2233 = vrot.slane %v446, %v2232
          %2235 = vbcast.lane.b32.xlu0 %v2233, 256
          %v2236 = vpop.permute.xlu0 %2235
          %v2237 = vlaneseq
          %v2238 = vshrl.u32 %v2237, 7
          %v2239 = vsub.s32 3, %v2238
          %v2240 = vrot.slane %v446, %v2239
          %2242 = vbcast.lane.b32.xlu0 %v2240, 256
          %v2243 = vpop.permute.xlu0 %2242
          %v2244 = vlaneseq
          %v2245 = vshrl.u32 %v2244, 7
          %v2246 = vsub.s32 4, %v2245
          %v2247 = vrot.slane %v446, %v2246
          %2249 = vbcast.lane.b32.xlu0 %v2247, 256
          %v2250 = vpop.permute.xlu0 %2249
          %v2251 = vlaneseq
          %v2252 = vshrl.u32 %v2251, 7
          %v2253 = vsub.s32 5, %v2252
          %v2254 = vrot.slane %v446, %v2253
          %2256 = vbcast.lane.b32.xlu0 %v2254, 256
          %v2257 = vpop.permute.xlu0 %2256
          %v2258 = vlaneseq
          %v2259 = vshrl.u32 %v2258, 7
          %v2260 = vsub.s32 6, %v2259
          %v2261 = vrot.slane %v446, %v2260
          %2263 = vbcast.lane.b32.xlu0 %v2261, 256
          %v2264 = vpop.permute.xlu0 %2263
          %v2265 = vlaneseq
          %v2266 = vshrl.u32 %v2265, 7
          %v2267 = vsub.s32 7, %v2266
          %v2268 = vrot.slane %v446, %v2267
          %2270 = vbcast.lane.b32.xlu0 %v2268, 256
          %v2271 = vpop.permute.xlu0 %2270
          %v2273 = vlaneseq
          %v2274 = vshrl.u32 %v2273, 7
          %v2275 = vsub.s32 0, %v2274
          %v2276 = vrot.slane %v479, %v2275
          %v2278 = vsub.f32 %v2276, %v1382
          %v2279 = vsub.f32 %v2276, %v1389
          %v2280 = vsub.f32 %v2276, %v1396
          %v2281 = vsub.f32 %v2276, %v1403
          %v2282 = vsub.f32 %v2276, %v1410
          %v2283 = vsub.f32 %v2276, %v1417
          %v2284 = vsub.f32 %v2276, %v1424
          %v2285 = vsub.f32 %v2276, %v1431
          %v2286 = vsub.f32 %v2276, %v1438
          %v2287 = vsub.f32 %v2276, %v1445
          %v2288 = vsub.f32 %v2276, %v1452
          %v2289 = vsub.f32 %v2276, %v1459
          %v2290 = vsub.f32 %v2276, %v1466
          %v2291 = vsub.f32 %v2276, %v1473
          %v2292 = vsub.f32 %v2276, %v1480
          %v2293 = vsub.f32 %v2276, %v1487
          %v2294 = vsub.f32 %v2276, %v1494
          %v2295 = vsub.f32 %v2276, %v1501
          %v2296 = vsub.f32 %v2276, %v1508
          %v2297 = vsub.f32 %v2276, %v1515
          %v2298 = vsub.f32 %v2276, %v1522
          %v2299 = vsub.f32 %v2276, %v1529
          %v2300 = vsub.f32 %v2276, %v1536
          %v2301 = vsub.f32 %v2276, %v1543
          %v2302 = vsub.f32 %v2276, %v1550
          %v2303 = vsub.f32 %v2276, %v1557
          %v2304 = vsub.f32 %v2276, %v1564
          %v2305 = vsub.f32 %v2276, %v1571
          %v2306 = vsub.f32 %v2276, %v1578
          %v2307 = vsub.f32 %v2276, %v1585
          %v2308 = vsub.f32 %v2276, %v1592
          %v2309 = vsub.f32 %v2276, %v1599
          %v2310 = vsub.f32 %v2276, %v1606
          %v2311 = vsub.f32 %v2276, %v1613
          %v2312 = vsub.f32 %v2276, %v1620
          %v2313 = vsub.f32 %v2276, %v1627
          %v2314 = vsub.f32 %v2276, %v1634
          %v2315 = vsub.f32 %v2276, %v1641
          %v2316 = vsub.f32 %v2276, %v1648
          %v2317 = vsub.f32 %v2276, %v1655
          %v2318 = vsub.f32 %v2276, %v1662
          %v2319 = vsub.f32 %v2276, %v1669
          %v2320 = vsub.f32 %v2276, %v1676
          %v2321 = vsub.f32 %v2276, %v1683
          %v2322 = vsub.f32 %v2276, %v1690
          %v2323 = vsub.f32 %v2276, %v1697
          %v2324 = vsub.f32 %v2276, %v1704
          %v2325 = vsub.f32 %v2276, %v1711
          %v2326 = vsub.f32 %v2276, %v1718
          %v2327 = vsub.f32 %v2276, %v1725
          %v2328 = vsub.f32 %v2276, %v1732
          %v2329 = vsub.f32 %v2276, %v1739
          %v2330 = vsub.f32 %v2276, %v1746
          %v2331 = vsub.f32 %v2276, %v1753
          %v2332 = vsub.f32 %v2276, %v1760
          %v2333 = vsub.f32 %v2276, %v1767
          %v2334 = vsub.f32 %v2276, %v1774
          %v2335 = vsub.f32 %v2276, %v1781
          %v2336 = vsub.f32 %v2276, %v1788
          %v2337 = vsub.f32 %v2276, %v1795
          %v2338 = vsub.f32 %v2276, %v1802
          %v2339 = vsub.f32 %v2276, %v1809
          %v2340 = vsub.f32 %v2276, %v1816
          %v2341 = vsub.f32 %v2276, %v1823
          %v2342 = vsub.f32 %v2276, %v1830
          %v2343 = vsub.f32 %v2276, %v1837
          %v2344 = vsub.f32 %v2276, %v1844
          %v2345 = vsub.f32 %v2276, %v1851
          %v2346 = vsub.f32 %v2276, %v1858
          %v2347 = vsub.f32 %v2276, %v1865
          %v2348 = vsub.f32 %v2276, %v1872
          %v2349 = vsub.f32 %v2276, %v1879
          %v2350 = vsub.f32 %v2276, %v1886
          %v2351 = vsub.f32 %v2276, %v1893
          %v2352 = vsub.f32 %v2276, %v1900
          %v2353 = vsub.f32 %v2276, %v1907
          %v2354 = vsub.f32 %v2276, %v1914
          %v2355 = vsub.f32 %v2276, %v1921
          %v2356 = vsub.f32 %v2276, %v1928
          %v2357 = vsub.f32 %v2276, %v1935
          %v2358 = vsub.f32 %v2276, %v1942
          %v2359 = vsub.f32 %v2276, %v1949
          %v2360 = vsub.f32 %v2276, %v1956
          %v2361 = vsub.f32 %v2276, %v1963
          %v2362 = vsub.f32 %v2276, %v1970
          %v2363 = vsub.f32 %v2276, %v1977
          %v2364 = vsub.f32 %v2276, %v1984
          %v2365 = vsub.f32 %v2276, %v1991
          %v2366 = vsub.f32 %v2276, %v1998
          %v2367 = vsub.f32 %v2276, %v2005
          %v2368 = vsub.f32 %v2276, %v2012
          %v2369 = vsub.f32 %v2276, %v2019
          %v2370 = vsub.f32 %v2276, %v2026
          %v2371 = vsub.f32 %v2276, %v2033
          %v2372 = vsub.f32 %v2276, %v2040
          %v2373 = vsub.f32 %v2276, %v2047
          %v2374 = vsub.f32 %v2276, %v2054
          %v2375 = vsub.f32 %v2276, %v2061
          %v2376 = vsub.f32 %v2276, %v2068
          %v2377 = vsub.f32 %v2276, %v2075
          %v2378 = vsub.f32 %v2276, %v2082
          %v2379 = vsub.f32 %v2276, %v2089
          %v2380 = vsub.f32 %v2276, %v2096
          %v2381 = vsub.f32 %v2276, %v2103
          %v2382 = vsub.f32 %v2276, %v2110
          %v2383 = vsub.f32 %v2276, %v2117
          %v2384 = vsub.f32 %v2276, %v2124
          %v2385 = vsub.f32 %v2276, %v2131
          %v2386 = vsub.f32 %v2276, %v2138
          %v2387 = vsub.f32 %v2276, %v2145
          %v2388 = vsub.f32 %v2276, %v2152
          %v2389 = vsub.f32 %v2276, %v2159
          %v2390 = vsub.f32 %v2276, %v2166
          %v2391 = vsub.f32 %v2276, %v2173
          %v2392 = vsub.f32 %v2276, %v2180
          %v2393 = vsub.f32 %v2276, %v2187
          %v2394 = vsub.f32 %v2276, %v2194
          %v2395 = vsub.f32 %v2276, %v2201
          %v2396 = vsub.f32 %v2276, %v2208
          %v2397 = vsub.f32 %v2276, %v2215
          %v2398 = vsub.f32 %v2276, %v2222
          %v2399 = vsub.f32 %v2276, %v2229
          %v2400 = vsub.f32 %v2276, %v2236
          %v2401 = vsub.f32 %v2276, %v2243
          %v2402 = vsub.f32 %v2276, %v2250
          %v2403 = vsub.f32 %v2276, %v2257
          %v2404 = vsub.f32 %v2276, %v2264
          %v2405 = vsub.f32 %v2276, %v2271
          %v2406 = vand.u32 2147483647, %v2278
          %v2407 = vand.u32 2147483647, %v2279
          %v2408 = vand.u32 2147483647, %v2280
          %v2409 = vand.u32 2147483647, %v2281
          %v2410 = vand.u32 2147483647, %v2282
          %v2411 = vand.u32 2147483647, %v2283
          %v2412 = vand.u32 2147483647, %v2284
          %v2413 = vand.u32 2147483647, %v2285
          %v2414 = vand.u32 2147483647, %v2286
          %v2415 = vand.u32 2147483647, %v2287
          %v2416 = vand.u32 2147483647, %v2288
          %v2417 = vand.u32 2147483647, %v2289
          %v2418 = vand.u32 2147483647, %v2290
          %v2419 = vand.u32 2147483647, %v2291
          %v2420 = vand.u32 2147483647, %v2292
          %v2421 = vand.u32 2147483647, %v2293
          %v2422 = vand.u32 2147483647, %v2294
          %v2423 = vand.u32 2147483647, %v2295
          %v2424 = vand.u32 2147483647, %v2296
          %v2425 = vand.u32 2147483647, %v2297
          %v2426 = vand.u32 2147483647, %v2298
          %v2427 = vand.u32 2147483647, %v2299
          %v2428 = vand.u32 2147483647, %v2300
          %v2429 = vand.u32 2147483647, %v2301
          %v2430 = vand.u32 2147483647, %v2302
          %v2431 = vand.u32 2147483647, %v2303
          %v2432 = vand.u32 2147483647, %v2304
          %v2433 = vand.u32 2147483647, %v2305
          %v2434 = vand.u32 2147483647, %v2306
          %v2435 = vand.u32 2147483647, %v2307
          %v2436 = vand.u32 2147483647, %v2308
          %v2437 = vand.u32 2147483647, %v2309
          %v2438 = vand.u32 2147483647, %v2310
          %v2439 = vand.u32 2147483647, %v2311
          %v2440 = vand.u32 2147483647, %v2312
          %v2441 = vand.u32 2147483647, %v2313
          %v2442 = vand.u32 2147483647, %v2314
          %v2443 = vand.u32 2147483647, %v2315
          %v2444 = vand.u32 2147483647, %v2316
          %v2445 = vand.u32 2147483647, %v2317
          %v2446 = vand.u32 2147483647, %v2318
          %v2447 = vand.u32 2147483647, %v2319
          %v2448 = vand.u32 2147483647, %v2320
          %v2449 = vand.u32 2147483647, %v2321
          %v2450 = vand.u32 2147483647, %v2322
          %v2451 = vand.u32 2147483647, %v2323
          %v2452 = vand.u32 2147483647, %v2324
          %v2453 = vand.u32 2147483647, %v2325
          %v2454 = vand.u32 2147483647, %v2326
          %v2455 = vand.u32 2147483647, %v2327
          %v2456 = vand.u32 2147483647, %v2328
          %v2457 = vand.u32 2147483647, %v2329
          %v2458 = vand.u32 2147483647, %v2330
          %v2459 = vand.u32 2147483647, %v2331
          %v2460 = vand.u32 2147483647, %v2332
          %v2461 = vand.u32 2147483647, %v2333
          %v2462 = vand.u32 2147483647, %v2334
          %v2463 = vand.u32 2147483647, %v2335
          %v2464 = vand.u32 2147483647, %v2336
          %v2465 = vand.u32 2147483647, %v2337
          %v2466 = vand.u32 2147483647, %v2338
          %v2467 = vand.u32 2147483647, %v2339
          %v2468 = vand.u32 2147483647, %v2340
          %v2469 = vand.u32 2147483647, %v2341
          %v2470 = vand.u32 2147483647, %v2342
          %v2471 = vand.u32 2147483647, %v2343
          %v2472 = vand.u32 2147483647, %v2344
          %v2473 = vand.u32 2147483647, %v2345
          %v2474 = vand.u32 2147483647, %v2346
          %v2475 = vand.u32 2147483647, %v2347
          %v2476 = vand.u32 2147483647, %v2348
          %v2477 = vand.u32 2147483647, %v2349
          %v2478 = vand.u32 2147483647, %v2350
          %v2479 = vand.u32 2147483647, %v2351
          %v2480 = vand.u32 2147483647, %v2352
          %v2481 = vand.u32 2147483647, %v2353
          %v2482 = vand.u32 2147483647, %v2354
          %v2483 = vand.u32 2147483647, %v2355
          %v2484 = vand.u32 2147483647, %v2356
          %v2485 = vand.u32 2147483647, %v2357
          %v2486 = vand.u32 2147483647, %v2358
          %v2487 = vand.u32 2147483647, %v2359
          %v2488 = vand.u32 2147483647, %v2360
          %v2489 = vand.u32 2147483647, %v2361
          %v2490 = vand.u32 2147483647, %v2362
          %v2491 = vand.u32 2147483647, %v2363
          %v2492 = vand.u32 2147483647, %v2364
          %v2493 = vand.u32 2147483647, %v2365
          %v2494 = vand.u32 2147483647, %v2366
          %v2495 = vand.u32 2147483647, %v2367
          %v2496 = vand.u32 2147483647, %v2368
          %v2497 = vand.u32 2147483647, %v2369
          %v2498 = vand.u32 2147483647, %v2370
          %v2499 = vand.u32 2147483647, %v2371
          %v2500 = vand.u32 2147483647, %v2372
          %v2501 = vand.u32 2147483647, %v2373
          %v2502 = vand.u32 2147483647, %v2374
          %v2503 = vand.u32 2147483647, %v2375
          %v2504 = vand.u32 2147483647, %v2376
          %v2505 = vand.u32 2147483647, %v2377
          %v2506 = vand.u32 2147483647, %v2378
          %v2507 = vand.u32 2147483647, %v2379
          %v2508 = vand.u32 2147483647, %v2380
          %v2509 = vand.u32 2147483647, %v2381
          %v2510 = vand.u32 2147483647, %v2382
          %v2511 = vand.u32 2147483647, %v2383
          %v2512 = vand.u32 2147483647, %v2384
          %v2513 = vand.u32 2147483647, %v2385
          %v2514 = vand.u32 2147483647, %v2386
          %v2515 = vand.u32 2147483647, %v2387
          %v2516 = vand.u32 2147483647, %v2388
          %v2517 = vand.u32 2147483647, %v2389
          %v2518 = vand.u32 2147483647, %v2390
          %v2519 = vand.u32 2147483647, %v2391
          %v2520 = vand.u32 2147483647, %v2392
          %v2521 = vand.u32 2147483647, %v2393
          %v2522 = vand.u32 2147483647, %v2394
          %v2523 = vand.u32 2147483647, %v2395
          %v2524 = vand.u32 2147483647, %v2396
          %v2525 = vand.u32 2147483647, %v2397
          %v2526 = vand.u32 2147483647, %v2398
          %v2527 = vand.u32 2147483647, %v2399
          %v2528 = vand.u32 2147483647, %v2400
          %v2529 = vand.u32 2147483647, %v2401
          %v2530 = vand.u32 2147483647, %v2402
          %v2531 = vand.u32 2147483647, %v2403
          %v2532 = vand.u32 2147483647, %v2404
          %v2533 = vand.u32 2147483647, %v2405
          %v2534 = vsub.f32 %v486, %v2406
          %v2535 = vsub.f32 %v493, %v2407
          %v2536 = vsub.f32 %v500, %v2408
          %v2537 = vsub.f32 %v507, %v2409
          %v2538 = vsub.f32 %v514, %v2410
          %v2539 = vsub.f32 %v521, %v2411
          %v2540 = vsub.f32 %v528, %v2412
          %v2541 = vsub.f32 %v535, %v2413
          %v2542 = vsub.f32 %v542, %v2414
          %v2543 = vsub.f32 %v549, %v2415
          %v2544 = vsub.f32 %v556, %v2416
          %v2545 = vsub.f32 %v563, %v2417
          %v2546 = vsub.f32 %v570, %v2418
          %v2547 = vsub.f32 %v577, %v2419
          %v2548 = vsub.f32 %v584, %v2420
          %v2549 = vsub.f32 %v591, %v2421
          %v2550 = vsub.f32 %v598, %v2422
          %v2551 = vsub.f32 %v605, %v2423
          %v2552 = vsub.f32 %v612, %v2424
          %v2553 = vsub.f32 %v619, %v2425
          %v2554 = vsub.f32 %v626, %v2426
          %v2555 = vsub.f32 %v633, %v2427
          %v2556 = vsub.f32 %v640, %v2428
          %v2557 = vsub.f32 %v647, %v2429
          %v2558 = vsub.f32 %v654, %v2430
          %v2559 = vsub.f32 %v661, %v2431
          %v2560 = vsub.f32 %v668, %v2432
          %v2561 = vsub.f32 %v675, %v2433
          %v2562 = vsub.f32 %v682, %v2434
          %v2563 = vsub.f32 %v689, %v2435
          %v2564 = vsub.f32 %v696, %v2436
          %v2565 = vsub.f32 %v703, %v2437
          %v2566 = vsub.f32 %v710, %v2438
          %v2567 = vsub.f32 %v717, %v2439
          %v2568 = vsub.f32 %v724, %v2440
          %v2569 = vsub.f32 %v731, %v2441
          %v2570 = vsub.f32 %v738, %v2442
          %v2571 = vsub.f32 %v745, %v2443
          %v2572 = vsub.f32 %v752, %v2444
          %v2573 = vsub.f32 %v759, %v2445
          %v2574 = vsub.f32 %v766, %v2446
          %v2575 = vsub.f32 %v773, %v2447
          %v2576 = vsub.f32 %v780, %v2448
          %v2577 = vsub.f32 %v787, %v2449
          %v2578 = vsub.f32 %v794, %v2450
          %v2579 = vsub.f32 %v801, %v2451
          %v2580 = vsub.f32 %v808, %v2452
          %v2581 = vsub.f32 %v815, %v2453
          %v2582 = vsub.f32 %v822, %v2454
          %v2583 = vsub.f32 %v829, %v2455
          %v2584 = vsub.f32 %v836, %v2456
          %v2585 = vsub.f32 %v843, %v2457
          %v2586 = vsub.f32 %v850, %v2458
          %v2587 = vsub.f32 %v857, %v2459
          %v2588 = vsub.f32 %v864, %v2460
          %v2589 = vsub.f32 %v871, %v2461
          %v2590 = vsub.f32 %v878, %v2462
          %v2591 = vsub.f32 %v885, %v2463
          %v2592 = vsub.f32 %v892, %v2464
          %v2593 = vsub.f32 %v899, %v2465
          %v2594 = vsub.f32 %v906, %v2466
          %v2595 = vsub.f32 %v913, %v2467
          %v2596 = vsub.f32 %v920, %v2468
          %v2597 = vsub.f32 %v927, %v2469
          %v2598 = vsub.f32 %v934, %v2470
          %v2599 = vsub.f32 %v941, %v2471
          %v2600 = vsub.f32 %v948, %v2472
          %v2601 = vsub.f32 %v955, %v2473
          %v2602 = vsub.f32 %v962, %v2474
          %v2603 = vsub.f32 %v969, %v2475
          %v2604 = vsub.f32 %v976, %v2476
          %v2605 = vsub.f32 %v983, %v2477
          %v2606 = vsub.f32 %v990, %v2478
          %v2607 = vsub.f32 %v997, %v2479
          %v2608 = vsub.f32 %v1004, %v2480
          %v2609 = vsub.f32 %v1011, %v2481
          %v2610 = vsub.f32 %v1018, %v2482
          %v2611 = vsub.f32 %v1025, %v2483
          %v2612 = vsub.f32 %v1032, %v2484
          %v2613 = vsub.f32 %v1039, %v2485
          %v2614 = vsub.f32 %v1046, %v2486
          %v2615 = vsub.f32 %v1053, %v2487
          %v2616 = vsub.f32 %v1060, %v2488
          %v2617 = vsub.f32 %v1067, %v2489
          %v2618 = vsub.f32 %v1074, %v2490
          %v2619 = vsub.f32 %v1081, %v2491
          %v2620 = vsub.f32 %v1088, %v2492
          %v2621 = vsub.f32 %v1095, %v2493
          %v2622 = vsub.f32 %v1102, %v2494
          %v2623 = vsub.f32 %v1109, %v2495
          %v2624 = vsub.f32 %v1116, %v2496
          %v2625 = vsub.f32 %v1123, %v2497
          %v2626 = vsub.f32 %v1130, %v2498
          %v2627 = vsub.f32 %v1137, %v2499
          %v2628 = vsub.f32 %v1144, %v2500
          %v2629 = vsub.f32 %v1151, %v2501
          %v2630 = vsub.f32 %v1158, %v2502
          %v2631 = vsub.f32 %v1165, %v2503
          %v2632 = vsub.f32 %v1172, %v2504
          %v2633 = vsub.f32 %v1179, %v2505
          %v2634 = vsub.f32 %v1186, %v2506
          %v2635 = vsub.f32 %v1193, %v2507
          %v2636 = vsub.f32 %v1200, %v2508
          %v2637 = vsub.f32 %v1207, %v2509
          %v2638 = vsub.f32 %v1214, %v2510
          %v2639 = vsub.f32 %v1221, %v2511
          %v2640 = vsub.f32 %v1228, %v2512
          %v2641 = vsub.f32 %v1235, %v2513
          %v2642 = vsub.f32 %v1242, %v2514
          %v2643 = vsub.f32 %v1249, %v2515
          %v2644 = vsub.f32 %v1256, %v2516
          %v2645 = vsub.f32 %v1263, %v2517
          %v2646 = vsub.f32 %v1270, %v2518
          %v2647 = vsub.f32 %v1277, %v2519
          %v2648 = vsub.f32 %v1284, %v2520
          %v2649 = vsub.f32 %v1291, %v2521
          %v2650 = vsub.f32 %v1298, %v2522
          %v2651 = vsub.f32 %v1305, %v2523
          %v2652 = vsub.f32 %v1312, %v2524
          %v2653 = vsub.f32 %v1319, %v2525
          %v2654 = vsub.f32 %v1326, %v2526
          %v2655 = vsub.f32 %v1333, %v2527
          %v2656 = vsub.f32 %v1340, %v2528
          %v2657 = vsub.f32 %v1347, %v2529
          %v2658 = vsub.f32 %v1354, %v2530
          %v2659 = vsub.f32 %v1361, %v2531
          %v2660 = vsub.f32 %v1368, %v2532
          %v2661 = vsub.f32 %v1375, %v2533
          %v2662 = vmax.f32 %v2534, 0.0
          %v2663 = vmax.f32 %v2535, 0.0
          %v2664 = vmax.f32 %v2536, 0.0
          %v2665 = vmax.f32 %v2537, 0.0
          %v2666 = vmax.f32 %v2538, 0.0
          %v2667 = vmax.f32 %v2539, 0.0
          %v2668 = vmax.f32 %v2540, 0.0
          %v2669 = vmax.f32 %v2541, 0.0
          %v2670 = vmax.f32 %v2542, 0.0
          %v2671 = vmax.f32 %v2543, 0.0
          %v2672 = vmax.f32 %v2544, 0.0
          %v2673 = vmax.f32 %v2545, 0.0
          %v2674 = vmax.f32 %v2546, 0.0
          %v2675 = vmax.f32 %v2547, 0.0
          %v2676 = vmax.f32 %v2548, 0.0
          %v2677 = vmax.f32 %v2549, 0.0
          %v2678 = vmax.f32 %v2550, 0.0
          %v2679 = vmax.f32 %v2551, 0.0
          %v2680 = vmax.f32 %v2552, 0.0
          %v2681 = vmax.f32 %v2553, 0.0
          %v2682 = vmax.f32 %v2554, 0.0
          %v2683 = vmax.f32 %v2555, 0.0
          %v2684 = vmax.f32 %v2556, 0.0
          %v2685 = vmax.f32 %v2557, 0.0
          %v2686 = vmax.f32 %v2558, 0.0
          %v2687 = vmax.f32 %v2559, 0.0
          %v2688 = vmax.f32 %v2560, 0.0
          %v2689 = vmax.f32 %v2561, 0.0
          %v2690 = vmax.f32 %v2562, 0.0
          %v2691 = vmax.f32 %v2563, 0.0
          %v2692 = vmax.f32 %v2564, 0.0
          %v2693 = vmax.f32 %v2565, 0.0
          %v2694 = vmax.f32 %v2566, 0.0
          %v2695 = vmax.f32 %v2567, 0.0
          %v2696 = vmax.f32 %v2568, 0.0
          %v2697 = vmax.f32 %v2569, 0.0
          %v2698 = vmax.f32 %v2570, 0.0
          %v2699 = vmax.f32 %v2571, 0.0
          %v2700 = vmax.f32 %v2572, 0.0
          %v2701 = vmax.f32 %v2573, 0.0
          %v2702 = vmax.f32 %v2574, 0.0
          %v2703 = vmax.f32 %v2575, 0.0
          %v2704 = vmax.f32 %v2576, 0.0
          %v2705 = vmax.f32 %v2577, 0.0
          %v2706 = vmax.f32 %v2578, 0.0
          %v2707 = vmax.f32 %v2579, 0.0
          %v2708 = vmax.f32 %v2580, 0.0
          %v2709 = vmax.f32 %v2581, 0.0
          %v2710 = vmax.f32 %v2582, 0.0
          %v2711 = vmax.f32 %v2583, 0.0
          %v2712 = vmax.f32 %v2584, 0.0
          %v2713 = vmax.f32 %v2585, 0.0
          %v2714 = vmax.f32 %v2586, 0.0
          %v2715 = vmax.f32 %v2587, 0.0
          %v2716 = vmax.f32 %v2588, 0.0
          %v2717 = vmax.f32 %v2589, 0.0
          %v2718 = vmax.f32 %v2590, 0.0
          %v2719 = vmax.f32 %v2591, 0.0
          %v2720 = vmax.f32 %v2592, 0.0
          %v2721 = vmax.f32 %v2593, 0.0
          %v2722 = vmax.f32 %v2594, 0.0
          %v2723 = vmax.f32 %v2595, 0.0
          %v2724 = vmax.f32 %v2596, 0.0
          %v2725 = vmax.f32 %v2597, 0.0
          %v2726 = vmax.f32 %v2598, 0.0
          %v2727 = vmax.f32 %v2599, 0.0
          %v2728 = vmax.f32 %v2600, 0.0
          %v2729 = vmax.f32 %v2601, 0.0
          %v2730 = vmax.f32 %v2602, 0.0
          %v2731 = vmax.f32 %v2603, 0.0
          %v2732 = vmax.f32 %v2604, 0.0
          %v2733 = vmax.f32 %v2605, 0.0
          %v2734 = vmax.f32 %v2606, 0.0
          %v2735 = vmax.f32 %v2607, 0.0
          %v2736 = vmax.f32 %v2608, 0.0
          %v2737 = vmax.f32 %v2609, 0.0
          %v2738 = vmax.f32 %v2610, 0.0
          %v2739 = vmax.f32 %v2611, 0.0
          %v2740 = vmax.f32 %v2612, 0.0
          %v2741 = vmax.f32 %v2613, 0.0
          %v2742 = vmax.f32 %v2614, 0.0
          %v2743 = vmax.f32 %v2615, 0.0
          %v2744 = vmax.f32 %v2616, 0.0
          %v2745 = vmax.f32 %v2617, 0.0
          %v2746 = vmax.f32 %v2618, 0.0
          %v2747 = vmax.f32 %v2619, 0.0
          %v2748 = vmax.f32 %v2620, 0.0
          %v2749 = vmax.f32 %v2621, 0.0
          %v2750 = vmax.f32 %v2622, 0.0
          %v2751 = vmax.f32 %v2623, 0.0
          %v2752 = vmax.f32 %v2624, 0.0
          %v2753 = vmax.f32 %v2625, 0.0
          %v2754 = vmax.f32 %v2626, 0.0
          %v2755 = vmax.f32 %v2627, 0.0
          %v2756 = vmax.f32 %v2628, 0.0
          %v2757 = vmax.f32 %v2629, 0.0
          %v2758 = vmax.f32 %v2630, 0.0
          %v2759 = vmax.f32 %v2631, 0.0
          %v2760 = vmax.f32 %v2632, 0.0
          %v2761 = vmax.f32 %v2633, 0.0
          %v2762 = vmax.f32 %v2634, 0.0
          %v2763 = vmax.f32 %v2635, 0.0
          %v2764 = vmax.f32 %v2636, 0.0
          %v2765 = vmax.f32 %v2637, 0.0
          %v2766 = vmax.f32 %v2638, 0.0
          %v2767 = vmax.f32 %v2639, 0.0
          %v2768 = vmax.f32 %v2640, 0.0
          %v2769 = vmax.f32 %v2641, 0.0
          %v2770 = vmax.f32 %v2642, 0.0
          %v2771 = vmax.f32 %v2643, 0.0
          %v2772 = vmax.f32 %v2644, 0.0
          %v2773 = vmax.f32 %v2645, 0.0
          %v2774 = vmax.f32 %v2646, 0.0
          %v2775 = vmax.f32 %v2647, 0.0
          %v2776 = vmax.f32 %v2648, 0.0
          %v2777 = vmax.f32 %v2649, 0.0
          %v2778 = vmax.f32 %v2650, 0.0
          %v2779 = vmax.f32 %v2651, 0.0
          %v2780 = vmax.f32 %v2652, 0.0
          %v2781 = vmax.f32 %v2653, 0.0
          %v2782 = vmax.f32 %v2654, 0.0
          %v2783 = vmax.f32 %v2655, 0.0
          %v2784 = vmax.f32 %v2656, 0.0
          %v2785 = vmax.f32 %v2657, 0.0
          %v2786 = vmax.f32 %v2658, 0.0
          %v2787 = vmax.f32 %v2659, 0.0
          %v2788 = vmax.f32 %v2660, 0.0
          %v2789 = vmax.f32 %v2661, 0.0
          %v2790 = vld [vmem:[%s344] sm:$0xff]
          %v2791 = vlaneseq
          %v2792 = vshrl.u32 %v2791, 7
          %v2793 = vsub.s32 0, %v2792
          %v2794 = vrot.slane %v399, %v2793
          %2796 = vbcast.lane.b32.xlu0 %v2794, 256
          %v2797 = vpop.permute.xlu0 %2796
          %v2798 = vlaneseq
          %v2799 = vshrl.u32 %v2798, 7
          %v2800 = vsub.s32 1, %v2799
          %v2801 = vrot.slane %v399, %v2800
          %2803 = vbcast.lane.b32.xlu0 %v2801, 256
          %v2804 = vpop.permute.xlu0 %2803
          %v2805 = vlaneseq
          %v2806 = vshrl.u32 %v2805, 7
          %v2807 = vsub.s32 2, %v2806
          %v2808 = vrot.slane %v399, %v2807
          %2810 = vbcast.lane.b32.xlu0 %v2808, 256
          %v2811 = vpop.permute.xlu0 %2810
          %v2812 = vlaneseq
          %v2813 = vshrl.u32 %v2812, 7
          %v2814 = vsub.s32 3, %v2813
          %v2815 = vrot.slane %v399, %v2814
          %2817 = vbcast.lane.b32.xlu0 %v2815, 256
          %v2818 = vpop.permute.xlu0 %2817
          %v2819 = vlaneseq
          %v2820 = vshrl.u32 %v2819, 7
          %v2821 = vsub.s32 4, %v2820
          %v2822 = vrot.slane %v399, %v2821
          %2824 = vbcast.lane.b32.xlu0 %v2822, 256
          %v2825 = vpop.permute.xlu0 %2824
          %v2826 = vlaneseq
          %v2827 = vshrl.u32 %v2826, 7
          %v2828 = vsub.s32 5, %v2827
          %v2829 = vrot.slane %v399, %v2828
          %2831 = vbcast.lane.b32.xlu0 %v2829, 256
          %v2832 = vpop.permute.xlu0 %2831
          %v2833 = vlaneseq
          %v2834 = vshrl.u32 %v2833, 7
          %v2835 = vsub.s32 6, %v2834
          %v2836 = vrot.slane %v399, %v2835
          %2838 = vbcast.lane.b32.xlu0 %v2836, 256
          %v2839 = vpop.permute.xlu0 %2838
          %v2840 = vlaneseq
          %v2841 = vshrl.u32 %v2840, 7
          %v2842 = vsub.s32 7, %v2841
          %v2843 = vrot.slane %v399, %v2842
          %2845 = vbcast.lane.b32.xlu0 %v2843, 256
          %v2846 = vpop.permute.xlu0 %2845
          %v2847 = vlaneseq
          %v2848 = vshrl.u32 %v2847, 7
          %v2849 = vsub.s32 0, %v2848
          %v2850 = vrot.slane %v400, %v2849
          %2852 = vbcast.lane.b32.xlu0 %v2850, 256
          %v2853 = vpop.permute.xlu0 %2852
          %v2854 = vlaneseq
          %v2855 = vshrl.u32 %v2854, 7
          %v2856 = vsub.s32 1, %v2855
          %v2857 = vrot.slane %v400, %v2856
          %2859 = vbcast.lane.b32.xlu0 %v2857, 256
          %v2860 = vpop.permute.xlu0 %2859
          %v2861 = vlaneseq
          %v2862 = vshrl.u32 %v2861, 7
          %v2863 = vsub.s32 2, %v2862
          %v2864 = vrot.slane %v400, %v2863
          %2866 = vbcast.lane.b32.xlu0 %v2864, 256
          %v2867 = vpop.permute.xlu0 %2866
          %v2868 = vlaneseq
          %v2869 = vshrl.u32 %v2868, 7
          %v2870 = vsub.s32 3, %v2869
          %v2871 = vrot.slane %v400, %v2870
          %2873 = vbcast.lane.b32.xlu0 %v2871, 256
          %v2874 = vpop.permute.xlu0 %2873
          %v2875 = vlaneseq
          %v2876 = vshrl.u32 %v2875, 7
          %v2877 = vsub.s32 4, %v2876
          %v2878 = vrot.slane %v400, %v2877
          %2880 = vbcast.lane.b32.xlu0 %v2878, 256
          %v2881 = vpop.permute.xlu0 %2880
          %v2882 = vlaneseq
          %v2883 = vshrl.u32 %v2882, 7
          %v2884 = vsub.s32 5, %v2883
          %v2885 = vrot.slane %v400, %v2884
          %2887 = vbcast.lane.b32.xlu0 %v2885, 256
          %v2888 = vpop.permute.xlu0 %2887
          %v2889 = vlaneseq
          %v2890 = vshrl.u32 %v2889, 7
          %v2891 = vsub.s32 6, %v2890
          %v2892 = vrot.slane %v400, %v2891
          %2894 = vbcast.lane.b32.xlu0 %v2892, 256
          %v2895 = vpop.permute.xlu0 %2894
          %v2896 = vlaneseq
          %v2897 = vshrl.u32 %v2896, 7
          %v2898 = vsub.s32 7, %v2897
          %v2899 = vrot.slane %v400, %v2898
          %2901 = vbcast.lane.b32.xlu0 %v2899, 256
          %v2902 = vpop.permute.xlu0 %2901
          %v2903 = vlaneseq
          %v2904 = vshrl.u32 %v2903, 7
          %v2905 = vsub.s32 0, %v2904
          %v2906 = vrot.slane %v401, %v2905
          %2908 = vbcast.lane.b32.xlu0 %v2906, 256
          %v2909 = vpop.permute.xlu0 %2908
          %v2910 = vlaneseq
          %v2911 = vshrl.u32 %v2910, 7
          %v2912 = vsub.s32 1, %v2911
          %v2913 = vrot.slane %v401, %v2912
          %2915 = vbcast.lane.b32.xlu0 %v2913, 256
          %v2916 = vpop.permute.xlu0 %2915
          %v2917 = vlaneseq
          %v2918 = vshrl.u32 %v2917, 7
          %v2919 = vsub.s32 2, %v2918
          %v2920 = vrot.slane %v401, %v2919
          %2922 = vbcast.lane.b32.xlu0 %v2920, 256
          %v2923 = vpop.permute.xlu0 %2922
          %v2924 = vlaneseq
          %v2925 = vshrl.u32 %v2924, 7
          %v2926 = vsub.s32 3, %v2925
          %v2927 = vrot.slane %v401, %v2926
          %2929 = vbcast.lane.b32.xlu0 %v2927, 256
          %v2930 = vpop.permute.xlu0 %2929
          %v2931 = vlaneseq
          %v2932 = vshrl.u32 %v2931, 7
          %v2933 = vsub.s32 4, %v2932
          %v2934 = vrot.slane %v401, %v2933
          %2936 = vbcast.lane.b32.xlu0 %v2934, 256
          %v2937 = vpop.permute.xlu0 %2936
          %v2938 = vlaneseq
          %v2939 = vshrl.u32 %v2938, 7
          %v2940 = vsub.s32 5, %v2939
          %v2941 = vrot.slane %v401, %v2940
          %2943 = vbcast.lane.b32.xlu0 %v2941, 256
          %v2944 = vpop.permute.xlu0 %2943
          %v2945 = vlaneseq
          %v2946 = vshrl.u32 %v2945, 7
          %v2947 = vsub.s32 6, %v2946
          %v2948 = vrot.slane %v401, %v2947
          %2950 = vbcast.lane.b32.xlu0 %v2948, 256
          %v2951 = vpop.permute.xlu0 %2950
          %v2952 = vlaneseq
          %v2953 = vshrl.u32 %v2952, 7
          %v2954 = vsub.s32 7, %v2953
          %v2955 = vrot.slane %v401, %v2954
          %2957 = vbcast.lane.b32.xlu0 %v2955, 256
          %v2958 = vpop.permute.xlu0 %2957
          %v2959 = vlaneseq
          %v2960 = vshrl.u32 %v2959, 7
          %v2961 = vsub.s32 0, %v2960
          %v2962 = vrot.slane %v402, %v2961
          %2964 = vbcast.lane.b32.xlu0 %v2962, 256
          %v2965 = vpop.permute.xlu0 %2964
          %v2966 = vlaneseq
          %v2967 = vshrl.u32 %v2966, 7
          %v2968 = vsub.s32 1, %v2967
          %v2969 = vrot.slane %v402, %v2968
          %2971 = vbcast.lane.b32.xlu0 %v2969, 256
          %v2972 = vpop.permute.xlu0 %2971
          %v2973 = vlaneseq
          %v2974 = vshrl.u32 %v2973, 7
          %v2975 = vsub.s32 2, %v2974
          %v2976 = vrot.slane %v402, %v2975
          %2978 = vbcast.lane.b32.xlu0 %v2976, 256
          %v2979 = vpop.permute.xlu0 %2978
          %v2980 = vlaneseq
          %v2981 = vshrl.u32 %v2980, 7
          %v2982 = vsub.s32 3, %v2981
          %v2983 = vrot.slane %v402, %v2982
          %2985 = vbcast.lane.b32.xlu0 %v2983, 256
          %v2986 = vpop.permute.xlu0 %2985
          %v2987 = vlaneseq
          %v2988 = vshrl.u32 %v2987, 7
          %v2989 = vsub.s32 4, %v2988
          %v2990 = vrot.slane %v402, %v2989
          %2992 = vbcast.lane.b32.xlu0 %v2990, 256
          %v2993 = vpop.permute.xlu0 %2992
          %v2994 = vlaneseq
          %v2995 = vshrl.u32 %v2994, 7
          %v2996 = vsub.s32 5, %v2995
          %v2997 = vrot.slane %v402, %v2996
          %2999 = vbcast.lane.b32.xlu0 %v2997, 256
          %v3000 = vpop.permute.xlu0 %2999
          %v3001 = vlaneseq
          %v3002 = vshrl.u32 %v3001, 7
          %v3003 = vsub.s32 6, %v3002
          %v3004 = vrot.slane %v402, %v3003
          %3006 = vbcast.lane.b32.xlu0 %v3004, 256
          %v3007 = vpop.permute.xlu0 %3006
          %v3008 = vlaneseq
          %v3009 = vshrl.u32 %v3008, 7
          %v3010 = vsub.s32 7, %v3009
          %v3011 = vrot.slane %v402, %v3010
          %3013 = vbcast.lane.b32.xlu0 %v3011, 256
          %v3014 = vpop.permute.xlu0 %3013
          %v3015 = vlaneseq
          %v3016 = vshrl.u32 %v3015, 7
          %v3017 = vsub.s32 0, %v3016
          %v3018 = vrot.slane %v403, %v3017
          %3020 = vbcast.lane.b32.xlu0 %v3018, 256
          %v3021 = vpop.permute.xlu0 %3020
          %v3022 = vlaneseq
          %v3023 = vshrl.u32 %v3022, 7
          %v3024 = vsub.s32 1, %v3023
          %v3025 = vrot.slane %v403, %v3024
          %3027 = vbcast.lane.b32.xlu0 %v3025, 256
          %v3028 = vpop.permute.xlu0 %3027
          %v3029 = vlaneseq
          %v3030 = vshrl.u32 %v3029, 7
          %v3031 = vsub.s32 2, %v3030
          %v3032 = vrot.slane %v403, %v3031
          %3034 = vbcast.lane.b32.xlu0 %v3032, 256
          %v3035 = vpop.permute.xlu0 %3034
          %v3036 = vlaneseq
          %v3037 = vshrl.u32 %v3036, 7
          %v3038 = vsub.s32 3, %v3037
          %v3039 = vrot.slane %v403, %v3038
          %3041 = vbcast.lane.b32.xlu0 %v3039, 256
          %v3042 = vpop.permute.xlu0 %3041
          %v3043 = vlaneseq
          %v3044 = vshrl.u32 %v3043, 7
          %v3045 = vsub.s32 4, %v3044
          %v3046 = vrot.slane %v403, %v3045
          %3048 = vbcast.lane.b32.xlu0 %v3046, 256
          %v3049 = vpop.permute.xlu0 %3048
          %v3050 = vlaneseq
          %v3051 = vshrl.u32 %v3050, 7
          %v3052 = vsub.s32 5, %v3051
          %v3053 = vrot.slane %v403, %v3052
          %3055 = vbcast.lane.b32.xlu0 %v3053, 256
          %v3056 = vpop.permute.xlu0 %3055
          %v3057 = vlaneseq
          %v3058 = vshrl.u32 %v3057, 7
          %v3059 = vsub.s32 6, %v3058
          %v3060 = vrot.slane %v403, %v3059
          %3062 = vbcast.lane.b32.xlu0 %v3060, 256
          %v3063 = vpop.permute.xlu0 %3062
          %v3064 = vlaneseq
          %v3065 = vshrl.u32 %v3064, 7
          %v3066 = vsub.s32 7, %v3065
          %v3067 = vrot.slane %v403, %v3066
          %3069 = vbcast.lane.b32.xlu0 %v3067, 256
          %v3070 = vpop.permute.xlu0 %3069
          %v3071 = vlaneseq
          %v3072 = vshrl.u32 %v3071, 7
          %v3073 = vsub.s32 0, %v3072
          %v3074 = vrot.slane %v404, %v3073
          %3076 = vbcast.lane.b32.xlu0 %v3074, 256
          %v3077 = vpop.permute.xlu0 %3076
          %v3078 = vlaneseq
          %v3079 = vshrl.u32 %v3078, 7
          %v3080 = vsub.s32 1, %v3079
          %v3081 = vrot.slane %v404, %v3080
          %3083 = vbcast.lane.b32.xlu0 %v3081, 256
          %v3084 = vpop.permute.xlu0 %3083
          %v3085 = vlaneseq
          %v3086 = vshrl.u32 %v3085, 7
          %v3087 = vsub.s32 2, %v3086
          %v3088 = vrot.slane %v404, %v3087
          %3090 = vbcast.lane.b32.xlu0 %v3088, 256
          %v3091 = vpop.permute.xlu0 %3090
          %v3092 = vlaneseq
          %v3093 = vshrl.u32 %v3092, 7
          %v3094 = vsub.s32 3, %v3093
          %v3095 = vrot.slane %v404, %v3094
          %3097 = vbcast.lane.b32.xlu0 %v3095, 256
          %v3098 = vpop.permute.xlu0 %3097
          %v3099 = vlaneseq
          %v3100 = vshrl.u32 %v3099, 7
          %v3101 = vsub.s32 4, %v3100
          %v3102 = vrot.slane %v404, %v3101
          %3104 = vbcast.lane.b32.xlu0 %v3102, 256
          %v3105 = vpop.permute.xlu0 %3104
          %v3106 = vlaneseq
          %v3107 = vshrl.u32 %v3106, 7
          %v3108 = vsub.s32 5, %v3107
          %v3109 = vrot.slane %v404, %v3108
          %3111 = vbcast.lane.b32.xlu0 %v3109, 256
          %v3112 = vpop.permute.xlu0 %3111
          %v3113 = vlaneseq
          %v3114 = vshrl.u32 %v3113, 7
          %v3115 = vsub.s32 6, %v3114
          %v3116 = vrot.slane %v404, %v3115
          %3118 = vbcast.lane.b32.xlu0 %v3116, 256
          %v3119 = vpop.permute.xlu0 %3118
          %v3120 = vlaneseq
          %v3121 = vshrl.u32 %v3120, 7
          %v3122 = vsub.s32 7, %v3121
          %v3123 = vrot.slane %v404, %v3122
          %3125 = vbcast.lane.b32.xlu0 %v3123, 256
          %v3126 = vpop.permute.xlu0 %3125
          %v3127 = vlaneseq
          %v3128 = vshrl.u32 %v3127, 7
          %v3129 = vsub.s32 0, %v3128
          %v3130 = vrot.slane %v405, %v3129
          %3132 = vbcast.lane.b32.xlu0 %v3130, 256
          %v3133 = vpop.permute.xlu0 %3132
          %v3134 = vlaneseq
          %v3135 = vshrl.u32 %v3134, 7
          %v3136 = vsub.s32 1, %v3135
          %v3137 = vrot.slane %v405, %v3136
          %3139 = vbcast.lane.b32.xlu0 %v3137, 256
          %v3140 = vpop.permute.xlu0 %3139
          %v3141 = vlaneseq
          %v3142 = vshrl.u32 %v3141, 7
          %v3143 = vsub.s32 2, %v3142
          %v3144 = vrot.slane %v405, %v3143
          %3146 = vbcast.lane.b32.xlu0 %v3144, 256
          %v3147 = vpop.permute.xlu0 %3146
          %v3148 = vlaneseq
          %v3149 = vshrl.u32 %v3148, 7
          %v3150 = vsub.s32 3, %v3149
          %v3151 = vrot.slane %v405, %v3150
          %3153 = vbcast.lane.b32.xlu0 %v3151, 256
          %v3154 = vpop.permute.xlu0 %3153
          %v3155 = vlaneseq
          %v3156 = vshrl.u32 %v3155, 7
          %v3157 = vsub.s32 4, %v3156
          %v3158 = vrot.slane %v405, %v3157
          %3160 = vbcast.lane.b32.xlu0 %v3158, 256
          %v3161 = vpop.permute.xlu0 %3160
          %v3162 = vlaneseq
          %v3163 = vshrl.u32 %v3162, 7
          %v3164 = vsub.s32 5, %v3163
          %v3165 = vrot.slane %v405, %v3164
          %3167 = vbcast.lane.b32.xlu0 %v3165, 256
          %v3168 = vpop.permute.xlu0 %3167
          %v3169 = vlaneseq
          %v3170 = vshrl.u32 %v3169, 7
          %v3171 = vsub.s32 6, %v3170
          %v3172 = vrot.slane %v405, %v3171
          %3174 = vbcast.lane.b32.xlu0 %v3172, 256
          %v3175 = vpop.permute.xlu0 %3174
          %v3176 = vlaneseq
          %v3177 = vshrl.u32 %v3176, 7
          %v3178 = vsub.s32 7, %v3177
          %v3179 = vrot.slane %v405, %v3178
          %3181 = vbcast.lane.b32.xlu0 %v3179, 256
          %v3182 = vpop.permute.xlu0 %3181
          %v3183 = vlaneseq
          %v3184 = vshrl.u32 %v3183, 7
          %v3185 = vsub.s32 0, %v3184
          %v3186 = vrot.slane %v406, %v3185
          %3188 = vbcast.lane.b32.xlu0 %v3186, 256
          %v3189 = vpop.permute.xlu0 %3188
          %v3190 = vlaneseq
          %v3191 = vshrl.u32 %v3190, 7
          %v3192 = vsub.s32 1, %v3191
          %v3193 = vrot.slane %v406, %v3192
          %3195 = vbcast.lane.b32.xlu0 %v3193, 256
          %v3196 = vpop.permute.xlu0 %3195
          %v3197 = vlaneseq
          %v3198 = vshrl.u32 %v3197, 7
          %v3199 = vsub.s32 2, %v3198
          %v3200 = vrot.slane %v406, %v3199
          %3202 = vbcast.lane.b32.xlu0 %v3200, 256
          %v3203 = vpop.permute.xlu0 %3202
          %v3204 = vlaneseq
          %v3205 = vshrl.u32 %v3204, 7
          %v3206 = vsub.s32 3, %v3205
          %v3207 = vrot.slane %v406, %v3206
          %3209 = vbcast.lane.b32.xlu0 %v3207, 256
          %v3210 = vpop.permute.xlu0 %3209
          %v3211 = vlaneseq
          %v3212 = vshrl.u32 %v3211, 7
          %v3213 = vsub.s32 4, %v3212
          %v3214 = vrot.slane %v406, %v3213
          %3216 = vbcast.lane.b32.xlu0 %v3214, 256
          %v3217 = vpop.permute.xlu0 %3216
          %v3218 = vlaneseq
          %v3219 = vshrl.u32 %v3218, 7
          %v3220 = vsub.s32 5, %v3219
          %v3221 = vrot.slane %v406, %v3220
          %3223 = vbcast.lane.b32.xlu0 %v3221, 256
          %v3224 = vpop.permute.xlu0 %3223
          %v3225 = vlaneseq
          %v3226 = vshrl.u32 %v3225, 7
          %v3227 = vsub.s32 6, %v3226
          %v3228 = vrot.slane %v406, %v3227
          %3230 = vbcast.lane.b32.xlu0 %v3228, 256
          %v3231 = vpop.permute.xlu0 %3230
          %v3232 = vlaneseq
          %v3233 = vshrl.u32 %v3232, 7
          %v3234 = vsub.s32 7, %v3233
          %v3235 = vrot.slane %v406, %v3234
          %3237 = vbcast.lane.b32.xlu0 %v3235, 256
          %v3238 = vpop.permute.xlu0 %3237
          %v3239 = vlaneseq
          %v3240 = vshrl.u32 %v3239, 7
          %v3241 = vsub.s32 0, %v3240
          %v3242 = vrot.slane %v407, %v3241
          %3244 = vbcast.lane.b32.xlu0 %v3242, 256
          %v3245 = vpop.permute.xlu0 %3244
          %v3246 = vlaneseq
          %v3247 = vshrl.u32 %v3246, 7
          %v3248 = vsub.s32 1, %v3247
          %v3249 = vrot.slane %v407, %v3248
          %3251 = vbcast.lane.b32.xlu0 %v3249, 256
          %v3252 = vpop.permute.xlu0 %3251
          %v3253 = vlaneseq
          %v3254 = vshrl.u32 %v3253, 7
          %v3255 = vsub.s32 2, %v3254
          %v3256 = vrot.slane %v407, %v3255
          %3258 = vbcast.lane.b32.xlu0 %v3256, 256
          %v3259 = vpop.permute.xlu0 %3258
          %v3260 = vlaneseq
          %v3261 = vshrl.u32 %v3260, 7
          %v3262 = vsub.s32 3, %v3261
          %v3263 = vrot.slane %v407, %v3262
          %3265 = vbcast.lane.b32.xlu0 %v3263, 256
          %v3266 = vpop.permute.xlu0 %3265
          %v3267 = vlaneseq
          %v3268 = vshrl.u32 %v3267, 7
          %v3269 = vsub.s32 4, %v3268
          %v3270 = vrot.slane %v407, %v3269
          %3272 = vbcast.lane.b32.xlu0 %v3270, 256
          %v3273 = vpop.permute.xlu0 %3272
          %v3274 = vlaneseq
          %v3275 = vshrl.u32 %v3274, 7
          %v3276 = vsub.s32 5, %v3275
          %v3277 = vrot.slane %v407, %v3276
          %3279 = vbcast.lane.b32.xlu0 %v3277, 256
          %v3280 = vpop.permute.xlu0 %3279
          %v3281 = vlaneseq
          %v3282 = vshrl.u32 %v3281, 7
          %v3283 = vsub.s32 6, %v3282
          %v3284 = vrot.slane %v407, %v3283
          %3286 = vbcast.lane.b32.xlu0 %v3284, 256
          %v3287 = vpop.permute.xlu0 %3286
          %v3288 = vlaneseq
          %v3289 = vshrl.u32 %v3288, 7
          %v3290 = vsub.s32 7, %v3289
          %v3291 = vrot.slane %v407, %v3290
          %3293 = vbcast.lane.b32.xlu0 %v3291, 256
          %v3294 = vpop.permute.xlu0 %3293
          %v3295 = vlaneseq
          %v3296 = vshrl.u32 %v3295, 7
          %v3297 = vsub.s32 0, %v3296
          %v3298 = vrot.slane %v408, %v3297
          %3300 = vbcast.lane.b32.xlu0 %v3298, 256
          %v3301 = vpop.permute.xlu0 %3300
          %v3302 = vlaneseq
          %v3303 = vshrl.u32 %v3302, 7
          %v3304 = vsub.s32 1, %v3303
          %v3305 = vrot.slane %v408, %v3304
          %3307 = vbcast.lane.b32.xlu0 %v3305, 256
          %v3308 = vpop.permute.xlu0 %3307
          %v3309 = vlaneseq
          %v3310 = vshrl.u32 %v3309, 7
          %v3311 = vsub.s32 2, %v3310
          %v3312 = vrot.slane %v408, %v3311
          %3314 = vbcast.lane.b32.xlu0 %v3312, 256
          %v3315 = vpop.permute.xlu0 %3314
          %v3316 = vlaneseq
          %v3317 = vshrl.u32 %v3316, 7
          %v3318 = vsub.s32 3, %v3317
          %v3319 = vrot.slane %v408, %v3318
          %3321 = vbcast.lane.b32.xlu0 %v3319, 256
          %v3322 = vpop.permute.xlu0 %3321
          %v3323 = vlaneseq
          %v3324 = vshrl.u32 %v3323, 7
          %v3325 = vsub.s32 4, %v3324
          %v3326 = vrot.slane %v408, %v3325
          %3328 = vbcast.lane.b32.xlu0 %v3326, 256
          %v3329 = vpop.permute.xlu0 %3328
          %v3330 = vlaneseq
          %v3331 = vshrl.u32 %v3330, 7
          %v3332 = vsub.s32 5, %v3331
          %v3333 = vrot.slane %v408, %v3332
          %3335 = vbcast.lane.b32.xlu0 %v3333, 256
          %v3336 = vpop.permute.xlu0 %3335
          %v3337 = vlaneseq
          %v3338 = vshrl.u32 %v3337, 7
          %v3339 = vsub.s32 6, %v3338
          %v3340 = vrot.slane %v408, %v3339
          %3342 = vbcast.lane.b32.xlu0 %v3340, 256
          %v3343 = vpop.permute.xlu0 %3342
          %v3344 = vlaneseq
          %v3345 = vshrl.u32 %v3344, 7
          %v3346 = vsub.s32 7, %v3345
          %v3347 = vrot.slane %v408, %v3346
          %3349 = vbcast.lane.b32.xlu0 %v3347, 256
          %v3350 = vpop.permute.xlu0 %3349
          %v3351 = vlaneseq
          %v3352 = vshrl.u32 %v3351, 7
          %v3353 = vsub.s32 0, %v3352
          %v3354 = vrot.slane %v409, %v3353
          %3356 = vbcast.lane.b32.xlu0 %v3354, 256
          %v3357 = vpop.permute.xlu0 %3356
          %v3358 = vlaneseq
          %v3359 = vshrl.u32 %v3358, 7
          %v3360 = vsub.s32 1, %v3359
          %v3361 = vrot.slane %v409, %v3360
          %3363 = vbcast.lane.b32.xlu0 %v3361, 256
          %v3364 = vpop.permute.xlu0 %3363
          %v3365 = vlaneseq
          %v3366 = vshrl.u32 %v3365, 7
          %v3367 = vsub.s32 2, %v3366
          %v3368 = vrot.slane %v409, %v3367
          %3370 = vbcast.lane.b32.xlu0 %v3368, 256
          %v3371 = vpop.permute.xlu0 %3370
          %v3372 = vlaneseq
          %v3373 = vshrl.u32 %v3372, 7
          %v3374 = vsub.s32 3, %v3373
          %v3375 = vrot.slane %v409, %v3374
          %3377 = vbcast.lane.b32.xlu0 %v3375, 256
          %v3378 = vpop.permute.xlu0 %3377
          %v3379 = vlaneseq
          %v3380 = vshrl.u32 %v3379, 7
          %v3381 = vsub.s32 4, %v3380
          %v3382 = vrot.slane %v409, %v3381
          %3384 = vbcast.lane.b32.xlu0 %v3382, 256
          %v3385 = vpop.permute.xlu0 %3384
          %v3386 = vlaneseq
          %v3387 = vshrl.u32 %v3386, 7
          %v3388 = vsub.s32 5, %v3387
          %v3389 = vrot.slane %v409, %v3388
          %3391 = vbcast.lane.b32.xlu0 %v3389, 256
          %v3392 = vpop.permute.xlu0 %3391
          %v3393 = vlaneseq
          %v3394 = vshrl.u32 %v3393, 7
          %v3395 = vsub.s32 6, %v3394
          %v3396 = vrot.slane %v409, %v3395
          %3398 = vbcast.lane.b32.xlu0 %v3396, 256
          %v3399 = vpop.permute.xlu0 %3398
          %v3400 = vlaneseq
          %v3401 = vshrl.u32 %v3400, 7
          %v3402 = vsub.s32 7, %v3401
          %v3403 = vrot.slane %v409, %v3402
          %3405 = vbcast.lane.b32.xlu0 %v3403, 256
          %v3406 = vpop.permute.xlu0 %3405
          %v3407 = vlaneseq
          %v3408 = vshrl.u32 %v3407, 7
          %v3409 = vsub.s32 0, %v3408
          %v3410 = vrot.slane %v410, %v3409
          %3412 = vbcast.lane.b32.xlu0 %v3410, 256
          %v3413 = vpop.permute.xlu0 %3412
          %v3414 = vlaneseq
          %v3415 = vshrl.u32 %v3414, 7
          %v3416 = vsub.s32 1, %v3415
          %v3417 = vrot.slane %v410, %v3416
          %3419 = vbcast.lane.b32.xlu0 %v3417, 256
          %v3420 = vpop.permute.xlu0 %3419
          %v3421 = vlaneseq
          %v3422 = vshrl.u32 %v3421, 7
          %v3423 = vsub.s32 2, %v3422
          %v3424 = vrot.slane %v410, %v3423
          %3426 = vbcast.lane.b32.xlu0 %v3424, 256
          %v3427 = vpop.permute.xlu0 %3426
          %v3428 = vlaneseq
          %v3429 = vshrl.u32 %v3428, 7
          %v3430 = vsub.s32 3, %v3429
          %v3431 = vrot.slane %v410, %v3430
          %3433 = vbcast.lane.b32.xlu0 %v3431, 256
          %v3434 = vpop.permute.xlu0 %3433
          %v3435 = vlaneseq
          %v3436 = vshrl.u32 %v3435, 7
          %v3437 = vsub.s32 4, %v3436
          %v3438 = vrot.slane %v410, %v3437
          %3440 = vbcast.lane.b32.xlu0 %v3438, 256
          %v3441 = vpop.permute.xlu0 %3440
          %v3442 = vlaneseq
          %v3443 = vshrl.u32 %v3442, 7
          %v3444 = vsub.s32 5, %v3443
          %v3445 = vrot.slane %v410, %v3444
          %3447 = vbcast.lane.b32.xlu0 %v3445, 256
          %v3448 = vpop.permute.xlu0 %3447
          %v3449 = vlaneseq
          %v3450 = vshrl.u32 %v3449, 7
          %v3451 = vsub.s32 6, %v3450
          %v3452 = vrot.slane %v410, %v3451
          %3454 = vbcast.lane.b32.xlu0 %v3452, 256
          %v3455 = vpop.permute.xlu0 %3454
          %v3456 = vlaneseq
          %v3457 = vshrl.u32 %v3456, 7
          %v3458 = vsub.s32 7, %v3457
          %v3459 = vrot.slane %v410, %v3458
          %3461 = vbcast.lane.b32.xlu0 %v3459, 256
          %v3462 = vpop.permute.xlu0 %3461
          %v3463 = vlaneseq
          %v3464 = vshrl.u32 %v3463, 7
          %v3465 = vsub.s32 0, %v3464
          %v3466 = vrot.slane %v411, %v3465
          %3468 = vbcast.lane.b32.xlu0 %v3466, 256
          %v3469 = vpop.permute.xlu0 %3468
          %v3470 = vlaneseq
          %v3471 = vshrl.u32 %v3470, 7
          %v3472 = vsub.s32 1, %v3471
          %v3473 = vrot.slane %v411, %v3472
          %3475 = vbcast.lane.b32.xlu0 %v3473, 256
          %v3476 = vpop.permute.xlu0 %3475
          %v3477 = vlaneseq
          %v3478 = vshrl.u32 %v3477, 7
          %v3479 = vsub.s32 2, %v3478
          %v3480 = vrot.slane %v411, %v3479
          %3482 = vbcast.lane.b32.xlu0 %v3480, 256
          %v3483 = vpop.permute.xlu0 %3482
          %v3484 = vlaneseq
          %v3485 = vshrl.u32 %v3484, 7
          %v3486 = vsub.s32 3, %v3485
          %v3487 = vrot.slane %v411, %v3486
          %3489 = vbcast.lane.b32.xlu0 %v3487, 256
          %v3490 = vpop.permute.xlu0 %3489
          %v3491 = vlaneseq
          %v3492 = vshrl.u32 %v3491, 7
          %v3493 = vsub.s32 4, %v3492
          %v3494 = vrot.slane %v411, %v3493
          %3496 = vbcast.lane.b32.xlu0 %v3494, 256
          %v3497 = vpop.permute.xlu0 %3496
          %v3498 = vlaneseq
          %v3499 = vshrl.u32 %v3498, 7
          %v3500 = vsub.s32 5, %v3499
          %v3501 = vrot.slane %v411, %v3500
          %3503 = vbcast.lane.b32.xlu0 %v3501, 256
          %v3504 = vpop.permute.xlu0 %3503
          %v3505 = vlaneseq
          %v3506 = vshrl.u32 %v3505, 7
          %v3507 = vsub.s32 6, %v3506
          %v3508 = vrot.slane %v411, %v3507
          %3510 = vbcast.lane.b32.xlu0 %v3508, 256
          %v3511 = vpop.permute.xlu0 %3510
          %v3512 = vlaneseq
          %v3513 = vshrl.u32 %v3512, 7
          %v3514 = vsub.s32 7, %v3513
          %v3515 = vrot.slane %v411, %v3514
          %3517 = vbcast.lane.b32.xlu0 %v3515, 256
          %v3518 = vpop.permute.xlu0 %3517
          %v3519 = vlaneseq
          %v3520 = vshrl.u32 %v3519, 7
          %v3521 = vsub.s32 0, %v3520
          %v3522 = vrot.slane %v412, %v3521
          %3524 = vbcast.lane.b32.xlu0 %v3522, 256
          %v3525 = vpop.permute.xlu0 %3524
          %v3526 = vlaneseq
          %v3527 = vshrl.u32 %v3526, 7
          %v3528 = vsub.s32 1, %v3527
          %v3529 = vrot.slane %v412, %v3528
          %3531 = vbcast.lane.b32.xlu0 %v3529, 256
          %v3532 = vpop.permute.xlu0 %3531
          %v3533 = vlaneseq
          %v3534 = vshrl.u32 %v3533, 7
          %v3535 = vsub.s32 2, %v3534
          %v3536 = vrot.slane %v412, %v3535
          %3538 = vbcast.lane.b32.xlu0 %v3536, 256
          %v3539 = vpop.permute.xlu0 %3538
          %v3540 = vlaneseq
          %v3541 = vshrl.u32 %v3540, 7
          %v3542 = vsub.s32 3, %v3541
          %v3543 = vrot.slane %v412, %v3542
          %3545 = vbcast.lane.b32.xlu0 %v3543, 256
          %v3546 = vpop.permute.xlu0 %3545
          %v3547 = vlaneseq
          %v3548 = vshrl.u32 %v3547, 7
          %v3549 = vsub.s32 4, %v3548
          %v3550 = vrot.slane %v412, %v3549
          %3552 = vbcast.lane.b32.xlu0 %v3550, 256
          %v3553 = vpop.permute.xlu0 %3552
          %v3554 = vlaneseq
          %v3555 = vshrl.u32 %v3554, 7
          %v3556 = vsub.s32 5, %v3555
          %v3557 = vrot.slane %v412, %v3556
          %3559 = vbcast.lane.b32.xlu0 %v3557, 256
          %v3560 = vpop.permute.xlu0 %3559
          %v3561 = vlaneseq
          %v3562 = vshrl.u32 %v3561, 7
          %v3563 = vsub.s32 6, %v3562
          %v3564 = vrot.slane %v412, %v3563
          %3566 = vbcast.lane.b32.xlu0 %v3564, 256
          %v3567 = vpop.permute.xlu0 %3566
          %v3568 = vlaneseq
          %v3569 = vshrl.u32 %v3568, 7
          %v3570 = vsub.s32 7, %v3569
          %v3571 = vrot.slane %v412, %v3570
          %3573 = vbcast.lane.b32.xlu0 %v3571, 256
          %v3574 = vpop.permute.xlu0 %3573
          %v3575 = vlaneseq
          %v3576 = vshrl.u32 %v3575, 7
          %v3577 = vsub.s32 0, %v3576
          %v3578 = vrot.slane %v413, %v3577
          %3580 = vbcast.lane.b32.xlu0 %v3578, 256
          %v3581 = vpop.permute.xlu0 %3580
          %v3582 = vlaneseq
          %v3583 = vshrl.u32 %v3582, 7
          %v3584 = vsub.s32 1, %v3583
          %v3585 = vrot.slane %v413, %v3584
          %3587 = vbcast.lane.b32.xlu0 %v3585, 256
          %v3588 = vpop.permute.xlu0 %3587
          %v3589 = vlaneseq
          %v3590 = vshrl.u32 %v3589, 7
          %v3591 = vsub.s32 2, %v3590
          %v3592 = vrot.slane %v413, %v3591
          %3594 = vbcast.lane.b32.xlu0 %v3592, 256
          %v3595 = vpop.permute.xlu0 %3594
          %v3596 = vlaneseq
          %v3597 = vshrl.u32 %v3596, 7
          %v3598 = vsub.s32 3, %v3597
          %v3599 = vrot.slane %v413, %v3598
          %3601 = vbcast.lane.b32.xlu0 %v3599, 256
          %v3602 = vpop.permute.xlu0 %3601
          %v3603 = vlaneseq
          %v3604 = vshrl.u32 %v3603, 7
          %v3605 = vsub.s32 4, %v3604
          %v3606 = vrot.slane %v413, %v3605
          %3608 = vbcast.lane.b32.xlu0 %v3606, 256
          %v3609 = vpop.permute.xlu0 %3608
          %v3610 = vlaneseq
          %v3611 = vshrl.u32 %v3610, 7
          %v3612 = vsub.s32 5, %v3611
          %v3613 = vrot.slane %v413, %v3612
          %3615 = vbcast.lane.b32.xlu0 %v3613, 256
          %v3616 = vpop.permute.xlu0 %3615
          %v3617 = vlaneseq
          %v3618 = vshrl.u32 %v3617, 7
          %v3619 = vsub.s32 6, %v3618
          %v3620 = vrot.slane %v413, %v3619
          %3622 = vbcast.lane.b32.xlu0 %v3620, 256
          %v3623 = vpop.permute.xlu0 %3622
          %v3624 = vlaneseq
          %v3625 = vshrl.u32 %v3624, 7
          %v3626 = vsub.s32 7, %v3625
          %v3627 = vrot.slane %v413, %v3626
          %3629 = vbcast.lane.b32.xlu0 %v3627, 256
          %v3630 = vpop.permute.xlu0 %3629
          %v3631 = vlaneseq
          %v3632 = vshrl.u32 %v3631, 7
          %v3633 = vsub.s32 0, %v3632
          %v3634 = vrot.slane %v414, %v3633
          %3636 = vbcast.lane.b32.xlu0 %v3634, 256
          %v3637 = vpop.permute.xlu0 %3636
          %v3638 = vlaneseq
          %v3639 = vshrl.u32 %v3638, 7
          %v3640 = vsub.s32 1, %v3639
          %v3641 = vrot.slane %v414, %v3640
          %3643 = vbcast.lane.b32.xlu0 %v3641, 256
          %v3644 = vpop.permute.xlu0 %3643
          %v3645 = vlaneseq
          %v3646 = vshrl.u32 %v3645, 7
          %v3647 = vsub.s32 2, %v3646
          %v3648 = vrot.slane %v414, %v3647
          %3650 = vbcast.lane.b32.xlu0 %v3648, 256
          %v3651 = vpop.permute.xlu0 %3650
          %v3652 = vlaneseq
          %v3653 = vshrl.u32 %v3652, 7
          %v3654 = vsub.s32 3, %v3653
          %v3655 = vrot.slane %v414, %v3654
          %3657 = vbcast.lane.b32.xlu0 %v3655, 256
          %v3658 = vpop.permute.xlu0 %3657
          %v3659 = vlaneseq
          %v3660 = vshrl.u32 %v3659, 7
          %v3661 = vsub.s32 4, %v3660
          %v3662 = vrot.slane %v414, %v3661
          %3664 = vbcast.lane.b32.xlu0 %v3662, 256
          %v3665 = vpop.permute.xlu0 %3664
          %v3666 = vlaneseq
          %v3667 = vshrl.u32 %v3666, 7
          %v3668 = vsub.s32 5, %v3667
          %v3669 = vrot.slane %v414, %v3668
          %3671 = vbcast.lane.b32.xlu0 %v3669, 256
          %v3672 = vpop.permute.xlu0 %3671
          %v3673 = vlaneseq
          %v3674 = vshrl.u32 %v3673, 7
          %v3675 = vsub.s32 6, %v3674
          %v3676 = vrot.slane %v414, %v3675
          %3678 = vbcast.lane.b32.xlu0 %v3676, 256
          %v3679 = vpop.permute.xlu0 %3678
          %v3680 = vlaneseq
          %v3681 = vshrl.u32 %v3680, 7
          %v3682 = vsub.s32 7, %v3681
          %v3683 = vrot.slane %v414, %v3682
          %3685 = vbcast.lane.b32.xlu0 %v3683, 256
          %v3686 = vpop.permute.xlu0 %3685
          %v3687 = vmul.f32 %v2797, %v2662
          %v3688 = vmul.f32 %v2804, %v2663
          %v3689 = vmul.f32 %v2811, %v2664
          %v3690 = vmul.f32 %v2818, %v2665
          %v3691 = vmul.f32 %v2825, %v2666
          %v3692 = vmul.f32 %v2832, %v2667
          %v3693 = vmul.f32 %v2839, %v2668
          %v3694 = vmul.f32 %v2846, %v2669
          %v3695 = vmul.f32 %v2853, %v2670
          %v3696 = vmul.f32 %v2860, %v2671
          %v3697 = vmul.f32 %v2867, %v2672
          %v3698 = vmul.f32 %v2874, %v2673
          %v3699 = vmul.f32 %v2881, %v2674
          %v3700 = vmul.f32 %v2888, %v2675
          %v3701 = vmul.f32 %v2895, %v2676
          %v3702 = vmul.f32 %v2902, %v2677
          %v3703 = vmul.f32 %v2909, %v2678
          %v3704 = vmul.f32 %v2916, %v2679
          %v3705 = vmul.f32 %v2923, %v2680
          %v3706 = vmul.f32 %v2930, %v2681
          %v3707 = vmul.f32 %v2937, %v2682
          %v3708 = vmul.f32 %v2944, %v2683
          %v3709 = vmul.f32 %v2951, %v2684
          %v3710 = vmul.f32 %v2958, %v2685
          %v3711 = vmul.f32 %v2965, %v2686
          %v3712 = vmul.f32 %v2972, %v2687
          %v3713 = vmul.f32 %v2979, %v2688
          %v3714 = vmul.f32 %v2986, %v2689
          %v3715 = vmul.f32 %v2993, %v2690
          %v3716 = vmul.f32 %v3000, %v2691
          %v3717 = vmul.f32 %v3007, %v2692
          %v3718 = vmul.f32 %v3014, %v2693
          %v3719 = vmul.f32 %v3021, %v2694
          %v3720 = vmul.f32 %v3028, %v2695
          %v3721 = vmul.f32 %v3035, %v2696
          %v3722 = vmul.f32 %v3042, %v2697
          %v3723 = vmul.f32 %v3049, %v2698
          %v3724 = vmul.f32 %v3056, %v2699
          %v3725 = vmul.f32 %v3063, %v2700
          %v3726 = vmul.f32 %v3070, %v2701
          %v3727 = vmul.f32 %v3077, %v2702
          %v3728 = vmul.f32 %v3084, %v2703
          %v3729 = vmul.f32 %v3091, %v2704
          %v3730 = vmul.f32 %v3098, %v2705
          %v3731 = vmul.f32 %v3105, %v2706
          %v3732 = vmul.f32 %v3112, %v2707
          %v3733 = vmul.f32 %v3119, %v2708
          %v3734 = vmul.f32 %v3126, %v2709
          %v3735 = vmul.f32 %v3133, %v2710
          %v3736 = vmul.f32 %v3140, %v2711
          %v3737 = vmul.f32 %v3147, %v2712
          %v3738 = vmul.f32 %v3154, %v2713
          %v3739 = vmul.f32 %v3161, %v2714
          %v3740 = vmul.f32 %v3168, %v2715
          %v3741 = vmul.f32 %v3175, %v2716
          %v3742 = vmul.f32 %v3182, %v2717
          %v3743 = vmul.f32 %v3189, %v2718
          %v3744 = vmul.f32 %v3196, %v2719
          %v3745 = vmul.f32 %v3203, %v2720
          %v3746 = vmul.f32 %v3210, %v2721
          %v3747 = vmul.f32 %v3217, %v2722
          %v3748 = vmul.f32 %v3224, %v2723
          %v3749 = vmul.f32 %v3231, %v2724
          %v3750 = vmul.f32 %v3238, %v2725
          %v3751 = vmul.f32 %v3245, %v2726
          %v3752 = vmul.f32 %v3252, %v2727
          %v3753 = vmul.f32 %v3259, %v2728
          %v3754 = vmul.f32 %v3266, %v2729
          %v3755 = vmul.f32 %v3273, %v2730
          %v3756 = vmul.f32 %v3280, %v2731
          %v3757 = vmul.f32 %v3287, %v2732
          %v3758 = vmul.f32 %v3294, %v2733
          %v3759 = vmul.f32 %v3301, %v2734
          %v3760 = vmul.f32 %v3308, %v2735
          %v3761 = vmul.f32 %v3315, %v2736
          %v3762 = vmul.f32 %v3322, %v2737
          %v3763 = vmul.f32 %v3329, %v2738
          %v3764 = vmul.f32 %v3336, %v2739
          %v3765 = vmul.f32 %v3343, %v2740
          %v3766 = vmul.f32 %v3350, %v2741
          %v3767 = vmul.f32 %v3357, %v2742
          %v3768 = vmul.f32 %v3364, %v2743
          %v3769 = vmul.f32 %v3371, %v2744
          %v3770 = vmul.f32 %v3378, %v2745
          %v3771 = vmul.f32 %v3385, %v2746
          %v3772 = vmul.f32 %v3392, %v2747
          %v3773 = vmul.f32 %v3399, %v2748
          %v3774 = vmul.f32 %v3406, %v2749
          %v3775 = vmul.f32 %v3413, %v2750
          %v3776 = vmul.f32 %v3420, %v2751
          %v3777 = vmul.f32 %v3427, %v2752
          %v3778 = vmul.f32 %v3434, %v2753
          %v3779 = vmul.f32 %v3441, %v2754
          %v3780 = vmul.f32 %v3448, %v2755
          %v3781 = vmul.f32 %v3455, %v2756
          %v3782 = vmul.f32 %v3462, %v2757
          %v3783 = vmul.f32 %v3469, %v2758
          %v3784 = vmul.f32 %v3476, %v2759
          %v3785 = vmul.f32 %v3483, %v2760
          %v3786 = vmul.f32 %v3490, %v2761
          %v3787 = vmul.f32 %v3497, %v2762
          %v3788 = vmul.f32 %v3504, %v2763
          %v3789 = vmul.f32 %v3511, %v2764
          %v3790 = vmul.f32 %v3518, %v2765
          %v3791 = vmul.f32 %v3525, %v2766
          %v3792 = vmul.f32 %v3532, %v2767
          %v3793 = vmul.f32 %v3539, %v2768
          %v3794 = vmul.f32 %v3546, %v2769
          %v3795 = vmul.f32 %v3553, %v2770
          %v3796 = vmul.f32 %v3560, %v2771
          %v3797 = vmul.f32 %v3567, %v2772
          %v3798 = vmul.f32 %v3574, %v2773
          %v3799 = vmul.f32 %v3581, %v2774
          %v3800 = vmul.f32 %v3588, %v2775
          %v3801 = vmul.f32 %v3595, %v2776
          %v3802 = vmul.f32 %v3602, %v2777
          %v3803 = vmul.f32 %v3609, %v2778
          %v3804 = vmul.f32 %v3616, %v2779
          %v3805 = vmul.f32 %v3623, %v2780
          %v3806 = vmul.f32 %v3630, %v2781
          %v3807 = vmul.f32 %v3637, %v2782
          %v3808 = vmul.f32 %v3644, %v2783
          %v3809 = vmul.f32 %v3651, %v2784
          %v3810 = vmul.f32 %v3658, %v2785
          %v3811 = vmul.f32 %v3665, %v2786
          %v3812 = vmul.f32 %v3672, %v2787
          %v3813 = vmul.f32 %v3679, %v2788
          %v3814 = vmul.f32 %v3686, %v2789
          %v3815 = vadd.f32 %v3687, %v3688
          %v3816 = vadd.f32 %v3815, %v3689
          %v3817 = vadd.f32 %v3816, %v3690
          %v3818 = vadd.f32 %v3817, %v3691
          %v3819 = vadd.f32 %v3818, %v3692
          %v3820 = vadd.f32 %v3819, %v3693
          %v3821 = vadd.f32 %v3820, %v3694
          %v3822 = vadd.f32 %v3821, %v3695
          %v3823 = vadd.f32 %v3822, %v3696
          %v3824 = vadd.f32 %v3823, %v3697
          %v3825 = vadd.f32 %v3824, %v3698
          %v3826 = vadd.f32 %v3825, %v3699
          %v3827 = vadd.f32 %v3826, %v3700
          %v3828 = vadd.f32 %v3827, %v3701
          %v3829 = vadd.f32 %v3828, %v3702
          %v3830 = vadd.f32 %v3829, %v3703
          %v3831 = vadd.f32 %v3830, %v3704
          %v3832 = vadd.f32 %v3831, %v3705
          %v3833 = vadd.f32 %v3832, %v3706
          %v3834 = vadd.f32 %v3833, %v3707
          %v3835 = vadd.f32 %v3834, %v3708
          %v3836 = vadd.f32 %v3835, %v3709
          %v3837 = vadd.f32 %v3836, %v3710
          %v3838 = vadd.f32 %v3837, %v3711
          %v3839 = vadd.f32 %v3838, %v3712
          %v3840 = vadd.f32 %v3839, %v3713
          %v3841 = vadd.f32 %v3840, %v3714
          %v3842 = vadd.f32 %v3841, %v3715
          %v3843 = vadd.f32 %v3842, %v3716
          %v3844 = vadd.f32 %v3843, %v3717
          %v3845 = vadd.f32 %v3844, %v3718
          %v3846 = vadd.f32 %v3845, %v3719
          %v3847 = vadd.f32 %v3846, %v3720
          %v3848 = vadd.f32 %v3847, %v3721
          %v3849 = vadd.f32 %v3848, %v3722
          %v3850 = vadd.f32 %v3849, %v3723
          %v3851 = vadd.f32 %v3850, %v3724
          %v3852 = vadd.f32 %v3851, %v3725
          %v3853 = vadd.f32 %v3852, %v3726
          %v3854 = vadd.f32 %v3853, %v3727
          %v3855 = vadd.f32 %v3854, %v3728
          %v3856 = vadd.f32 %v3855, %v3729
          %v3857 = vadd.f32 %v3856, %v3730
          %v3858 = vadd.f32 %v3857, %v3731
          %v3859 = vadd.f32 %v3858, %v3732
          %v3860 = vadd.f32 %v3859, %v3733
          %v3861 = vadd.f32 %v3860, %v3734
          %v3862 = vadd.f32 %v3861, %v3735
          %v3863 = vadd.f32 %v3862, %v3736
          %v3864 = vadd.f32 %v3863, %v3737
          %v3865 = vadd.f32 %v3864, %v3738
          %v3866 = vadd.f32 %v3865, %v3739
          %v3867 = vadd.f32 %v3866, %v3740
          %v3868 = vadd.f32 %v3867, %v3741
          %v3869 = vadd.f32 %v3868, %v3742
          %v3870 = vadd.f32 %v3869, %v3743
          %v3871 = vadd.f32 %v3870, %v3744
          %v3872 = vadd.f32 %v3871, %v3745
          %v3873 = vadd.f32 %v3872, %v3746
          %v3874 = vadd.f32 %v3873, %v3747
          %v3875 = vadd.f32 %v3874, %v3748
          %v3876 = vadd.f32 %v3875, %v3749
          %v3877 = vadd.f32 %v3876, %v3750
          %v3878 = vadd.f32 %v3877, %v3751
          %v3879 = vadd.f32 %v3878, %v3752
          %v3880 = vadd.f32 %v3879, %v3753
          %v3881 = vadd.f32 %v3880, %v3754
          %v3882 = vadd.f32 %v3881, %v3755
          %v3883 = vadd.f32 %v3882, %v3756
          %v3884 = vadd.f32 %v3883, %v3757
          %v3885 = vadd.f32 %v3884, %v3758
          %v3886 = vadd.f32 %v3885, %v3759
          %v3887 = vadd.f32 %v3886, %v3760
          %v3888 = vadd.f32 %v3887, %v3761
          %v3889 = vadd.f32 %v3888, %v3762
          %v3890 = vadd.f32 %v3889, %v3763
          %v3891 = vadd.f32 %v3890, %v3764
          %v3892 = vadd.f32 %v3891, %v3765
          %v3893 = vadd.f32 %v3892, %v3766
          %v3894 = vadd.f32 %v3893, %v3767
          %v3895 = vadd.f32 %v3894, %v3768
          %v3896 = vadd.f32 %v3895, %v3769
          %v3897 = vadd.f32 %v3896, %v3770
          %v3898 = vadd.f32 %v3897, %v3771
          %v3899 = vadd.f32 %v3898, %v3772
          %v3900 = vadd.f32 %v3899, %v3773
          %v3901 = vadd.f32 %v3900, %v3774
          %v3902 = vadd.f32 %v3901, %v3775
          %v3903 = vadd.f32 %v3902, %v3776
          %v3904 = vadd.f32 %v3903, %v3777
          %v3905 = vadd.f32 %v3904, %v3778
          %v3906 = vadd.f32 %v3905, %v3779
          %v3907 = vadd.f32 %v3906, %v3780
          %v3908 = vadd.f32 %v3907, %v3781
          %v3909 = vadd.f32 %v3908, %v3782
          %v3910 = vadd.f32 %v3909, %v3783
          %v3911 = vadd.f32 %v3910, %v3784
          %v3912 = vadd.f32 %v3911, %v3785
          %v3913 = vadd.f32 %v3912, %v3786
          %v3914 = vadd.f32 %v3913, %v3787
          %v3915 = vadd.f32 %v3914, %v3788
          %v3916 = vadd.f32 %v3915, %v3789
          %v3917 = vadd.f32 %v3916, %v3790
          %v3918 = vadd.f32 %v3917, %v3791
          %v3919 = vadd.f32 %v3918, %v3792
          %v3920 = vadd.f32 %v3919, %v3793
          %v3921 = vadd.f32 %v3920, %v3794
          %v3922 = vadd.f32 %v3921, %v3795
          %v3923 = vadd.f32 %v3922, %v3796
          %v3924 = vadd.f32 %v3923, %v3797
          %v3925 = vadd.f32 %v3924, %v3798
          %v3926 = vadd.f32 %v3925, %v3799
          %v3927 = vadd.f32 %v3926, %v3800
          %v3928 = vadd.f32 %v3927, %v3801
          %v3929 = vadd.f32 %v3928, %v3802
          %v3930 = vadd.f32 %v3929, %v3803
          %v3931 = vadd.f32 %v3930, %v3804
          %v3932 = vadd.f32 %v3931, %v3805
          %v3933 = vadd.f32 %v3932, %v3806
          %v3934 = vadd.f32 %v3933, %v3807
          %v3935 = vadd.f32 %v3934, %v3808
          %v3936 = vadd.f32 %v3935, %v3809
          %v3937 = vadd.f32 %v3936, %v3810
          %v3938 = vadd.f32 %v3937, %v3811
          %v3939 = vadd.f32 %v3938, %v3812
          %v3940 = vadd.f32 %v3939, %v3813
          %v3941 = vadd.f32 %v3940, %v3814
          %v3942 = vadd.f32 %v2790, %v3941
          %3943 = vst [vmem:[%s344] sm:$0xff] %v3942
        $region60: #{tpu_custom_call.1} parent=39 // pred_fallthru
          _
        // Predicated region
        $region61: #{tpu_custom_call.1} parent=39 // pred_check
          %p3944 = pneg %p348
        $region62: #{tpu_custom_call.1} parent=39 // pred_check_branch
          %3946 = sbr.rel (%p3944) target = $region64
        $region63: #{tpu_custom_call.1} parent=39 // pred_region
          %v3947 = vld [vmem:[#allocation2] sm:$0xff]
          %vm3948 = vcmp.eq.f32.partialorder %v3947, 0.0
          %v3949 = vsel %vm3948, inf, %v3947
          %v3950 = vld [vmem:[%s344] sm:$0xff]
          %v3951 = vrcp.pop %v3949
          %v3952 = vmul.f32 1.0, %v3951
          %3954 = vset.pattern.permute.xlu0 0
          %3955 = vperm.xlu0 %3954, %v3952
          %v3956 = vpop.permute.xlu0 %3955
          %v3958 = vmul.f32 %v3950, %v3956
          %3959 = vst [vmem:[%s344] sm:$0xff] %v3958
        $region64: #{tpu_custom_call.1} parent=39 // pred_fallthru
          _
        %s3960 = sand.u32 %s193, 1
        %s3961 = scalar_lea.sflag [#allocation6], %s3960
        %s3962 = sand.u32 %s193, 1
        %s3963 = smul.addr %s3962, 8
        %s3964 = scalar_lea.vmem [#allocation11], %s3963
        // Predicated region
        $region65: #{tpu_custom_call.1} parent=39 // pred_check
          %p3965 = pneg %p203
        $region66: #{tpu_custom_call.1} parent=39 // pred_check_branch
          %3967 = sbr.rel (%p3965) target = $region68
        $region67: #{tpu_custom_call.1} parent=39 // pred_region
          %s3969 = ssub.s32 128, 128
          %3970 = vsyncadd %s3961, %s3969
          %s3971 = sadd.s32 %s35, %s34
          %s3972 = sadd.s32 %s3971, %s33
          %s3973 = smul.addr %s3972, 128
          %s3974 = scalar_lea.hbm %s5, %s3973
          %s3976 = sshll.u32 %s3964, 4
          %s3977 = int_to_ptr.vmem [resolvable:$true] %s3976
          %3979 = dma.vmem_to_hbm [thread:$0]  %s3977, 128, %s3974, %s3961
        $region68: #{tpu_custom_call.1} parent=39 // pred_fallthru
          _
      $region40: #{tpu_custom_call.1} parent=5 // pred_fallthru
        _
      %p3980 = scmp.le.s32.totalorder 2, %s22
      // Predicated region
      $region69: #{tpu_custom_call.1} parent=5 // pred_check
        %p3981 = pneg %p3980
      $region70: #{tpu_custom_call.1} parent=5 // pred_check_branch
        %3983 = sbr.rel (%p3981) target = $region72
      $region71: #{tpu_custom_call.1} parent=5 // pred_region
        %s3984 = ssub.s32 %s22, 2
        // Predicated region
        $region73: #{tpu_custom_call.1} parent=71 // pred_check
          %p3985 = pneg %p209
        $region74: #{tpu_custom_call.1} parent=71 // pred_check_branch
          %3987 = sbr.rel (%p3985) target = $region76
        $region75: #{tpu_custom_call.1} parent=71 // pred_region
          %s3988 = sand.u32 %s194, 1
          %s3989 = scalar_lea.sflag [#allocation6], %s3988
          %s3990 = sand.u32 %s194, 1
          %s3991 = smul.addr %s3990, 8
          %s3992 = scalar_lea.vmem [#allocation11], %s3991
          %3993 = dma.done %s3989, 128
        $region76: #{tpu_custom_call.1} parent=71 // pred_fallthru
          _
      $region72: #{tpu_custom_call.1} parent=5 // pred_fallthru
        _
    $region6: #{tpu_custom_call.1} parent=1 // loop_footer
      %s26 = sadd.s32 1, %s22
    $region7: #{tpu_custom_call.1} parent=1 // loop_footer_branch
      %21 = sbr.rel target = $region3
    $region8: #{tpu_custom_call.1} parent=1 // loop_exit
      _
    %3994 = vsyncpa [#allocation5], 1
    %s3995 = scalar_lea.sflag [#allocation5], 1
    %3996 = vsyncpa %s3995, 1
    %3997 = vsyncpa [#allocation10], 1
    %s3998 = scalar_lea.sflag [#allocation10], 1
    %3999 = vsyncpa %s3998, 1
    %4000 = vsyncpa [#allocation6], 1
    %s4001 = scalar_lea.sflag [#allocation6], 1
    %4002 = vsyncpa %s4001, 1
    %4003 = vsyncpa [#allocation7], 1
    %s4004 = scalar_lea.sflag [#allocation7], 1
    %4005 = vsyncpa %s4004, 1

</llo_original>
